<compile_context>
chip_gen: v6e
topology: v6e:2x2x1
jax: 0.10.0
libtpu: 0.0.40
codegen_flags: <defaults>
</compile_context>

<pallas_src>
import jax
import jax.numpy as jnp
import numpy as np
from jax.experimental import pallas as pl
from jax.experimental.pallas import tpu as pltpu

LEAKY_SLOPE = 0.01   # torch.nn.LeakyReLU default
NUM_LAYERS = 4       # Mapping2Dto3D.num_layers


def _leaky(x):
    # LeakyReLU(0.01): max(x, 0.01*x) == where(x >= 0, x, 0.01*x) for slope < 1.
    return jnp.maximum(x, LEAKY_SLOPE * x)


# ----------------------------------------------------------------------------------------------
# Pallas kernel: one grid step == one primitive r; all (batch, fps, sample) points of that
# primitive are processed as a single (M, C) activation matrix.
# ----------------------------------------------------------------------------------------------
def _atlas_kernel(ptf_ref, lat_ref, w11_ref, b11_ref, w2_ref, b2_ref,
                  wl_ref, bl_ref, wlast_ref, blast_ref, out_ref):
    # ptf_ref  : (1, nsample, nf)          precomputed conv10(grid_r) + b10   (f32)
    # lat_ref  : (bs*nfps, nf)             latent vectors, channels-last      (f32, resident)
    # w*_ref   : per-r weights, pre-transposed to (Cin, Cout)                 (bf16)
    # b*_ref   : per-r biases, (1, ..., Cout)                                 (f32)
    # out_ref  : (1, dim, bs*nfps*nsample) lane-dense output slab             (f32)
    _, nsample, nf = ptf_ref.shape
    n_lat = lat_ref.shape[0]
    num_layers = wl_ref.shape[1]

    pt_feat = ptf_ref[0]                                                    # (nsample, nf) f32

    # conv11(latent): (bs*nfps, nf) @ (nf, nf)  -- "latent as bias"
    lat_feat = jnp.dot(lat_ref[...].astype(jnp.bfloat16), w11_ref[0],
                       preferred_element_type=jnp.float32) + b11_ref[0]     # (bs*nfps, nf)

    # conv10(x) + conv11(latent) broadcast (== torch (1,nf,1,ns) + (bs,nf,nfps,1)), LeakyReLU,
    # then flatten points.  (Keep nsample a multiple of 8 at production sizes so the reshape is
    # a pure view; at these small sizes the copy is negligible.)
    h = _leaky(lat_feat[:, None, :] + pt_feat[None, :, :])                  # (bs*nfps, ns, nf)
    h = h.reshape(n_lat * nsample, nf)                                      # (M, nf)

    # conv2
    h = _leaky(jnp.dot(h.astype(jnp.bfloat16), w2_ref[0],
                       preferred_element_type=jnp.float32) + b2_ref[0])     # (M, hidden)
    # conv_list (4 hidden->hidden layers); static unroll, weights differ per layer.
    for i in range(num_layers):
        h = _leaky(jnp.dot(h.astype(jnp.bfloat16), wl_ref[0, i],
                           preferred_element_type=jnp.float32) + bl_ref[0, i])
    # last_conv + 2*tanh
    o = 2.0 * jnp.tanh(jnp.dot(h.astype(jnp.bfloat16), wlast_ref[0],
                               preferred_element_type=jnp.float32) + blast_ref[0])   # (M, dim)

    # Transpose (M, dim) -> (dim, M) so the store is lane-dense (point axis on lanes),
    # avoiding 3/128-lane masked stores on the dim=3 axis.
    out_ref[0] = o.T


def _vmem_limit_bytes():
    # Explicit VMEM budget with headroom: ~96 MiB on v5e/v6e (128 MiB physical),
    # ~48 MiB on v7x (64 MiB physical per TC).
    try:
        cap = int(pltpu.get_tpu_info().vmem_capacity_bytes)
    except Exception:
        cap = 64 * 1024 * 1024
    return min(int(cap * 3 // 4), 100 * 1024 * 1024)


def _nbytes(x):
    return int(np.prod(x.shape)) * np.dtype(x.dtype).itemsize


# ----------------------------------------------------------------------------------------------
# One-time parameter preparation (hoisted out of the per-call path).
# ----------------------------------------------------------------------------------------------
def prepare_atlasnet_params(params, *, matmul_dtype=jnp.bfloat16):
    """Relayout PyTorch-style params for the kernel, once.

    * All weight transposes (Cout,Cin)->(Cin,Cout) and the bf16 cast happen here, not per call.
    * conv10(grid) depends only on parameters, so it is folded into a precomputed per-primitive
      point-feature table pt_feat[r, s, :] = W10[r] @ grid[r][:, s] + b10[r]   (f32).
    """
    pts = params['pts']                                     # (nr, dim, nsample)
    w10t = jnp.transpose(params['W10'], (0, 2, 1))          # (nr, dim, nf)
    pt_feat = (jnp.einsum('rds,rdf->rsf', pts, w10t)
               + params['b10'][:, None, :]).astype(jnp.float32)            # (nr, ns, nf)
    return dict(
        pt_feat=pt_feat,
        w11=jnp.transpose(params['W11'], (0, 2, 1)).astype(matmul_dtype),   # (nr, nf, nf)
        b11=params['b11'][:, None, :].astype(jnp.float32),                  # (nr, 1, nf)
        w2=jnp.transpose(params['W2'], (0, 2, 1)).astype(matmul_dtype),     # (nr, nf, hid)
        b2=params['b2'][:, None, :].astype(jnp.float32),                    # (nr, 1, hid)
        wl=jnp.transpose(params['Wl'], (0, 1, 3, 2)).astype(matmul_dtype),  # (nr, L, hid, hid)
        bl=params['bl'][:, :, None, :].astype(jnp.float32),                 # (nr, L, 1, hid)
        wlast=jnp.transpose(params['Wlast'], (0, 2, 1)).astype(matmul_dtype),  # (nr, hid, dim)
        blast=params['blast'][:, None, :].astype(jnp.float32),              # (nr, 1, dim)
    )


# ----------------------------------------------------------------------------------------------
# Atlasnet forward (Pallas-backed).
# ----------------------------------------------------------------------------------------------
def atlasnet_forward(latent, prep):
    """latent: (bs, nf, nfps)  ->  (bs, dim, nfps, nr*nsample)"""
    bs, nf, nfps = latent.shape
    nr, nsample, nf_p = prep['pt_feat'].shape
    assert nf_p == nf, (nf_p, nf)
    hidden = prep['w2'].shape[2]
    dim = prep['wlast'].shape[2]
    num_layers = prep['wl'].shape[1]
    n_lat = bs * nfps
    m = n_lat * nsample

    # (bs, nf, nfps) -> (bs*nfps, nf): channels last; all batches/fps collapsed into the matmul
    # M dimension (few fat MXU calls; latent block is constant across r -> DMA'd once).
    lat2d = jnp.transpose(latent, (0, 2, 1)).reshape(n_lat, nf)

    flops = 2 * nr * (n_lat * nf * nf
                      + m * (nf * hidden + num_layers * hidden * hidden + hidden * dim))
    bytes_accessed = (_nbytes(lat2d) + nr * dim * m * 4
                      + sum(_nbytes(prep[k]) for k in
                            ('pt_feat', 'w11', 'b11', 'w2', 'b2', 'wl', 'bl', 'wlast', 'blast')))
    cost = pl.CostEstimate(flops=int(flops), transcendentals=int(nr * m * dim),
                           bytes_accessed=int(bytes_accessed))

    out = pl.pallas_call(
        _atlas_kernel,
        out_shape=jax.ShapeDtypeStruct((nr, dim, m), jnp.float32),
        grid=(nr,),
        in_specs=[
            pl.BlockSpec((1, nsample, nf), lambda r: (r, 0, 0)),                  # pt_feat
            pl.BlockSpec((n_lat, nf), lambda r: (0, 0)),                          # latent (resident)
            pl.BlockSpec((1, nf, nf), lambda r: (r, 0, 0)),                       # W11^T
            pl.BlockSpec((1, 1, nf), lambda r: (r, 0, 0)),                        # b11
            pl.BlockSpec((1, nf, hidden), lambda r: (r, 0, 0)),                   # W2^T
            pl.BlockSpec((1, 1, hidden), lambda r: (r, 0, 0)),                    # b2
            pl.BlockSpec((1, num_layers, hidden, hidden), lambda r: (r, 0, 0, 0)),  # Wl^T
            pl.BlockSpec((1, num_layers, 1, hidden), lambda r: (r, 0, 0, 0)),     # bl
            pl.BlockSpec((1, hidden, dim), lambda r: (r, 0, 0)),                  # Wlast^T
            pl.BlockSpec((1, 1, dim), lambda r: (r, 0, 0)),                       # blast
        ],
        out_specs=pl.BlockSpec((1, dim, m), lambda r: (r, 0, 0)),
        compiler_params=pltpu.CompilerParams(
            dimension_semantics=("parallel",),       # v7x: primitives split across the 2 TCs
            vmem_limit_bytes=_vmem_limit_bytes()),
        cost_estimate=cost,
    )(prep['pt_feat'], lat2d, prep['w11'], prep['b11'], prep['w2'], prep['b2'],
      prep['wl'], prep['bl'], prep['wlast'], prep['blast'])

    # (nr, dim, bs*nfps*nsample) -> (bs, dim, nfps, nr*nsample).  The reshapes are free; the
    # transpose is the same permute(0,2,3,1,4) the torch module performs on its output.
    out5 = out.reshape(nr, dim, bs, nfps, nsample)
    return jnp.transpose(out5, (2, 1, 3, 0, 4)).reshape(bs, dim, nfps, nr * nsample)


# ----------------------------------------------------------------------------------------------
# AtlasDecoder forward (Pallas-backed).
# ----------------------------------------------------------------------------------------------
def atlas_decoder_forward(z_g, z_l, body, prep_g, prep_l):
    """z_g: (bs, latent_g, 1), z_l: (bs, latent_l, nfps), body: (bs, latent_body)."""
    bs = z_g.shape[0]
    nfps = z_l.shape[2]
    lat_g = jnp.concatenate([z_g, body[:, :, None]], axis=1)              # (bs, lg+lb, 1)
    lat_l = jnp.concatenate([jnp.tile(z_g, (1, 1, nfps)), z_l], axis=1)   # (bs, lg+ll, nfps)
    rec_g = atlasnet_forward(lat_g, prep_g)                               # (bs, 3, 1, nfps)
    rec_l = atlasnet_forward(lat_l, prep_l)                               # (bs, 3, nfps, nsample)
    rec = rec_l + jnp.transpose(rec_g, (0, 1, 3, 2))                      # (bs, 3, nfps, nsample)
    return rec.reshape(bs, 3, -1)                                         # (bs, 3, nfps*nsample)


# ----------------------------------------------------------------------------------------------
# Pure-JAX f32 references mirroring the PyTorch NCHW conv1x1 forward (semantic ground truth).
# ----------------------------------------------------------------------------------------------
def ref_atlasnet_forward(latent, params):
    bs, nf, nfps = latent.shape
    pts = params['pts']
    nr, dim, nsample = pts.shape
    num_layers = params['Wl'].shape[1]

    def lk(x):
        return jnp.where(x >= 0, x, LEAKY_SLOPE * x)

    outs = []
    for r in range(nr):
        a = jnp.einsum('od,dn->on', params['W10'][r], pts[r]) + params['b10'][r][:, None]
        b = jnp.einsum('oc,bcf->bof', params['W11'][r], latent) + params['b11'][r][None, :, None]
        h = lk(a[None, :, None, :] + b[:, :, :, None])                    # (bs, nf, nfps, ns)
        h = lk(jnp.einsum('oc,bcfn->bofn', params['W2'][r], h)
               + params['b2'][r][None, :, None, None])
        for i in range(num_layers):
            h = lk(jnp.einsum('oc,bcfn->bofn', params['Wl'][r, i], h)
                   + params['bl'][r, i][None, :, None, None])
        o = 2.0 * jnp.tanh(jnp.einsum('oc,bcfn->bofn', params['Wlast'][r], h)
                           + params['blast'][r][None, :, None, None])     # (bs, dim, nfps, ns)
        outs.append(o)
    op = jnp.stack(outs, axis=1)                                          # (bs, nr, dim, nfps, ns)
    return jnp.transpose(op, (0, 2, 3, 1, 4)).reshape(bs, dim, nfps, nr * nsample)


def ref_atlas_decoder_forward(z_g, z_l, body, params_g, params_l):
    bs = z_g.shape[0]
    nfps = z_l.shape[2]
    lat_g = jnp.concatenate([z_g, body[:, :, None]], axis=1)
    lat_l = jnp.concatenate([jnp.tile(z_g, (1, 1, nfps)), z_l], axis=1)
    rec_g = ref_atlasnet_forward(lat_g, params_g)
    rec_l = ref_atlasnet_forward(lat_l, params_l)
    rec = rec_l + jnp.transpose(rec_g, (0, 1, 3, 2))
    return rec.reshape(bs, 3, -1)


# ----------------------------------------------------------------------------------------------
# Parameter init (PyTorch Conv2d-style layouts; weights_init only touches BatchNorm -> no-op).
# ----------------------------------------------------------------------------------------------
def init_atlasnet_params(key, *, nr, nf, dim, hidden, num_layers, nsample):
    ks = jax.random.split(key, 11)

    def u(k, shape, fan_in):
        bound = 1.0 / float(np.sqrt(fan_in))
        return jax.random.uniform(k, shape, jnp.float32, -bound, bound)

    return {
        'W10': u(ks[0], (nr, nf, dim), dim),
        'b10': u(ks[1], (nr, nf), dim),
        'W11': u(ks[2], (nr, nf, nf), nf),
        'b11': u(ks[3], (nr, nf), nf),
        'W2': u(ks[4], (nr, hidden, nf), nf),
        'b2': u(ks[5], (nr, hidden), nf),
        'Wl': u(ks[6], (nr, num_layers, hidden, hidden), hidden),
        'bl': u(ks[7], (nr, num_layers, hidden), hidden),
        'Wlast': u(ks[8], (nr, dim, hidden), hidden),
        'blast': u(ks[9], (nr, dim), hidden),
        # grid patches, same init as torch's .uniform_(-1, 1)
        'pts': jax.random.uniform(ks[10], (nr, dim, nsample), jnp.float32, -1.0, 1.0),
    }


if __name__ == "__main__":
    # Small, module-consistent shapes.  (The real AtlasDecoder uses latent_g=512, latent_l=8,
    # latent_body=217 and hidden 512/256; shrunk here for a fast self-test.)
    bs = 2
    nfps, nsample, nr, dim = 8, 16, 2, 3
    latent_g, latent_l, latent_body = 32, 8, 16
    hidden_g, hidden_l = 32, 32

    key = jax.random.PRNGKey(0)
    kpg, kpl, kzg, kzl, kbd = jax.random.split(key, 5)

    params_g = init_atlasnet_params(kpg, nr=nr, nf=latent_g + latent_body, dim=dim,
                                    hidden=hidden_g, num_layers=NUM_LAYERS,
                                    nsample=nfps // nr)
    params_l = init_atlasnet_params(kpl, nr=nr, nf=latent_g + latent_l, dim=dim,
                                    hidden=hidden_l, num_layers=NUM_LAYERS,
                                    nsample=nsample // nr)
    # One-time weight relayout / bf16 cast / conv10-folding (hoisted out of the per-call path).
    prep_g = prepare_atlasnet_params(params_g)
    prep_l = prepare_atlasnet_params(params_l)

    z_g = jax.random.normal(kzg, (bs, latent_g, 1), jnp.float32)
    z_l = jax.random.normal(kzl, (bs, latent_l, nfps), jnp.float32)
    body = jax.random.normal(kbd, (bs, latent_body), jnp.float32)

    fwd = jax.jit(atlas_decoder_forward)
    out = jax.block_until_ready(fwd(z_g, z_l, body, prep_g, prep_l))
    assert out.shape == (bs, dim, nfps * nsample), out.shape

    ref = jax.block_until_ready(ref_atlas_decoder_forward(z_g, z_l, body, params_g, params_l))
    # bf16 matmul operands (f32 accumulation) vs. the pure-f32 reference -> loosened tolerance.
    np.testing.assert_allclose(np.asarray(out), np.asarray(ref), rtol=5e-2, atol=5e-2)

    print("KERNEL_OK")
</pallas_src>

<mosaic_0001>
module attributes {stable_mosaic.version = 11 : i64} {
  func.func @_atlas_kernel(%arg0: i32, %arg1: memref<1x8x40xf32, #tpu.memory_space<vmem>>, %arg2: memref<16x40xf32, #tpu.memory_space<vmem>>, %arg3: memref<1x40x40xbf16, #tpu.memory_space<vmem>>, %arg4: memref<1x1x40xf32, #tpu.memory_space<vmem>>, %arg5: memref<1x40x32xbf16, #tpu.memory_space<vmem>>, %arg6: memref<1x1x32xf32, #tpu.memory_space<vmem>>, %arg7: memref<1x4x32x32xbf16, #tpu.memory_space<vmem>>, %arg8: memref<1x4x1x32xf32, #tpu.memory_space<vmem>>, %arg9: memref<1x32x3xbf16, #tpu.memory_space<vmem>>, %arg10: memref<1x1x3xf32, #tpu.memory_space<vmem>>, %arg11: memref<1x3x128xf32, #tpu.memory_space<vmem>>) attributes {dimension_semantics = [#tpu.dimension_semantics<parallel>], iteration_bounds = array<i64: 2>, scalar_prefetch = 0 : i64, scratch_operands = 0 : i64, tpu.core_type = #tpu.core_type<tc>, window_params = [{transform_indices = @transform_0, window_bounds = array<i64: 1, 8, 40>}, {pipeline_mode = #tpu.pipeline_mode<synchronous>, transform_indices = @transform_1, window_bounds = array<i64: 16, 40>}, {transform_indices = @transform_2, window_bounds = array<i64: 1, 40, 40>}, {transform_indices = @transform_3, window_bounds = array<i64: 1, 1, 40>}, {transform_indices = @transform_4, window_bounds = array<i64: 1, 40, 32>}, {transform_indices = @transform_5, window_bounds = array<i64: 1, 1, 32>}, {transform_indices = @transform_6, window_bounds = array<i64: 1, 4, 32, 32>}, {transform_indices = @transform_7, window_bounds = array<i64: 1, 4, 1, 32>}, {transform_indices = @transform_8, window_bounds = array<i64: 1, 32, 3>}, {transform_indices = @transform_9, window_bounds = array<i64: 1, 1, 3>}, {transform_indices = @transform_10, window_bounds = array<i64: 1, 3, 128>}]} {
    %c0 = arith.constant 0 : index
    %c0_0 = arith.constant 0 : index
    %c0_1 = arith.constant 0 : index
    %0 = vector.load %arg1[%c0, %c0_0, %c0_1] : memref<1x8x40xf32, #tpu.memory_space<vmem>>, vector<1x8x40xf32>
    %1 = vector.shape_cast %0 : vector<1x8x40xf32> to vector<8x40xf32>
    %c0_2 = arith.constant 0 : index
    %c0_3 = arith.constant 0 : index
    %2 = vector.load %arg2[%c0_2, %c0_3] : memref<16x40xf32, #tpu.memory_space<vmem>>, vector<16x40xf32>
    %3 = arith.truncf %2 : vector<16x40xf32> to vector<16x40xbf16>
    %c0_4 = arith.constant 0 : index
    %c0_5 = arith.constant 0 : index
    %c0_6 = arith.constant 0 : index
    %4 = vector.load %arg3[%c0_4, %c0_5, %c0_6] : memref<1x40x40xbf16, #tpu.memory_space<vmem>>, vector<1x40x40xbf16>
    %5 = vector.shape_cast %4 : vector<1x40x40xbf16> to vector<40x40xbf16>
    %cst = arith.constant dense<0.000000e+00> : vector<16x40xf32>
    %6 = tpu.matmul %3, %5, %cst {dimension_numbers = #tpu.dot_dimension_numbers<[1], [0], [0], [1], [0, 0, 1, 1], [], []>} : vector<16x40xbf16>, vector<40x40xbf16>, vector<16x40xf32> -> vector<16x40xf32>
    %c0_7 = arith.constant 0 : index
    %c0_8 = arith.constant 0 : index
    %c0_9 = arith.constant 0 : index
    %7 = vector.load %arg4[%c0_7, %c0_8, %c0_9] : memref<1x1x40xf32, #tpu.memory_space<vmem>>, vector<1x1x40xf32>
    %8 = vector.shape_cast %7 : vector<1x1x40xf32> to vector<1x40xf32>
    %9 = vector.broadcast %8 : vector<1x40xf32> to vector<16x40xf32>
    %10 = arith.addf %6, %9 : vector<16x40xf32>
    %11 = vector.shape_cast %10 : vector<16x40xf32> to vector<16x1x40xf32>
    %12 = vector.shape_cast %1 : vector<8x40xf32> to vector<1x8x40xf32>
    %13 = vector.broadcast %11 : vector<16x1x40xf32> to vector<16x8x40xf32>
    %14 = vector.broadcast %12 : vector<1x8x40xf32> to vector<16x8x40xf32>
    %15 = arith.addf %13, %14 : vector<16x8x40xf32>
    %cst_10 = arith.constant 0.00999999977 : f32
    %16 = vector.broadcast %cst_10 : f32 to vector<16x8x40xf32>
    %17 = arith.mulf %16, %15 : vector<16x8x40xf32>
    %18 = arith.maximumf %15, %17 : vector<16x8x40xf32>
    %19 = vector.shape_cast %18 : vector<16x8x40xf32> to vector<128x40xf32>
    %20 = arith.truncf %19 : vector<128x40xf32> to vector<128x40xbf16>
    %c0_11 = arith.constant 0 : index
    %c0_12 = arith.constant 0 : index
    %c0_13 = arith.constant 0 : index
    %21 = vector.load %arg5[%c0_11, %c0_12, %c0_13] : memref<1x40x32xbf16, #tpu.memory_space<vmem>>, vector<1x40x32xbf16>
    %22 = vector.shape_cast %21 : vector<1x40x32xbf16> to vector<40x32xbf16>
    %cst_14 = arith.constant dense<0.000000e+00> : vector<128x32xf32>
    %23 = tpu.matmul %20, %22, %cst_14 {dimension_numbers = #tpu.dot_dimension_numbers<[1], [0], [0], [1], [0, 0, 1, 1], [], []>} : vector<128x40xbf16>, vector<40x32xbf16>, vector<128x32xf32> -> vector<128x32xf32>
    %c0_15 = arith.constant 0 : index
    %c0_16 = arith.constant 0 : index
    %c0_17 = arith.constant 0 : index
    %24 = vector.load %arg6[%c0_15, %c0_16, %c0_17] : memref<1x1x32xf32, #tpu.memory_space<vmem>>, vector<1x1x32xf32>
    %25 = vector.shape_cast %24 : vector<1x1x32xf32> to vector<1x32xf32>
    %26 = vector.broadcast %25 : vector<1x32xf32> to vector<128x32xf32>
    %27 = arith.addf %23, %26 : vector<128x32xf32>
    %cst_18 = arith.constant 0.00999999977 : f32
    %28 = vector.broadcast %cst_18 : f32 to vector<128x32xf32>
    %29 = arith.mulf %28, %27 : vector<128x32xf32>
    %30 = arith.maximumf %27, %29 : vector<128x32xf32>
    %31 = arith.truncf %30 : vector<128x32xf32> to vector<128x32xbf16>
    %c0_19 = arith.constant 0 : index
    %c0_20 = arith.constant 0 : index
    %c0_21 = arith.constant 0 : index
    %c0_22 = arith.constant 0 : index
    %32 = vector.load %arg7[%c0_19, %c0_20, %c0_21, %c0_22] : memref<1x4x32x32xbf16, #tpu.memory_space<vmem>>, vector<1x1x32x32xbf16>
    %33 = vector.shape_cast %32 : vector<1x1x32x32xbf16> to vector<32x32xbf16>
    %cst_23 = arith.constant dense<0.000000e+00> : vector<128x32xf32>
    %34 = tpu.matmul %31, %33, %cst_23 {dimension_numbers = #tpu.dot_dimension_numbers<[1], [0], [0], [1], [0, 0, 1, 1], [], []>} : vector<128x32xbf16>, vector<32x32xbf16>, vector<128x32xf32> -> vector<128x32xf32>
    %c0_24 = arith.constant 0 : index
    %c0_25 = arith.constant 0 : index
    %c0_26 = arith.constant 0 : index
    %c0_27 = arith.constant 0 : index
    %35 = vector.load %arg8[%c0_24, %c0_25, %c0_26, %c0_27] : memref<1x4x1x32xf32, #tpu.memory_space<vmem>>, vector<1x1x1x32xf32>
    %36 = vector.shape_cast %35 : vector<1x1x1x32xf32> to vector<1x32xf32>
    %37 = vector.broadcast %36 : vector<1x32xf32> to vector<128x32xf32>
    %38 = arith.addf %34, %37 : vector<128x32xf32>
    %cst_28 = arith.constant 0.00999999977 : f32
    %39 = vector.broadcast %cst_28 : f32 to vector<128x32xf32>
    %40 = arith.mulf %39, %38 : vector<128x32xf32>
    %41 = arith.maximumf %38, %40 : vector<128x32xf32>
    %42 = arith.truncf %41 : vector<128x32xf32> to vector<128x32xbf16>
    %c0_29 = arith.constant 0 : index
    %c1 = arith.constant 1 : index
    %c0_30 = arith.constant 0 : index
    %c0_31 = arith.constant 0 : index
    %43 = vector.load %arg7[%c0_29, %c1, %c0_30, %c0_31] : memref<1x4x32x32xbf16, #tpu.memory_space<vmem>>, vector<1x1x32x32xbf16>
    %44 = vector.shape_cast %43 : vector<1x1x32x32xbf16> to vector<32x32xbf16>
    %cst_32 = arith.constant dense<0.000000e+00> : vector<128x32xf32>
    %45 = tpu.matmul %42, %44, %cst_32 {dimension_numbers = #tpu.dot_dimension_numbers<[1], [0], [0], [1], [0, 0, 1, 1], [], []>} : vector<128x32xbf16>, vector<32x32xbf16>, vector<128x32xf32> -> vector<128x32xf32>
    %c0_33 = arith.constant 0 : index
    %c1_34 = arith.constant 1 : index
    %c0_35 = arith.constant 0 : index
    %c0_36 = arith.constant 0 : index
    %46 = vector.load %arg8[%c0_33, %c1_34, %c0_35, %c0_36] : memref<1x4x1x32xf32, #tpu.memory_space<vmem>>, vector<1x1x1x32xf32>
    %47 = vector.shape_cast %46 : vector<1x1x1x32xf32> to vector<1x32xf32>
    %48 = vector.broadcast %47 : vector<1x32xf32> to vector<128x32xf32>
    %49 = arith.addf %45, %48 : vector<128x32xf32>
    %cst_37 = arith.constant 0.00999999977 : f32
    %50 = vector.broadcast %cst_37 : f32 to vector<128x32xf32>
    %51 = arith.mulf %50, %49 : vector<128x32xf32>
    %52 = arith.maximumf %49, %51 : vector<128x32xf32>
    %53 = arith.truncf %52 : vector<128x32xf32> to vector<128x32xbf16>
    %c0_38 = arith.constant 0 : index
    %c2 = arith.constant 2 : index
    %c0_39 = arith.constant 0 : index
    %c0_40 = arith.constant 0 : index
    %54 = vector.load %arg7[%c0_38, %c2, %c0_39, %c0_40] : memref<1x4x32x32xbf16, #tpu.memory_space<vmem>>, vector<1x1x32x32xbf16>
    %55 = vector.shape_cast %54 : vector<1x1x32x32xbf16> to vector<32x32xbf16>
    %cst_41 = arith.constant dense<0.000000e+00> : vector<128x32xf32>
    %56 = tpu.matmul %53, %55, %cst_41 {dimension_numbers = #tpu.dot_dimension_numbers<[1], [0], [0], [1], [0, 0, 1, 1], [], []>} : vector<128x32xbf16>, vector<32x32xbf16>, vector<128x32xf32> -> vector<128x32xf32>
    %c0_42 = arith.constant 0 : index
    %c2_43 = arith.constant 2 : index
    %c0_44 = arith.constant 0 : index
    %c0_45 = arith.constant 0 : index
    %57 = vector.load %arg8[%c0_42, %c2_43, %c0_44, %c0_45] : memref<1x4x1x32xf32, #tpu.memory_space<vmem>>, vector<1x1x1x32xf32>
    %58 = vector.shape_cast %57 : vector<1x1x1x32xf32> to vector<1x32xf32>
    %59 = vector.broadcast %58 : vector<1x32xf32> to vector<128x32xf32>
    %60 = arith.addf %56, %59 : vector<128x32xf32>
    %cst_46 = arith.constant 0.00999999977 : f32
    %61 = vector.broadcast %cst_46 : f32 to vector<128x32xf32>
    %62 = arith.mulf %61, %60 : vector<128x32xf32>
    %63 = arith.maximumf %60, %62 : vector<128x32xf32>
    %64 = arith.truncf %63 : vector<128x32xf32> to vector<128x32xbf16>
    %c0_47 = arith.constant 0 : index
    %c3 = arith.constant 3 : index
    %c0_48 = arith.constant 0 : index
    %c0_49 = arith.constant 0 : index
    %65 = vector.load %arg7[%c0_47, %c3, %c0_48, %c0_49] : memref<1x4x32x32xbf16, #tpu.memory_space<vmem>>, vector<1x1x32x32xbf16>
    %66 = vector.shape_cast %65 : vector<1x1x32x32xbf16> to vector<32x32xbf16>
    %cst_50 = arith.constant dense<0.000000e+00> : vector<128x32xf32>
    %67 = tpu.matmul %64, %66, %cst_50 {dimension_numbers = #tpu.dot_dimension_numbers<[1], [0], [0], [1], [0, 0, 1, 1], [], []>} : vector<128x32xbf16>, vector<32x32xbf16>, vector<128x32xf32> -> vector<128x32xf32>
    %c0_51 = arith.constant 0 : index
    %c3_52 = arith.constant 3 : index
    %c0_53 = arith.constant 0 : index
    %c0_54 = arith.constant 0 : index
    %68 = vector.load %arg8[%c0_51, %c3_52, %c0_53, %c0_54] : memref<1x4x1x32xf32, #tpu.memory_space<vmem>>, vector<1x1x1x32xf32>
    %69 = vector.shape_cast %68 : vector<1x1x1x32xf32> to vector<1x32xf32>
    %70 = vector.broadcast %69 : vector<1x32xf32> to vector<128x32xf32>
    %71 = arith.addf %67, %70 : vector<128x32xf32>
    %cst_55 = arith.constant 0.00999999977 : f32
    %72 = vector.broadcast %cst_55 : f32 to vector<128x32xf32>
    %73 = arith.mulf %72, %71 : vector<128x32xf32>
    %74 = arith.maximumf %71, %73 : vector<128x32xf32>
    %75 = arith.truncf %74 : vector<128x32xf32> to vector<128x32xbf16>
    %c0_56 = arith.constant 0 : index
    %c0_57 = arith.constant 0 : index
    %c0_58 = arith.constant 0 : index
    %76 = vector.load %arg9[%c0_56, %c0_57, %c0_58] : memref<1x32x3xbf16, #tpu.memory_space<vmem>>, vector<1x32x3xbf16>
    %77 = vector.shape_cast %76 : vector<1x32x3xbf16> to vector<32x3xbf16>
    %cst_59 = arith.constant dense<0.000000e+00> : vector<128x3xf32>
    %78 = tpu.matmul %75, %77, %cst_59 {dimension_numbers = #tpu.dot_dimension_numbers<[1], [0], [0], [1], [0, 0, 1, 1], [], []>} : vector<128x32xbf16>, vector<32x3xbf16>, vector<128x3xf32> -> vector<128x3xf32>
    %c0_60 = arith.constant 0 : index
    %c0_61 = arith.constant 0 : index
    %c0_62 = arith.constant 0 : index
    %79 = vector.load %arg10[%c0_60, %c0_61, %c0_62] : memref<1x1x3xf32, #tpu.memory_space<vmem>>, vector<1x1x3xf32>
    %80 = vector.shape_cast %79 : vector<1x1x3xf32> to vector<1x3xf32>
    %81 = vector.broadcast %80 : vector<1x3xf32> to vector<128x3xf32>
    %82 = arith.addf %78, %81 : vector<128x3xf32>
    %83 = math.tanh %82 : vector<128x3xf32>
    %cst_63 = arith.constant 2.000000e+00 : f32
    %84 = vector.broadcast %cst_63 : f32 to vector<128x3xf32>
    %85 = arith.mulf %84, %83 : vector<128x3xf32>
    %86 = tpu.transpose %85, [1, 0] : vector<128x3xf32> -> vector<3x128xf32>
    %c0_64 = arith.constant 0 : index
    %c0_65 = arith.constant 0 : index
    %c0_66 = arith.constant 0 : index
    %87 = vector.load %arg11[%c0_64, %c0_65, %c0_66] : memref<1x3x128xf32, #tpu.memory_space<vmem>>, vector<1x3x128xf32>
    %88 = vector.shape_cast %87 : vector<1x3x128xf32> to vector<3x128xf32>
    %89 = vector.shape_cast %86 : vector<3x128xf32> to vector<1x3x128xf32>
    tpu.vector_store %arg11[%c0_64, %c0_65, %c0_66], %89 {strides = array<i32>} : memref<1x3x128xf32, #tpu.memory_space<vmem>>, vector<1x3x128xf32>,
    return
  }
  func.func @transform_0(%arg0: i32) -> (i32, i32, i32) {
    %c0_i32 = arith.constant 0 : i32
    %c0_i32_0 = arith.constant 0 : i32
    %c0_i32_1 = arith.constant 0 : i32
    return %arg0, %c0_i32, %c0_i32_0 : i32, i32, i32
  }
  func.func @transform_1(%arg0: i32) -> (i32, i32) {
    %c0_i32 = arith.constant 0 : i32
    %c0_i32_0 = arith.constant 0 : i32
    %c0_i32_1 = arith.constant 0 : i32
    return %c0_i32, %c0_i32_0 : i32, i32
  }
  func.func @transform_2(%arg0: i32) -> (i32, i32, i32) {
    %c0_i32 = arith.constant 0 : i32
    %c0_i32_0 = arith.constant 0 : i32
    %c0_i32_1 = arith.constant 0 : i32
    return %arg0, %c0_i32, %c0_i32_0 : i32, i32, i32
  }
  func.func @transform_3(%arg0: i32) -> (i32, i32, i32) {
    %c0_i32 = arith.constant 0 : i32
    %c0_i32_0 = arith.constant 0 : i32
    %c0_i32_1 = arith.constant 0 : i32
    return %arg0, %c0_i32, %c0_i32_0 : i32, i32, i32
  }
  func.func @transform_4(%arg0: i32) -> (i32, i32, i32) {
    %c0_i32 = arith.constant 0 : i32
    %c0_i32_0 = arith.constant 0 : i32
    %c0_i32_1 = arith.constant 0 : i32
    return %arg0, %c0_i32, %c0_i32_0 : i32, i32, i32
  }
  func.func @transform_5(%arg0: i32) -> (i32, i32, i32) {
    %c0_i32 = arith.constant 0 : i32
    %c0_i32_0 = arith.constant 0 : i32
    %c0_i32_1 = arith.constant 0 : i32
    return %arg0, %c0_i32, %c0_i32_0 : i32, i32, i32
  }
  func.func @transform_6(%arg0: i32) -> (i32, i32, i32, i32) {
    %c0_i32 = arith.constant 0 : i32
    %c0_i32_0 = arith.constant 0 : i32
    %c0_i32_1 = arith.constant 0 : i32
    %c0_i32_2 = arith.constant 0 : i32
    return %arg0, %c0_i32, %c0_i32_0, %c0_i32_1 : i32, i32, i32, i32
  }
  func.func @transform_7(%arg0: i32) -> (i32, i32, i32, i32) {
    %c0_i32 = arith.constant 0 : i32
    %c0_i32_0 = arith.constant 0 : i32
    %c0_i32_1 = arith.constant 0 : i32
    %c0_i32_2 = arith.constant 0 : i32
    return %arg0, %c0_i32, %c0_i32_0, %c0_i32_1 : i32, i32, i32, i32
  }
  func.func @transform_8(%arg0: i32) -> (i32, i32, i32) {
    %c0_i32 = arith.constant 0 : i32
    %c0_i32_0 = arith.constant 0 : i32
    %c0_i32_1 = arith.constant 0 : i32
    return %arg0, %c0_i32, %c0_i32_0 : i32, i32, i32
  }
  func.func @transform_9(%arg0: i32) -> (i32, i32, i32) {
    %c0_i32 = arith.constant 0 : i32
    %c0_i32_0 = arith.constant 0 : i32
    %c0_i32_1 = arith.constant 0 : i32
    return %arg0, %c0_i32, %c0_i32_0 : i32, i32, i32
  }
  func.func @transform_10(%arg0: i32) -> (i32, i32, i32) {
    %c0_i32 = arith.constant 0 : i32
    %c0_i32_0 = arith.constant 0 : i32
    %c0_i32_1 = arith.constant 0 : i32
    return %arg0, %c0_i32, %c0_i32_0 : i32, i32, i32
  }
}

module attributes {stable_mosaic.version = 11 : i64} {
  func.func @_atlas_kernel(%arg0: i32, %arg1: memref<1x4x48xf32, #tpu.memory_space<vmem>>, %arg2: memref<2x48xf32, #tpu.memory_space<vmem>>, %arg3: memref<1x48x48xbf16, #tpu.memory_space<vmem>>, %arg4: memref<1x1x48xf32, #tpu.memory_space<vmem>>, %arg5: memref<1x48x32xbf16, #tpu.memory_space<vmem>>, %arg6: memref<1x1x32xf32, #tpu.memory_space<vmem>>, %arg7: memref<1x4x32x32xbf16, #tpu.memory_space<vmem>>, %arg8: memref<1x4x1x32xf32, #tpu.memory_space<vmem>>, %arg9: memref<1x32x3xbf16, #tpu.memory_space<vmem>>, %arg10: memref<1x1x3xf32, #tpu.memory_space<vmem>>, %arg11: memref<1x3x8xf32, #tpu.memory_space<vmem>>) attributes {dimension_semantics = [#tpu.dimension_semantics<parallel>], iteration_bounds = array<i64: 2>, scalar_prefetch = 0 : i64, scratch_operands = 0 : i64, tpu.core_type = #tpu.core_type<tc>, window_params = [{transform_indices = @transform_0, window_bounds = array<i64: 1, 4, 48>}, {pipeline_mode = #tpu.pipeline_mode<synchronous>, transform_indices = @transform_1, window_bounds = array<i64: 2, 48>}, {transform_indices = @transform_2, window_bounds = array<i64: 1, 48, 48>}, {transform_indices = @transform_3, window_bounds = array<i64: 1, 1, 48>}, {transform_indices = @transform_4, window_bounds = array<i64: 1, 48, 32>}, {transform_indices = @transform_5, window_bounds = array<i64: 1, 1, 32>}, {transform_indices = @transform_6, window_bounds = array<i64: 1, 4, 32, 32>}, {transform_indices = @transform_7, window_bounds = array<i64: 1, 4, 1, 32>}, {transform_indices = @transform_8, window_bounds = array<i64: 1, 32, 3>}, {transform_indices = @transform_9, window_bounds = array<i64: 1, 1, 3>}, {transform_indices = @transform_10, window_bounds = array<i64: 1, 3, 8>}]} {
    %c0 = arith.constant 0 : index
    %c0_0 = arith.constant 0 : index
    %c0_1 = arith.constant 0 : index
    %0 = vector.load %arg1[%c0, %c0_0, %c0_1] : memref<1x4x48xf32, #tpu.memory_space<vmem>>, vector<1x4x48xf32>
    %1 = vector.shape_cast %0 : vector<1x4x48xf32> to vector<4x48xf32>
    %c0_2 = arith.constant 0 : index
    %c0_3 = arith.constant 0 : index
    %2 = vector.load %arg2[%c0_2, %c0_3] : memref<2x48xf32, #tpu.memory_space<vmem>>, vector<2x48xf32>
    %3 = arith.truncf %2 : vector<2x48xf32> to vector<2x48xbf16>
    %c0_4 = arith.constant 0 : index
    %c0_5 = arith.constant 0 : index
    %c0_6 = arith.constant 0 : index
    %4 = vector.load %arg3[%c0_4, %c0_5, %c0_6] : memref<1x48x48xbf16, #tpu.memory_space<vmem>>, vector<1x48x48xbf16>
    %5 = vector.shape_cast %4 : vector<1x48x48xbf16> to vector<48x48xbf16>
    %cst = arith.constant dense<0.000000e+00> : vector<2x48xf32>
    %6 = tpu.matmul %3, %5, %cst {dimension_numbers = #tpu.dot_dimension_numbers<[1], [0], [0], [1], [0, 0, 1, 1], [], []>} : vector<2x48xbf16>, vector<48x48xbf16>, vector<2x48xf32> -> vector<2x48xf32>
    %c0_7 = arith.constant 0 : index
    %c0_8 = arith.constant 0 : index
    %c0_9 = arith.constant 0 : index
    %7 = vector.load %arg4[%c0_7, %c0_8, %c0_9] : memref<1x1x48xf32, #tpu.memory_space<vmem>>, vector<1x1x48xf32>
    %8 = vector.shape_cast %7 : vector<1x1x48xf32> to vector<1x48xf32>
    %9 = vector.broadcast %8 : vector<1x48xf32> to vector<2x48xf32>
    %10 = arith.addf %6, %9 : vector<2x48xf32>
    %11 = vector.shape_cast %10 : vector<2x48xf32> to vector<2x1x48xf32>
    %12 = vector.shape_cast %1 : vector<4x48xf32> to vector<1x4x48xf32>
    %13 = vector.broadcast %11 : vector<2x1x48xf32> to vector<2x4x48xf32>
    %14 = vector.broadcast %12 : vector<1x4x48xf32> to vector<2x4x48xf32>
    %15 = arith.addf %13, %14 : vector<2x4x48xf32>
    %cst_10 = arith.constant 0.00999999977 : f32
    %16 = vector.broadcast %cst_10 : f32 to vector<2x4x48xf32>
    %17 = arith.mulf %16, %15 : vector<2x4x48xf32>
    %18 = arith.maximumf %15, %17 : vector<2x4x48xf32>
    %19 = vector.shape_cast %18 : vector<2x4x48xf32> to vector<8x48xf32>
    %20 = arith.truncf %19 : vector<8x48xf32> to vector<8x48xbf16>
    %c0_11 = arith.constant 0 : index
    %c0_12 = arith.constant 0 : index
    %c0_13 = arith.constant 0 : index
    %21 = vector.load %arg5[%c0_11, %c0_12, %c0_13] : memref<1x48x32xbf16, #tpu.memory_space<vmem>>, vector<1x48x32xbf16>
    %22 = vector.shape_cast %21 : vector<1x48x32xbf16> to vector<48x32xbf16>
    %cst_14 = arith.constant dense<0.000000e+00> : vector<8x32xf32>
    %23 = tpu.matmul %20, %22, %cst_14 {dimension_numbers = #tpu.dot_dimension_numbers<[1], [0], [0], [1], [0, 0, 1, 1], [], []>} : vector<8x48xbf16>, vector<48x32xbf16>, vector<8x32xf32> -> vector<8x32xf32>
    %c0_15 = arith.constant 0 : index
    %c0_16 = arith.constant 0 : index
    %c0_17 = arith.constant 0 : index
    %24 = vector.load %arg6[%c0_15, %c0_16, %c0_17] : memref<1x1x32xf32, #tpu.memory_space<vmem>>, vector<1x1x32xf32>
    %25 = vector.shape_cast %24 : vector<1x1x32xf32> to vector<1x32xf32>
    %26 = vector.broadcast %25 : vector<1x32xf32> to vector<8x32xf32>
    %27 = arith.addf %23, %26 : vector<8x32xf32>
    %cst_18 = arith.constant 0.00999999977 : f32
    %28 = vector.broadcast %cst_18 : f32 to vector<8x32xf32>
    %29 = arith.mulf %28, %27 : vector<8x32xf32>
    %30 = arith.maximumf %27, %29 : vector<8x32xf32>
    %31 = arith.truncf %30 : vector<8x32xf32> to vector<8x32xbf16>
    %c0_19 = arith.constant 0 : index
    %c0_20 = arith.constant 0 : index
    %c0_21 = arith.constant 0 : index
    %c0_22 = arith.constant 0 : index
    %32 = vector.load %arg7[%c0_19, %c0_20, %c0_21, %c0_22] : memref<1x4x32x32xbf16, #tpu.memory_space<vmem>>, vector<1x1x32x32xbf16>
    %33 = vector.shape_cast %32 : vector<1x1x32x32xbf16> to vector<32x32xbf16>
    %cst_23 = arith.constant dense<0.000000e+00> : vector<8x32xf32>
    %34 = tpu.matmul %31, %33, %cst_23 {dimension_numbers = #tpu.dot_dimension_numbers<[1], [0], [0], [1], [0, 0, 1, 1], [], []>} : vector<8x32xbf16>, vector<32x32xbf16>, vector<8x32xf32> -> vector<8x32xf32>
    %c0_24 = arith.constant 0 : index
    %c0_25 = arith.constant 0 : index
    %c0_26 = arith.constant 0 : index
    %c0_27 = arith.constant 0 : index
    %35 = vector.load %arg8[%c0_24, %c0_25, %c0_26, %c0_27] : memref<1x4x1x32xf32, #tpu.memory_space<vmem>>, vector<1x1x1x32xf32>
    %36 = vector.shape_cast %35 : vector<1x1x1x32xf32> to vector<1x32xf32>
    %37 = vector.broadcast %36 : vector<1x32xf32> to vector<8x32xf32>
    %38 = arith.addf %34, %37 : vector<8x32xf32>
    %cst_28 = arith.constant 0.00999999977 : f32
    %39 = vector.broadcast %cst_28 : f32 to vector<8x32xf32>
    %40 = arith.mulf %39, %38 : vector<8x32xf32>
    %41 = arith.maximumf %38, %40 : vector<8x32xf32>
    %42 = arith.truncf %41 : vector<8x32xf32> to vector<8x32xbf16>
    %c0_29 = arith.constant 0 : index
    %c1 = arith.constant 1 : index
    %c0_30 = arith.constant 0 : index
    %c0_31 = arith.constant 0 : index
    %43 = vector.load %arg7[%c0_29, %c1, %c0_30, %c0_31] : memref<1x4x32x32xbf16, #tpu.memory_space<vmem>>, vector<1x1x32x32xbf16>
    %44 = vector.shape_cast %43 : vector<1x1x32x32xbf16> to vector<32x32xbf16>
    %cst_32 = arith.constant dense<0.000000e+00> : vector<8x32xf32>
    %45 = tpu.matmul %42, %44, %cst_32 {dimension_numbers = #tpu.dot_dimension_numbers<[1], [0], [0], [1], [0, 0, 1, 1], [], []>} : vector<8x32xbf16>, vector<32x32xbf16>, vector<8x32xf32> -> vector<8x32xf32>
    %c0_33 = arith.constant 0 : index
    %c1_34 = arith.constant 1 : index
    %c0_35 = arith.constant 0 : index
    %c0_36 = arith.constant 0 : index
    %46 = vector.load %arg8[%c0_33, %c1_34, %c0_35, %c0_36] : memref<1x4x1x32xf32, #tpu.memory_space<vmem>>, vector<1x1x1x32xf32>
    %47 = vector.shape_cast %46 : vector<1x1x1x32xf32> to vector<1x32xf32>
    %48 = vector.broadcast %47 : vector<1x32xf32> to vector<8x32xf32>
    %49 = arith.addf %45, %48 : vector<8x32xf32>
    %cst_37 = arith.constant 0.00999999977 : f32
    %50 = vector.broadcast %cst_37 : f32 to vector<8x32xf32>
    %51 = arith.mulf %50, %49 : vector<8x32xf32>
    %52 = arith.maximumf %49, %51 : vector<8x32xf32>
    %53 = arith.truncf %52 : vector<8x32xf32> to vector<8x32xbf16>
    %c0_38 = arith.constant 0 : index
    %c2 = arith.constant 2 : index
    %c0_39 = arith.constant 0 : index
    %c0_40 = arith.constant 0 : index
    %54 = vector.load %arg7[%c0_38, %c2, %c0_39, %c0_40] : memref<1x4x32x32xbf16, #tpu.memory_space<vmem>>, vector<1x1x32x32xbf16>
    %55 = vector.shape_cast %54 : vector<1x1x32x32xbf16> to vector<32x32xbf16>
    %cst_41 = arith.constant dense<0.000000e+00> : vector<8x32xf32>
    %56 = tpu.matmul %53, %55, %cst_41 {dimension_numbers = #tpu.dot_dimension_numbers<[1], [0], [0], [1], [0, 0, 1, 1], [], []>} : vector<8x32xbf16>, vector<32x32xbf16>, vector<8x32xf32> -> vector<8x32xf32>
    %c0_42 = arith.constant 0 : index
    %c2_43 = arith.constant 2 : index
    %c0_44 = arith.constant 0 : index
    %c0_45 = arith.constant 0 : index
    %57 = vector.load %arg8[%c0_42, %c2_43, %c0_44, %c0_45] : memref<1x4x1x32xf32, #tpu.memory_space<vmem>>, vector<1x1x1x32xf32>
    %58 = vector.shape_cast %57 : vector<1x1x1x32xf32> to vector<1x32xf32>
    %59 = vector.broadcast %58 : vector<1x32xf32> to vector<8x32xf32>
    %60 = arith.addf %56, %59 : vector<8x32xf32>
    %cst_46 = arith.constant 0.00999999977 : f32
    %61 = vector.broadcast %cst_46 : f32 to vector<8x32xf32>
    %62 = arith.mulf %61, %60 : vector<8x32xf32>
    %63 = arith.maximumf %60, %62 : vector<8x32xf32>
    %64 = arith.truncf %63 : vector<8x32xf32> to vector<8x32xbf16>
    %c0_47 = arith.constant 0 : index
    %c3 = arith.constant 3 : index
    %c0_48 = arith.constant 0 : index
    %c0_49 = arith.constant 0 : index
    %65 = vector.load %arg7[%c0_47, %c3, %c0_48, %c0_49] : memref<1x4x32x32xbf16, #tpu.memory_space<vmem>>, vector<1x1x32x32xbf16>
    %66 = vector.shape_cast %65 : vector<1x1x32x32xbf16> to vector<32x32xbf16>
    %cst_50 = arith.constant dense<0.000000e+00> : vector<8x32xf32>
    %67 = tpu.matmul %64, %66, %cst_50 {dimension_numbers = #tpu.dot_dimension_numbers<[1], [0], [0], [1], [0, 0, 1, 1], [], []>} : vector<8x32xbf16>, vector<32x32xbf16>, vector<8x32xf32> -> vector<8x32xf32>
    %c0_51 = arith.constant 0 : index
    %c3_52 = arith.constant 3 : index
    %c0_53 = arith.constant 0 : index
    %c0_54 = arith.constant 0 : index
    %68 = vector.load %arg8[%c0_51, %c3_52, %c0_53, %c0_54] : memref<1x4x1x32xf32, #tpu.memory_space<vmem>>, vector<1x1x1x32xf32>
    %69 = vector.shape_cast %68 : vector<1x1x1x32xf32> to vector<1x32xf32>
    %70 = vector.broadcast %69 : vector<1x32xf32> to vector<8x32xf32>
    %71 = arith.addf %67, %70 : vector<8x32xf32>
    %cst_55 = arith.constant 0.00999999977 : f32
    %72 = vector.broadcast %cst_55 : f32 to vector<8x32xf32>
    %73 = arith.mulf %72, %71 : vector<8x32xf32>
    %74 = arith.maximumf %71, %73 : vector<8x32xf32>
    %75 = arith.truncf %74 : vector<8x32xf32> to vector<8x32xbf16>
    %c0_56 = arith.constant 0 : index
    %c0_57 = arith.constant 0 : index
    %c0_58 = arith.constant 0 : index
    %76 = vector.load %arg9[%c0_56, %c0_57, %c0_58] : memref<1x32x3xbf16, #tpu.memory_space<vmem>>, vector<1x32x3xbf16>
    %77 = vector.shape_cast %76 : vector<1x32x3xbf16> to vector<32x3xbf16>
    %cst_59 = arith.constant dense<0.000000e+00> : vector<8x3xf32>
    %78 = tpu.matmul %75, %77, %cst_59 {dimension_numbers = #tpu.dot_dimension_numbers<[1], [0], [0], [1], [0, 0, 1, 1], [], []>} : vector<8x32xbf16>, vector<32x3xbf16>, vector<8x3xf32> -> vector<8x3xf32>
    %c0_60 = arith.constant 0 : index
    %c0_61 = arith.constant 0 : index
    %c0_62 = arith.constant 0 : index
    %79 = vector.load %arg10[%c0_60, %c0_61, %c0_62] : memref<1x1x3xf32, #tpu.memory_space<vmem>>, vector<1x1x3xf32>
    %80 = vector.shape_cast %79 : vector<1x1x3xf32> to vector<1x3xf32>
    %81 = vector.broadcast %80 : vector<1x3xf32> to vector<8x3xf32>
    %82 = arith.addf %78, %81 : vector<8x3xf32>
    %83 = math.tanh %82 : vector<8x3xf32>
    %cst_63 = arith.constant 2.000000e+00 : f32
    %84 = vector.broadcast %cst_63 : f32 to vector<8x3xf32>
    %85 = arith.mulf %84, %83 : vector<8x3xf32>
    %86 = tpu.transpose %85, [1, 0] : vector<8x3xf32> -> vector<3x8xf32>
    %c0_64 = arith.constant 0 : index
    %c0_65 = arith.constant 0 : index
    %c0_66 = arith.constant 0 : index
    %87 = vector.load %arg11[%c0_64, %c0_65, %c0_66] : memref<1x3x8xf32, #tpu.memory_space<vmem>>, vector<1x3x8xf32>
    %88 = vector.shape_cast %87 : vector<1x3x8xf32> to vector<3x8xf32>
    %89 = vector.shape_cast %86 : vector<3x8xf32> to vector<1x3x8xf32>
    tpu.vector_store %arg11[%c0_64, %c0_65, %c0_66], %89 {strides = array<i32>} : memref<1x3x8xf32, #tpu.memory_space<vmem>>, vector<1x3x8xf32>,
    return
  }
  func.func @transform_0(%arg0: i32) -> (i32, i32, i32) {
    %c0_i32 = arith.constant 0 : i32
    %c0_i32_0 = arith.constant 0 : i32
    %c0_i32_1 = arith.constant 0 : i32
    return %arg0, %c0_i32, %c0_i32_0 : i32, i32, i32
  }
  func.func @transform_1(%arg0: i32) -> (i32, i32) {
    %c0_i32 = arith.constant 0 : i32
    %c0_i32_0 = arith.constant 0 : i32
    %c0_i32_1 = arith.constant 0 : i32
    return %c0_i32, %c0_i32_0 : i32, i32
  }
  func.func @transform_2(%arg0: i32) -> (i32, i32, i32) {
    %c0_i32 = arith.constant 0 : i32
    %c0_i32_0 = arith.constant 0 : i32
    %c0_i32_1 = arith.constant 0 : i32
    return %arg0, %c0_i32, %c0_i32_0 : i32, i32, i32
  }
  func.func @transform_3(%arg0: i32) -> (i32, i32, i32) {
    %c0_i32 = arith.constant 0 : i32
    %c0_i32_0 = arith.constant 0 : i32
    %c0_i32_1 = arith.constant 0 : i32
    return %arg0, %c0_i32, %c0_i32_0 : i32, i32, i32
  }
  func.func @transform_4(%arg0: i32) -> (i32, i32, i32) {
    %c0_i32 = arith.constant 0 : i32
    %c0_i32_0 = arith.constant 0 : i32
    %c0_i32_1 = arith.constant 0 : i32
    return %arg0, %c0_i32, %c0_i32_0 : i32, i32, i32
  }
  func.func @transform_5(%arg0: i32) -> (i32, i32, i32) {
    %c0_i32 = arith.constant 0 : i32
    %c0_i32_0 = arith.constant 0 : i32
    %c0_i32_1 = arith.constant 0 : i32
    return %arg0, %c0_i32, %c0_i32_0 : i32, i32, i32
  }
  func.func @transform_6(%arg0: i32) -> (i32, i32, i32, i32) {
    %c0_i32 = arith.constant 0 : i32
    %c0_i32_0 = arith.constant 0 : i32
    %c0_i32_1 = arith.constant 0 : i32
    %c0_i32_2 = arith.constant 0 : i32
    return %arg0, %c0_i32, %c0_i32_0, %c0_i32_1 : i32, i32, i32, i32
  }
  func.func @transform_7(%arg0: i32) -> (i32, i32, i32, i32) {
    %c0_i32 = arith.constant 0 : i32
    %c0_i32_0 = arith.constant 0 : i32
    %c0_i32_1 = arith.constant 0 : i32
    %c0_i32_2 = arith.constant 0 : i32
    return %arg0, %c0_i32, %c0_i32_0, %c0_i32_1 : i32, i32, i32, i32
  }
  func.func @transform_8(%arg0: i32) -> (i32, i32, i32) {
    %c0_i32 = arith.constant 0 : i32
    %c0_i32_0 = arith.constant 0 : i32
    %c0_i32_1 = arith.constant 0 : i32
    return %arg0, %c0_i32, %c0_i32_0 : i32, i32, i32
  }
  func.func @transform_9(%arg0: i32) -> (i32, i32, i32) {
    %c0_i32 = arith.constant 0 : i32
    %c0_i32_0 = arith.constant 0 : i32
    %c0_i32_1 = arith.constant 0 : i32
    return %arg0, %c0_i32, %c0_i32_0 : i32, i32, i32
  }
  func.func @transform_10(%arg0: i32) -> (i32, i32, i32) {
    %c0_i32 = arith.constant 0 : i32
    %c0_i32_0 = arith.constant 0 : i32
    %c0_i32_1 = arith.constant 0 : i32
    return %arg0, %c0_i32, %c0_i32_0 : i32, i32, i32
  }
}

</mosaic_0001>

<llo_original>
// kernel: atlas_decoder_forward.2
$region0: #{atlas_decoder_forward.2}
  #allocation0 [shape = 'u32[]', space=smem, size = 0x4, offset = 0x4, fixed_abs, tag = 'smem constant byte address 0x4 - core index']
  #allocation1 [shape = 'u32[144,128]{1,0:T(1,128)}', space=vmem, size = 0x12000, scoped, tag = 'internal scratch']
  %s0 = inlined_call_operand.vmem [shape: f32[2,4,48], index: 0, kind: input, shape index: {}]
  %s1 = inlined_call_operand.vmem [shape: f32[2,48], index: 1, kind: input, shape index: {}]
  %s2 = inlined_call_operand.vmem [shape: bf16[2,48,48], index: 2, kind: input, shape index: {}]
  %s3 = inlined_call_operand.vmem [shape: f32[2,1,48], index: 3, kind: input, shape index: {}]
  %s4 = inlined_call_operand.vmem [shape: bf16[2,48,32], index: 4, kind: input, shape index: {}]
  %s5 = inlined_call_operand.vmem [shape: f32[2,1,32], index: 5, kind: input, shape index: {}]
  %s6 = inlined_call_operand.vmem [shape: bf16[2,4,32,32], index: 6, kind: input, shape index: {}]
  %s7 = inlined_call_operand.vmem [shape: f32[2,4,1,32], index: 7, kind: input, shape index: {}]
  %s8 = inlined_call_operand.vmem [shape: bf16[2,32,3], index: 8, kind: input, shape index: {}]
  %s9 = inlined_call_operand.vmem [shape: f32[2,1,3], index: 9, kind: input, shape index: {}]
  %s10 = inlined_call_operand.vmem [shape: f32[2,3,8], index: 10, kind: output, shape index: {}]
  %s11 = sld [smem:[#allocation0]]
  $region73: #{atlas_decoder_forward.2} parent=0
    _
  %s13 = ssub.s32 1, %s11
  %s14 = scalar_select 0, %s13, %s11
  loop: start=0, step=1, limit=4
  $region2: #{atlas_decoder_forward.2} parent=0 // loop_pre_header
    _
  $region3: #{atlas_decoder_forward.2} parent=0 // loop_header
    %s16 = sphi 0, %s20
    %p17 = scmp.ge.s32.totalorder %s16, 4
    %s26 = sphi 0, %s28
    %s29 = sphi 0, %s26
    %s30 = sphi 0, %s29
    %s46 = sphi 0, %s30
    %s50 = sphi 0, %s50
    %s52 = sphi 0, %s50
    %s53 = sphi 0, %s52
    %s67 = sphi 0, %s53
    %s73 = sphi 0, %s75
    %s76 = sphi 0, %s73
    %s77 = sphi 0, %s76
    %s93 = sphi 0, %s77
    %s99 = sphi 0, %s101
    %s102 = sphi 0, %s99
    %s103 = sphi 0, %s102
    %s119 = sphi 0, %s103
    %s125 = sphi 0, %s127
    %s128 = sphi 0, %s125
    %s129 = sphi 0, %s128
    %s145 = sphi 0, %s129
    %s151 = sphi 0, %s153
    %s154 = sphi 0, %s151
    %s155 = sphi 0, %s154
    %s171 = sphi 0, %s155
    %s177 = sphi 0, %s179
    %s180 = sphi 0, %s177
    %s181 = sphi 0, %s180
    %s197 = sphi 0, %s181
    %s203 = sphi 0, %s205
    %s206 = sphi 0, %s203
    %s207 = sphi 0, %s206
    %s223 = sphi 0, %s207
    %s229 = sphi 0, %s231
    %s232 = sphi 0, %s229
    %s233 = sphi 0, %s232
    %s249 = sphi 0, %s233
    %s255 = sphi 0, %s257
    %s258 = sphi 0, %s255
    %s259 = sphi 0, %s258
    %s275 = sphi 0, %s259
    %s281 = sphi 0, %s283
    %s284 = sphi 0, %s281
    %s285 = sphi 0, %s284
    %s301 = sphi 0, %s285
  $region4: #{atlas_decoder_forward.2} parent=0 // loop_header_branch
    %19 = sbr.rel (%p17) target = $region8
  $region5: #{atlas_decoder_forward.2} parent=0 // loop_body
    %s21 = ssub.s32 %s16, 1
    %s22 = ssub.s32 %s16, 2
    %s23 = sadd.s32 %s16, 1
    %s24 = ssub.s32 %s16, %s23
    %p25 = scmp.eq.s32.totalorder %s24, 0
    %s27 = sadd.s32 %s26, 1
    %s28 = scalar_select %p25, %s26, %s27
    %p31 = pneg %p25
    %p32 = scmp.eq.s32.totalorder %s16, 1
    %p33 = por %p31, %p32
    %p34 = scmp.ne.s32.totalorder %s26, %s29
    %p35 = scmp.eq.s32.totalorder %s16, 0
    %p36 = por %p34, %p35
    %p37 = scmp.ne.s32.totalorder %s26, %s29
    %p38 = scmp.eq.s32.totalorder %s21, 1
    %p39 = por %p37, %p38
    %p40 = scmp.ne.s32.totalorder %s29, %s30
    %p41 = scmp.eq.s32.totalorder %s21, 0
    %p42 = por %p40, %p41
    %p43 = scmp.ne.s32.totalorder %s29, %s30
    %p44 = scmp.eq.s32.totalorder %s22, 1
    %p45 = por %p43, %p44
    %p47 = scmp.ne.s32.totalorder %s30, %s46
    %p48 = scmp.eq.s32.totalorder %s22, 0
    %p49 = por %p47, %p48
    %s51 = sadd.s32 %s50, 1
    %p54 = scmp.eq.s32.totalorder %s16, 1
    %p55 = scmp.ne.s32.totalorder %s50, %s52
    %p56 = scmp.eq.s32.totalorder %s16, 0
    %p57 = por %p55, %p56
    %p58 = scmp.ne.s32.totalorder %s50, %s52
    %p59 = scmp.eq.s32.totalorder %s21, 1
    %p60 = por %p58, %p59
    %p61 = scmp.ne.s32.totalorder %s52, %s53
    %p62 = scmp.eq.s32.totalorder %s21, 0
    %p63 = por %p61, %p62
    %p64 = scmp.ne.s32.totalorder %s52, %s53
    %p65 = scmp.eq.s32.totalorder %s22, 1
    %p66 = por %p64, %p65
    %p68 = scmp.ne.s32.totalorder %s53, %s67
    %p69 = scmp.eq.s32.totalorder %s22, 0
    %p70 = por %p68, %p69
    %s71 = ssub.s32 %s16, %s23
    %p72 = scmp.eq.s32.totalorder %s71, 0
    %s74 = sadd.s32 %s73, 1
    %s75 = scalar_select %p72, %s73, %s74
    %p78 = pneg %p72
    %p79 = scmp.eq.s32.totalorder %s16, 1
    %p80 = por %p78, %p79
    %p81 = scmp.ne.s32.totalorder %s73, %s76
    %p82 = scmp.eq.s32.totalorder %s16, 0
    %p83 = por %p81, %p82
    %p84 = scmp.ne.s32.totalorder %s73, %s76
    %p85 = scmp.eq.s32.totalorder %s21, 1
    %p86 = por %p84, %p85
    %p87 = scmp.ne.s32.totalorder %s76, %s77
    %p88 = scmp.eq.s32.totalorder %s21, 0
    %p89 = por %p87, %p88
    %p90 = scmp.ne.s32.totalorder %s76, %s77
    %p91 = scmp.eq.s32.totalorder %s22, 1
    %p92 = por %p90, %p91
    %p94 = scmp.ne.s32.totalorder %s77, %s93
    %p95 = scmp.eq.s32.totalorder %s22, 0
    %p96 = por %p94, %p95
    %s97 = ssub.s32 %s16, %s23
    %p98 = scmp.eq.s32.totalorder %s97, 0
    %s100 = sadd.s32 %s99, 1
    %s101 = scalar_select %p98, %s99, %s100
    %p104 = pneg %p98
    %p105 = scmp.eq.s32.totalorder %s16, 1
    %p106 = por %p104, %p105
    %p107 = scmp.ne.s32.totalorder %s99, %s102
    %p108 = scmp.eq.s32.totalorder %s16, 0
    %p109 = por %p107, %p108
    %p110 = scmp.ne.s32.totalorder %s99, %s102
    %p111 = scmp.eq.s32.totalorder %s21, 1
    %p112 = por %p110, %p111
    %p113 = scmp.ne.s32.totalorder %s102, %s103
    %p114 = scmp.eq.s32.totalorder %s21, 0
    %p115 = por %p113, %p114
    %p116 = scmp.ne.s32.totalorder %s102, %s103
    %p117 = scmp.eq.s32.totalorder %s22, 1
    %p118 = por %p116, %p117
    %p120 = scmp.ne.s32.totalorder %s103, %s119
    %p121 = scmp.eq.s32.totalorder %s22, 0
    %p122 = por %p120, %p121
    %s123 = ssub.s32 %s16, %s23
    %p124 = scmp.eq.s32.totalorder %s123, 0
    %s126 = sadd.s32 %s125, 1
    %s127 = scalar_select %p124, %s125, %s126
    %p130 = pneg %p124
    %p131 = scmp.eq.s32.totalorder %s16, 1
    %p132 = por %p130, %p131
    %p133 = scmp.ne.s32.totalorder %s125, %s128
    %p134 = scmp.eq.s32.totalorder %s16, 0
    %p135 = por %p133, %p134
    %p136 = scmp.ne.s32.totalorder %s125, %s128
    %p137 = scmp.eq.s32.totalorder %s21, 1
    %p138 = por %p136, %p137
    %p139 = scmp.ne.s32.totalorder %s128, %s129
    %p140 = scmp.eq.s32.totalorder %s21, 0
    %p141 = por %p139, %p140
    %p142 = scmp.ne.s32.totalorder %s128, %s129
    %p143 = scmp.eq.s32.totalorder %s22, 1
    %p144 = por %p142, %p143
    %p146 = scmp.ne.s32.totalorder %s129, %s145
    %p147 = scmp.eq.s32.totalorder %s22, 0
    %p148 = por %p146, %p147
    %s149 = ssub.s32 %s16, %s23
    %p150 = scmp.eq.s32.totalorder %s149, 0
    %s152 = sadd.s32 %s151, 1
    %s153 = scalar_select %p150, %s151, %s152
    %p156 = pneg %p150
    %p157 = scmp.eq.s32.totalorder %s16, 1
    %p158 = por %p156, %p157
    %p159 = scmp.ne.s32.totalorder %s151, %s154
    %p160 = scmp.eq.s32.totalorder %s16, 0
    %p161 = por %p159, %p160
    %p162 = scmp.ne.s32.totalorder %s151, %s154
    %p163 = scmp.eq.s32.totalorder %s21, 1
    %p164 = por %p162, %p163
    %p165 = scmp.ne.s32.totalorder %s154, %s155
    %p166 = scmp.eq.s32.totalorder %s21, 0
    %p167 = por %p165, %p166
    %p168 = scmp.ne.s32.totalorder %s154, %s155
    %p169 = scmp.eq.s32.totalorder %s22, 1
    %p170 = por %p168, %p169
    %p172 = scmp.ne.s32.totalorder %s155, %s171
    %p173 = scmp.eq.s32.totalorder %s22, 0
    %p174 = por %p172, %p173
    %s175 = ssub.s32 %s16, %s23
    %p176 = scmp.eq.s32.totalorder %s175, 0
    %s178 = sadd.s32 %s177, 1
    %s179 = scalar_select %p176, %s177, %s178
    %p182 = pneg %p176
    %p183 = scmp.eq.s32.totalorder %s16, 1
    %p184 = por %p182, %p183
    %p185 = scmp.ne.s32.totalorder %s177, %s180
    %p186 = scmp.eq.s32.totalorder %s16, 0
    %p187 = por %p185, %p186
    %p188 = scmp.ne.s32.totalorder %s177, %s180
    %p189 = scmp.eq.s32.totalorder %s21, 1
    %p190 = por %p188, %p189
    %p191 = scmp.ne.s32.totalorder %s180, %s181
    %p192 = scmp.eq.s32.totalorder %s21, 0
    %p193 = por %p191, %p192
    %p194 = scmp.ne.s32.totalorder %s180, %s181
    %p195 = scmp.eq.s32.totalorder %s22, 1
    %p196 = por %p194, %p195
    %p198 = scmp.ne.s32.totalorder %s181, %s197
    %p199 = scmp.eq.s32.totalorder %s22, 0
    %p200 = por %p198, %p199
    %s201 = ssub.s32 %s16, %s23
    %p202 = scmp.eq.s32.totalorder %s201, 0
    %s204 = sadd.s32 %s203, 1
    %s205 = scalar_select %p202, %s203, %s204
    %p208 = pneg %p202
    %p209 = scmp.eq.s32.totalorder %s16, 1
    %p210 = por %p208, %p209
    %p211 = scmp.ne.s32.totalorder %s203, %s206
    %p212 = scmp.eq.s32.totalorder %s16, 0
    %p213 = por %p211, %p212
    %p214 = scmp.ne.s32.totalorder %s203, %s206
    %p215 = scmp.eq.s32.totalorder %s21, 1
    %p216 = por %p214, %p215
    %p217 = scmp.ne.s32.totalorder %s206, %s207
    %p218 = scmp.eq.s32.totalorder %s21, 0
    %p219 = por %p217, %p218
    %p220 = scmp.ne.s32.totalorder %s206, %s207
    %p221 = scmp.eq.s32.totalorder %s22, 1
    %p222 = por %p220, %p221
    %p224 = scmp.ne.s32.totalorder %s207, %s223
    %p225 = scmp.eq.s32.totalorder %s22, 0
    %p226 = por %p224, %p225
    %s227 = ssub.s32 %s16, %s23
    %p228 = scmp.eq.s32.totalorder %s227, 0
    %s230 = sadd.s32 %s229, 1
    %s231 = scalar_select %p228, %s229, %s230
    %p234 = pneg %p228
    %p235 = scmp.eq.s32.totalorder %s16, 1
    %p236 = por %p234, %p235
    %p237 = scmp.ne.s32.totalorder %s229, %s232
    %p238 = scmp.eq.s32.totalorder %s16, 0
    %p239 = por %p237, %p238
    %p240 = scmp.ne.s32.totalorder %s229, %s232
    %p241 = scmp.eq.s32.totalorder %s21, 1
    %p242 = por %p240, %p241
    %p243 = scmp.ne.s32.totalorder %s232, %s233
    %p244 = scmp.eq.s32.totalorder %s21, 0
    %p245 = por %p243, %p244
    %p246 = scmp.ne.s32.totalorder %s232, %s233
    %p247 = scmp.eq.s32.totalorder %s22, 1
    %p248 = por %p246, %p247
    %p250 = scmp.ne.s32.totalorder %s233, %s249
    %p251 = scmp.eq.s32.totalorder %s22, 0
    %p252 = por %p250, %p251
    %s253 = ssub.s32 %s16, %s23
    %p254 = scmp.eq.s32.totalorder %s253, 0
    %s256 = sadd.s32 %s255, 1
    %s257 = scalar_select %p254, %s255, %s256
    %p260 = pneg %p254
    %p261 = scmp.eq.s32.totalorder %s16, 1
    %p262 = por %p260, %p261
    %p263 = scmp.ne.s32.totalorder %s255, %s258
    %p264 = scmp.eq.s32.totalorder %s16, 0
    %p265 = por %p263, %p264
    %p266 = scmp.ne.s32.totalorder %s255, %s258
    %p267 = scmp.eq.s32.totalorder %s21, 1
    %p268 = por %p266, %p267
    %p269 = scmp.ne.s32.totalorder %s258, %s259
    %p270 = scmp.eq.s32.totalorder %s21, 0
    %p271 = por %p269, %p270
    %p272 = scmp.ne.s32.totalorder %s258, %s259
    %p273 = scmp.eq.s32.totalorder %s22, 1
    %p274 = por %p272, %p273
    %p276 = scmp.ne.s32.totalorder %s259, %s275
    %p277 = scmp.eq.s32.totalorder %s22, 0
    %p278 = por %p276, %p277
    %s279 = ssub.s32 %s16, %s23
    %p280 = scmp.eq.s32.totalorder %s279, 0
    %s282 = sadd.s32 %s281, 1
    %s283 = scalar_select %p280, %s281, %s282
    %p286 = pneg %p280
    %p287 = scmp.eq.s32.totalorder %s16, 1
    %p288 = por %p286, %p287
    %p289 = scmp.ne.s32.totalorder %s281, %s284
    %p290 = scmp.eq.s32.totalorder %s16, 0
    %p291 = por %p289, %p290
    %p292 = scmp.ne.s32.totalorder %s281, %s284
    %p293 = scmp.eq.s32.totalorder %s21, 1
    %p294 = por %p292, %p293
    %p295 = scmp.ne.s32.totalorder %s284, %s285
    %p296 = scmp.eq.s32.totalorder %s21, 0
    %p297 = por %p295, %p296
    %p298 = scmp.ne.s32.totalorder %s284, %s285
    %p299 = scmp.eq.s32.totalorder %s22, 1
    %p300 = por %p298, %p299
    %p302 = scmp.ne.s32.totalorder %s285, %s301
    %p303 = scmp.eq.s32.totalorder %s22, 0
    %p304 = por %p302, %p303
    %p305 = scmp.le.s32.totalorder 1, %s16
    %p306 = scmp.lt.s32.totalorder %s16, 3
    %p307 = pnand %p305, %p306
    %p308 = pneg %p307
    // Predicated region
    $region9: #{atlas_decoder_forward.2} parent=5 // pred_check
      _
    $region10: #{atlas_decoder_forward.2} parent=5 // pred_check_branch
      %310 = sbr.rel (%p307) target = $region12
    $region11: #{atlas_decoder_forward.2} parent=5 // pred_region
      %s311 = ssub.s32 %s16, 1
      // Predicated region
      $region13: #{atlas_decoder_forward.2} parent=11 // pred_check
        %p312 = pneg %p63
      $region14: #{atlas_decoder_forward.2} parent=11 // pred_check_branch
        %314 = sbr.rel (%p312) target = $region16
      $region15: #{atlas_decoder_forward.2} parent=11 // pred_region
        _
      $region16: #{atlas_decoder_forward.2} parent=11 // pred_fallthru
        _
    $region12: #{atlas_decoder_forward.2} parent=5 // pred_fallthru
      _
    %p315 = scmp.lt.s32.totalorder %s16, 2
    // Predicated region
    $region17: #{atlas_decoder_forward.2} parent=5 // pred_check
      %p316 = pneg %p315
    $region18: #{atlas_decoder_forward.2} parent=5 // pred_check_branch
      %318 = sbr.rel (%p316) target = $region20
    $region19: #{atlas_decoder_forward.2} parent=5 // pred_region
      // Predicated region
      $region21: #{atlas_decoder_forward.2} parent=19 // pred_check
        %p319 = pneg %p36
      $region22: #{atlas_decoder_forward.2} parent=19 // pred_check_branch
        %321 = sbr.rel (%p319) target = $region24
      $region23: #{atlas_decoder_forward.2} parent=19 // pred_region
        %p322 = scmp.lt.s32.totalorder %s16, 1
        %s323 = scalar_select %p322, %s16, 1
        %s324 = smul.addr %s323, 4
        %s325 = scalar_lea.vmem %s0, %s324
      $region24: #{atlas_decoder_forward.2} parent=19 // pred_fallthru
        _
      // Predicated region
      $region25: #{atlas_decoder_forward.2} parent=19 // pred_check
        %p326 = pneg %p83
      $region26: #{atlas_decoder_forward.2} parent=19 // pred_check_branch
        %328 = sbr.rel (%p326) target = $region28
      $region27: #{atlas_decoder_forward.2} parent=19 // pred_region
        %p329 = scmp.lt.s32.totalorder %s16, 1
        %s330 = scalar_select %p329, %s16, 1
        %s331 = smul.addr %s330, 6
        %s332 = smul.addr %s331, 4
        %s333 = scalar_lea.vmem %s2, %s332
      $region28: #{atlas_decoder_forward.2} parent=19 // pred_fallthru
        _
      // Predicated region
      $region29: #{atlas_decoder_forward.2} parent=19 // pred_check
        %p334 = pneg %p109
      $region30: #{atlas_decoder_forward.2} parent=19 // pred_check_branch
        %336 = sbr.rel (%p334) target = $region32
      $region31: #{atlas_decoder_forward.2} parent=19 // pred_region
        %p337 = scmp.lt.s32.totalorder %s16, 1
        %s338 = scalar_select %p337, %s16, 1
        %s339 = scalar_lea.vmem %s3, %s338
      $region32: #{atlas_decoder_forward.2} parent=19 // pred_fallthru
        _
      // Predicated region
      $region33: #{atlas_decoder_forward.2} parent=19 // pred_check
        %p340 = pneg %p135
      $region34: #{atlas_decoder_forward.2} parent=19 // pred_check_branch
        %342 = sbr.rel (%p340) target = $region36
      $region35: #{atlas_decoder_forward.2} parent=19 // pred_region
        %p343 = scmp.lt.s32.totalorder %s16, 1
        %s344 = scalar_select %p343, %s16, 1
        %s345 = smul.addr %s344, 6
        %s346 = smul.addr %s345, 4
        %s347 = scalar_lea.vmem %s4, %s346
      $region36: #{atlas_decoder_forward.2} parent=19 // pred_fallthru
        _
      // Predicated region
      $region37: #{atlas_decoder_forward.2} parent=19 // pred_check
        %p348 = pneg %p161
      $region38: #{atlas_decoder_forward.2} parent=19 // pred_check_branch
        %350 = sbr.rel (%p348) target = $region40
      $region39: #{atlas_decoder_forward.2} parent=19 // pred_region
        %p351 = scmp.lt.s32.totalorder %s16, 1
        %s352 = scalar_select %p351, %s16, 1
        %s353 = scalar_lea.vmem %s5, %s352
      $region40: #{atlas_decoder_forward.2} parent=19 // pred_fallthru
        _
      // Predicated region
      $region41: #{atlas_decoder_forward.2} parent=19 // pred_check
        %p354 = pneg %p187
      $region42: #{atlas_decoder_forward.2} parent=19 // pred_check_branch
        %356 = sbr.rel (%p354) target = $region44
      $region43: #{atlas_decoder_forward.2} parent=19 // pred_region
        %p357 = scmp.lt.s32.totalorder %s16, 1
        %s358 = scalar_select %p357, %s16, 1
        %s359 = smul.addr %s358, 16
        %s360 = smul.addr %s359, 4
        %s361 = scalar_lea.vmem %s6, %s360
      $region44: #{atlas_decoder_forward.2} parent=19 // pred_fallthru
        _
      // Predicated region
      $region45: #{atlas_decoder_forward.2} parent=19 // pred_check
        %p362 = pneg %p213
      $region46: #{atlas_decoder_forward.2} parent=19 // pred_check_branch
        %364 = sbr.rel (%p362) target = $region48
      $region47: #{atlas_decoder_forward.2} parent=19 // pred_region
        %p365 = scmp.lt.s32.totalorder %s16, 1
        %s366 = scalar_select %p365, %s16, 1
        %s367 = smul.addr %s366, 4
        %s368 = scalar_lea.vmem %s7, %s367
      $region48: #{atlas_decoder_forward.2} parent=19 // pred_fallthru
        _
      // Predicated region
      $region49: #{atlas_decoder_forward.2} parent=19 // pred_check
        %p369 = pneg %p239
      $region50: #{atlas_decoder_forward.2} parent=19 // pred_check_branch
        %371 = sbr.rel (%p369) target = $region52
      $region51: #{atlas_decoder_forward.2} parent=19 // pred_region
        %p372 = scmp.lt.s32.totalorder %s16, 1
        %s373 = scalar_select %p372, %s16, 1
        %s374 = smul.addr %s373, 4
        %s375 = smul.addr %s374, 4
        %s376 = scalar_lea.vmem %s8, %s375
      $region52: #{atlas_decoder_forward.2} parent=19 // pred_fallthru
        _
      // Predicated region
      $region53: #{atlas_decoder_forward.2} parent=19 // pred_check
        %p377 = pneg %p265
      $region54: #{atlas_decoder_forward.2} parent=19 // pred_check_branch
        %379 = sbr.rel (%p377) target = $region56
      $region55: #{atlas_decoder_forward.2} parent=19 // pred_region
        %p380 = scmp.lt.s32.totalorder %s16, 1
        %s381 = scalar_select %p380, %s16, 1
        %s382 = scalar_lea.vmem %s9, %s381
      $region56: #{atlas_decoder_forward.2} parent=19 // pred_fallthru
        _
    $region20: #{atlas_decoder_forward.2} parent=5 // pred_fallthru
      _
    %p383 = scmp.le.s32.totalorder 1, %s16
    %p384 = scmp.lt.s32.totalorder %s16, 3
    %p385 = pnand %p383, %p384
    %p386 = pneg %p385
    // Predicated region
    $region57: #{atlas_decoder_forward.2} parent=5 // pred_check
      _
    $region58: #{atlas_decoder_forward.2} parent=5 // pred_check_branch
      %388 = sbr.rel (%p385) target = $region60
    $region59: #{atlas_decoder_forward.2} parent=5 // pred_region
      %s389 = ssub.s32 %s16, 1
      %p390 = scmp.lt.s32.totalorder %s21, 1
      %s391 = scalar_select %p390, %s21, 1
      %s392 = smul.addr %s391, 4
      %s393 = scalar_lea.vmem %s0, %s392
      %p394 = pneg %p42
      %p395 = pneg %p39
      %p396 = pneg %p63
      %p397 = pneg %p60
      %p398 = scmp.lt.s32.totalorder %s21, 1
      %s399 = scalar_select %p398, %s21, 1
      %s400 = smul.addr %s399, 6
      %s401 = smul.addr %s400, 4
      %s402 = scalar_lea.vmem %s2, %s401
      %p403 = pneg %p89
      %p404 = pneg %p86
      %p405 = scmp.lt.s32.totalorder %s21, 1
      %s406 = scalar_select %p405, %s21, 1
      %s407 = scalar_lea.vmem %s3, %s406
      %p408 = pneg %p115
      %p409 = pneg %p112
      %p410 = scmp.lt.s32.totalorder %s21, 1
      %s411 = scalar_select %p410, %s21, 1
      %s412 = smul.addr %s411, 6
      %s413 = smul.addr %s412, 4
      %s414 = scalar_lea.vmem %s4, %s413
      %p415 = pneg %p141
      %p416 = pneg %p138
      %p417 = scmp.lt.s32.totalorder %s21, 1
      %s418 = scalar_select %p417, %s21, 1
      %s419 = scalar_lea.vmem %s5, %s418
      %p420 = pneg %p167
      %p421 = pneg %p164
      %p422 = scmp.lt.s32.totalorder %s21, 1
      %s423 = scalar_select %p422, %s21, 1
      %s424 = smul.addr %s423, 16
      %s425 = smul.addr %s424, 4
      %s426 = scalar_lea.vmem %s6, %s425
      %p427 = pneg %p193
      %p428 = pneg %p190
      %p429 = scmp.lt.s32.totalorder %s21, 1
      %s430 = scalar_select %p429, %s21, 1
      %s431 = smul.addr %s430, 4
      %s432 = scalar_lea.vmem %s7, %s431
      %p433 = pneg %p219
      %p434 = pneg %p216
      %p435 = scmp.lt.s32.totalorder %s21, 1
      %s436 = scalar_select %p435, %s21, 1
      %s437 = smul.addr %s436, 4
      %s438 = smul.addr %s437, 4
      %s439 = scalar_lea.vmem %s8, %s438
      %p440 = pneg %p245
      %p441 = pneg %p242
      %p442 = scmp.lt.s32.totalorder %s21, 1
      %s443 = scalar_select %p442, %s21, 1
      %s444 = scalar_lea.vmem %s9, %s443
      %p445 = pneg %p271
      %p446 = pneg %p268
      %p447 = pneg %p297
      %p448 = pneg %p294
      %p449 = scmp.lt.s32.totalorder %s21, 1
      %s450 = scalar_select %p449, %s21, 1
      %s451 = smul.addr %s450, 4
      %s452 = scalar_lea.vmem %s10, %s451
      %p453 = scmp.lt.s32.totalorder %s21, 1
      %s454 = scalar_select %p453, %s21, 1
      %s455 = smul.addr %s454, 4
      %s456 = scalar_lea.vmem %s0, %s455
      %p457 = scmp.lt.s32.totalorder %s21, 1
      %s458 = scalar_select %p457, %s21, 1
      %s459 = smul.addr %s458, 6
      %s460 = smul.addr %s459, 4
      %s461 = scalar_lea.vmem %s2, %s460
      %p462 = scmp.lt.s32.totalorder %s21, 1
      %s463 = scalar_select %p462, %s21, 1
      %s464 = scalar_lea.vmem %s3, %s463
      %p465 = scmp.lt.s32.totalorder %s21, 1
      %s466 = scalar_select %p465, %s21, 1
      %s467 = smul.addr %s466, 6
      %s468 = smul.addr %s467, 4
      %s469 = scalar_lea.vmem %s4, %s468
      %p470 = scmp.lt.s32.totalorder %s21, 1
      %s471 = scalar_select %p470, %s21, 1
      %s472 = scalar_lea.vmem %s5, %s471
      %p473 = scmp.lt.s32.totalorder %s21, 1
      %s474 = scalar_select %p473, %s21, 1
      %s475 = smul.addr %s474, 16
      %s476 = smul.addr %s475, 4
      %s477 = scalar_lea.vmem %s6, %s476
      %p478 = scmp.lt.s32.totalorder %s21, 1
      %s479 = scalar_select %p478, %s21, 1
      %s480 = smul.addr %s479, 4
      %s481 = scalar_lea.vmem %s7, %s480
      %p482 = scmp.lt.s32.totalorder %s21, 1
      %s483 = scalar_select %p482, %s21, 1
      %s484 = smul.addr %s483, 4
      %s485 = smul.addr %s484, 4
      %s486 = scalar_lea.vmem %s8, %s485
      %p487 = scmp.lt.s32.totalorder %s21, 1
      %s488 = scalar_select %p487, %s21, 1
      %s489 = scalar_lea.vmem %s9, %s488
      %p490 = scmp.lt.s32.totalorder %s21, 1
      %s491 = scalar_select %p490, %s21, 1
      %s492 = smul.addr %s491, 4
      %s493 = scalar_lea.vmem %s10, %s492
      %v495 = vld [vmem:[%s456] sm:$0xf]
      %v496 = vld [vmem:[%s1] sm:$0x3]
      %v497 = vpack.c.bf16 %v496, %v496
      %v498 = vld [vmem:[%s461] sm:$0xf]
      %v499 = vld [vmem:[%s461 + $0x4] sm:$0xf]
      %v500 = vld [vmem:[%s461 + $0x8] sm:$0xf]
      %v501 = vld [vmem:[%s461 + $0xc] sm:$0xf]
      %v502 = vld [vmem:[%s461 + $0x10] sm:$0xf]
      %v503 = vld [vmem:[%s461 + $0x14] sm:$0xf]
      %v504 = vld [vmem:[%s464] sm:$0x1]
      %v506 = vlaneseq
      %v507 = vshrl.u32 %v506, 7
      %v508 = vsub.s32 0, %v507
      %v509 = vrot.slane %v504, %v508
      %v517 = vunpack.c.l.b16 %v498
      %v518 = vunpack.c.l.b16 %v499
      %v519 = vunpack.c.l.b16 %v500
      %v520 = vunpack.c.l.b16 %v501
      %v521 = vunpack.c.l.b16 %v502
      %v522 = vunpack.c.l.b16 %v503
      %v523 = vpack.c.b16 %v518, %v517
      %v524 = vpack.c.b16 %v520, %v519
      %v525 = vpack.c.b16 %v522, %v521
      %vm529 = vcmask 392192
      %v531 = vsel %vm529, %v497, 0
      %533 = vmatprep.subr.bf16.mxu0 0
      %534 = vmatpush1.bf16.msra.mxu0 0
      %535 = vmatprep.subr.bf16.mxu0 0
      %536 = vmatpush1.bf16.msra.mxu0 0
      %537 = vmatprep.subr.bf16.mxu0 0
      %538 = vmatpush1.bf16.msra.mxu0 0
      %539 = vmatprep.subr.bf16.mxu0 0
      %540 = vmatpush1.bf16.msra.mxu0 0
      %541 = vmatprep.subr.bf16.mxu0 0
      %542 = vmatpush1.bf16.msra.mxu0 0
      %543 = vmatprep.subr.bf16.mxu0 0
      %544 = vmatpush1.bf16.msra.mxu0 %v525
      %545 = vmatprep.subr.bf16.mxu0 0
      %546 = vmatpush1.bf16.msra.mxu0 %v524
      %547 = vmatprep.subr.bf16.mxu0 0
      %548 = vmatpush1.bf16.msra.mxu0 %v523
      %549 = vmatprep.subr.bf16.mxu0 0
      %550 = vmatpush2.bf16.msra.mxu0 0
      %551 = vmatprep.subr.bf16.mxu0 0
      %552 = vmatpush2.bf16.msra.mxu0 0
      %553 = vmatprep.subr.bf16.mxu0 0
      %554 = vmatpush2.bf16.msra.mxu0 0
      %555 = vmatprep.subr.bf16.mxu0 0
      %556 = vmatpush2.bf16.msra.mxu0 0
      %557 = vmatprep.subr.bf16.mxu0 0
      %558 = vmatpush2.bf16.msra.mxu0 0
      %559 = vmatprep.subr.bf16.mxu0 0
      %560 = vmatpush2.bf16.msra.mxu0 0
      %561 = vmatprep.subr.bf16.mxu0 0
      %562 = vmatpush2.bf16.msra.mxu0 0
      %563 = vmatprep.subr.bf16.mxu0 0
      %564 = vmatpush2.bf16.msra.mxu0 0
      %565 = vmatprep.mubr.bf16.mxu0 0
      %566 = vmatmul.mubr.bf16.gmra.mxu0 %v531
      %v567 = vpop.f32.mrf.mxu0
      %v568 = vadd.f32 %v509, %v567
      %v569 = vpop.f32.mrf.mxu0
      %v570 = vpop.f32.mrf.mxu0
      %v571 = vpop.f32.mrf.mxu0
      %572 = vdwg.mxu0
      %v575 = vunpack.c.l.s4 1966171168
      %v576 = vunpack.c.0.s8 %v575
      %v577 = vlaneseq
      %v578 = vshrl.u32 %v577, 7
      %v579 = vsub.s32 %v576, %v578
      %v580 = vrot.slane %v568, %v579
      %v581 = vcombine.high %v580, %v580
      %v583 = vunpack.c.l.s4 1966171168
      %v584 = vunpack.c.0.s8 %v583
      %v585 = vlaneseq
      %v586 = vshrl.u32 %v585, 7
      %v587 = vsub.s32 %v584, %v586
      %v588 = vrot.slane %v580, %v587
      %v590 = vunpack.c.l.s4 1966171168
      %v591 = vunpack.c.0.s8 %v590
      %v592 = vlaneseq
      %v593 = vshrl.u32 %v592, 7
      %v594 = vsub.s32 %v591, %v593
      %v595 = vrot.slane %v581, %v594
      %v596 = vlaneseq
      %v597 = vshrl.u32 %v596, 7
      %v598 = vsub.s32 0, %v597
      %v599 = vrot.slane %v588, %v598
      %v600 = vlaneseq
      %v601 = vshrl.u32 %v600, 7
      %v602 = vsub.s32 0, %v601
      %v603 = vrot.slane %v595, %v602
      %v606 = vadd.f32 %v599, %v495
      %v607 = vadd.f32 %v603, %v495
      %v608 = vmul.f32 %v606, 0.01
      %v609 = vmul.f32 %v607, 0.01
      %v610 = vmax.f32 %v606, %v608
      %v611 = vmax.f32 %v607, %v609
      %v614 = vcombine.low %v610, %v611
      %v616 = vpack.c.bf16 %v614, %v614
      %v617 = vld [vmem:[%s469] sm:$0xf]
      %v618 = vld [vmem:[%s469 + $0x4] sm:$0xf]
      %v619 = vld [vmem:[%s469 + $0x8] sm:$0xf]
      %v620 = vld [vmem:[%s469 + $0xc] sm:$0xf]
      %v621 = vld [vmem:[%s469 + $0x10] sm:$0xf]
      %v622 = vld [vmem:[%s469 + $0x14] sm:$0xf]
      %v623 = vld [vmem:[%s472] sm:$0x1]
      %v625 = vlaneseq
      %v626 = vshrl.u32 %v625, 7
      %v627 = vsub.s32 0, %v626
      %v628 = vrot.slane %v623, %v627
      %v636 = vunpack.c.l.b16 %v617
      %v637 = vunpack.c.l.b16 %v618
      %v638 = vunpack.c.l.b16 %v619
      %v639 = vunpack.c.l.b16 %v620
      %v640 = vunpack.c.l.b16 %v621
      %v641 = vunpack.c.l.b16 %v622
      %v642 = vpack.c.b16 %v637, %v636
      %v643 = vpack.c.b16 %v639, %v638
      %v644 = vpack.c.b16 %v641, %v640
      %v649 = vsel %vm529, %v616, 0
      %651 = vmatprep.subr.bf16.mxu0 0
      %652 = vmatpush1.bf16.msra.mxu0 0
      %653 = vmatprep.subr.bf16.mxu0 0
      %654 = vmatpush1.bf16.msra.mxu0 0
      %655 = vmatprep.subr.bf16.mxu0 0
      %656 = vmatpush1.bf16.msra.mxu0 0
      %657 = vmatprep.subr.bf16.mxu0 0
      %658 = vmatpush1.bf16.msra.mxu0 0
      %659 = vmatprep.subr.bf16.mxu0 0
      %660 = vmatpush1.bf16.msra.mxu0 0
      %661 = vmatprep.subr.bf16.mxu0 0
      %662 = vmatpush1.bf16.msra.mxu0 %v644
      %663 = vmatprep.subr.bf16.mxu0 0
      %664 = vmatpush1.bf16.msra.mxu0 %v643
      %665 = vmatprep.subr.bf16.mxu0 0
      %666 = vmatpush1.bf16.msra.mxu0 %v642
      %667 = vmatprep.subr.bf16.mxu0 0
      %668 = vmatpush2.bf16.msra.mxu0 0
      %669 = vmatprep.subr.bf16.mxu0 0
      %670 = vmatpush2.bf16.msra.mxu0 0
      %671 = vmatprep.subr.bf16.mxu0 0
      %672 = vmatpush2.bf16.msra.mxu0 0
      %673 = vmatprep.subr.bf16.mxu0 0
      %674 = vmatpush2.bf16.msra.mxu0 0
      %675 = vmatprep.subr.bf16.mxu0 0
      %676 = vmatpush2.bf16.msra.mxu0 0
      %677 = vmatprep.subr.bf16.mxu0 0
      %678 = vmatpush2.bf16.msra.mxu0 0
      %679 = vmatprep.subr.bf16.mxu0 0
      %680 = vmatpush2.bf16.msra.mxu0 0
      %681 = vmatprep.subr.bf16.mxu0 0
      %682 = vmatpush2.bf16.msra.mxu0 0
      %683 = vmatprep.mubr.bf16.mxu0 0
      %684 = vmatmul.mubr.bf16.gmra.mxu0 %v649
      %v685 = vpop.f32.mrf.mxu0
      %v686 = vadd.f32 %v628, %v685
      %v687 = vpop.f32.mrf.mxu0
      %v688 = vpop.f32.mrf.mxu0
      %v689 = vpop.f32.mrf.mxu0
      %690 = vdwg.mxu0
      %v691 = vmul.f32 %v686, 0.01
      %v692 = vmax.f32 %v686, %v691
      %v693 = vpack.c.bf16 %v692, %v692
      %v694 = vld [vmem:[%s477] sm:$0xf]
      %v695 = vld [vmem:[%s477 + $0x4] sm:$0xf]
      %v696 = vld [vmem:[%s477 + $0x8] sm:$0xf]
      %v697 = vld [vmem:[%s477 + $0xc] sm:$0xf]
      %v698 = vld [vmem:[%s481] sm:$0x1]
      %v700 = vlaneseq
      %v701 = vshrl.u32 %v700, 7
      %v702 = vsub.s32 0, %v701
      %v703 = vrot.slane %v698, %v702
      %v709 = vunpack.c.l.b16 %v694
      %v710 = vunpack.c.l.b16 %v695
      %v711 = vunpack.c.l.b16 %v696
      %v712 = vunpack.c.l.b16 %v697
      %v713 = vpack.c.b16 %v710, %v709
      %v714 = vpack.c.b16 %v712, %v711
      %vm717 = vcmask 261120
      %v719 = vsel %vm717, %v693, 0
      %721 = vmatprep.subr.bf16.mxu0 0
      %722 = vmatpush1.bf16.msra.mxu0 0
      %723 = vmatprep.subr.bf16.mxu0 0
      %724 = vmatpush1.bf16.msra.mxu0 0
      %725 = vmatprep.subr.bf16.mxu0 0
      %726 = vmatpush1.bf16.msra.mxu0 0
      %727 = vmatprep.subr.bf16.mxu0 0
      %728 = vmatpush1.bf16.msra.mxu0 0
      %729 = vmatprep.subr.bf16.mxu0 0
      %730 = vmatpush1.bf16.msra.mxu0 0
      %731 = vmatprep.subr.bf16.mxu0 0
      %732 = vmatpush1.bf16.msra.mxu0 0
      %733 = vmatprep.subr.bf16.mxu0 0
      %734 = vmatpush1.bf16.msra.mxu0 %v714
      %735 = vmatprep.subr.bf16.mxu0 0
      %736 = vmatpush1.bf16.msra.mxu0 %v713
      %737 = vmatprep.subr.bf16.mxu0 0
      %738 = vmatpush2.bf16.msra.mxu0 0
      %739 = vmatprep.subr.bf16.mxu0 0
      %740 = vmatpush2.bf16.msra.mxu0 0
      %741 = vmatprep.subr.bf16.mxu0 0
      %742 = vmatpush2.bf16.msra.mxu0 0
      %743 = vmatprep.subr.bf16.mxu0 0
      %744 = vmatpush2.bf16.msra.mxu0 0
      %745 = vmatprep.subr.bf16.mxu0 0
      %746 = vmatpush2.bf16.msra.mxu0 0
      %747 = vmatprep.subr.bf16.mxu0 0
      %748 = vmatpush2.bf16.msra.mxu0 0
      %749 = vmatprep.subr.bf16.mxu0 0
      %750 = vmatpush2.bf16.msra.mxu0 0
      %751 = vmatprep.subr.bf16.mxu0 0
      %752 = vmatpush2.bf16.msra.mxu0 0
      %753 = vmatprep.mubr.bf16.mxu0 0
      %754 = vmatmul.mubr.bf16.gmra.mxu0 %v719
      %v755 = vpop.f32.mrf.mxu0
      %v756 = vadd.f32 %v703, %v755
      %v757 = vpop.f32.mrf.mxu0
      %v758 = vpop.f32.mrf.mxu0
      %v759 = vpop.f32.mrf.mxu0
      %760 = vdwg.mxu0
      %v761 = vmul.f32 %v756, 0.01
      %v762 = vmax.f32 %v756, %v761
      %v763 = vpack.c.bf16 %v762, %v762
      %s764 = scalar_lea.vmem %s477, 16
      %v765 = vld [vmem:[%s764] sm:$0xf]
      %v766 = vld [vmem:[%s764 + $0x4] sm:$0xf]
      %v767 = vld [vmem:[%s764 + $0x8] sm:$0xf]
      %v768 = vld [vmem:[%s764 + $0xc] sm:$0xf]
      %s769 = scalar_lea.vmem %s481, 1
      %v770 = vld [vmem:[%s769] sm:$0x1]
      %v772 = vlaneseq
      %v773 = vshrl.u32 %v772, 7
      %v774 = vsub.s32 0, %v773
      %v775 = vrot.slane %v770, %v774
      %v781 = vunpack.c.l.b16 %v765
      %v782 = vunpack.c.l.b16 %v766
      %v783 = vunpack.c.l.b16 %v767
      %v784 = vunpack.c.l.b16 %v768
      %v785 = vpack.c.b16 %v782, %v781
      %v786 = vpack.c.b16 %v784, %v783
      %v790 = vsel %vm717, %v763, 0
      %792 = vmatprep.subr.bf16.mxu0 0
      %793 = vmatpush1.bf16.msra.mxu0 0
      %794 = vmatprep.subr.bf16.mxu0 0
      %795 = vmatpush1.bf16.msra.mxu0 0
      %796 = vmatprep.subr.bf16.mxu0 0
      %797 = vmatpush1.bf16.msra.mxu0 0
      %798 = vmatprep.subr.bf16.mxu0 0
      %799 = vmatpush1.bf16.msra.mxu0 0
      %800 = vmatprep.subr.bf16.mxu0 0
      %801 = vmatpush1.bf16.msra.mxu0 0
      %802 = vmatprep.subr.bf16.mxu0 0
      %803 = vmatpush1.bf16.msra.mxu0 0
      %804 = vmatprep.subr.bf16.mxu0 0
      %805 = vmatpush1.bf16.msra.mxu0 %v786
      %806 = vmatprep.subr.bf16.mxu0 0
      %807 = vmatpush1.bf16.msra.mxu0 %v785
      %808 = vmatprep.subr.bf16.mxu0 0
      %809 = vmatpush2.bf16.msra.mxu0 0
      %810 = vmatprep.subr.bf16.mxu0 0
      %811 = vmatpush2.bf16.msra.mxu0 0
      %812 = vmatprep.subr.bf16.mxu0 0
      %813 = vmatpush2.bf16.msra.mxu0 0
      %814 = vmatprep.subr.bf16.mxu0 0
      %815 = vmatpush2.bf16.msra.mxu0 0
      %816 = vmatprep.subr.bf16.mxu0 0
      %817 = vmatpush2.bf16.msra.mxu0 0
      %818 = vmatprep.subr.bf16.mxu0 0
      %819 = vmatpush2.bf16.msra.mxu0 0
      %820 = vmatprep.subr.bf16.mxu0 0
      %821 = vmatpush2.bf16.msra.mxu0 0
      %822 = vmatprep.subr.bf16.mxu0 0
      %823 = vmatpush2.bf16.msra.mxu0 0
      %824 = vmatprep.mubr.bf16.mxu0 0
      %825 = vmatmul.mubr.bf16.gmra.mxu0 %v790
      %v826 = vpop.f32.mrf.mxu0
      %v827 = vadd.f32 %v775, %v826
      %v828 = vpop.f32.mrf.mxu0
      %v829 = vpop.f32.mrf.mxu0
      %v830 = vpop.f32.mrf.mxu0
      %831 = vdwg.mxu0
      %v832 = vmul.f32 %v827, 0.01
      %v833 = vmax.f32 %v827, %v832
      %v834 = vpack.c.bf16 %v833, %v833
      %s835 = scalar_lea.vmem %s477, 32
      %v836 = vld [vmem:[%s835] sm:$0xf]
      %v837 = vld [vmem:[%s835 + $0x4] sm:$0xf]
      %v838 = vld [vmem:[%s835 + $0x8] sm:$0xf]
      %v839 = vld [vmem:[%s835 + $0xc] sm:$0xf]
      %s840 = scalar_lea.vmem %s481, 2
      %v841 = vld [vmem:[%s840] sm:$0x1]
      %v843 = vlaneseq
      %v844 = vshrl.u32 %v843, 7
      %v845 = vsub.s32 0, %v844
      %v846 = vrot.slane %v841, %v845
      %v852 = vunpack.c.l.b16 %v836
      %v853 = vunpack.c.l.b16 %v837
      %v854 = vunpack.c.l.b16 %v838
      %v855 = vunpack.c.l.b16 %v839
      %v856 = vpack.c.b16 %v853, %v852
      %v857 = vpack.c.b16 %v855, %v854
      %v861 = vsel %vm717, %v834, 0
      %863 = vmatprep.subr.bf16.mxu0 0
      %864 = vmatpush1.bf16.msra.mxu0 0
      %865 = vmatprep.subr.bf16.mxu0 0
      %866 = vmatpush1.bf16.msra.mxu0 0
      %867 = vmatprep.subr.bf16.mxu0 0
      %868 = vmatpush1.bf16.msra.mxu0 0
      %869 = vmatprep.subr.bf16.mxu0 0
      %870 = vmatpush1.bf16.msra.mxu0 0
      %871 = vmatprep.subr.bf16.mxu0 0
      %872 = vmatpush1.bf16.msra.mxu0 0
      %873 = vmatprep.subr.bf16.mxu0 0
      %874 = vmatpush1.bf16.msra.mxu0 0
      %875 = vmatprep.subr.bf16.mxu0 0
      %876 = vmatpush1.bf16.msra.mxu0 %v857
      %877 = vmatprep.subr.bf16.mxu0 0
      %878 = vmatpush1.bf16.msra.mxu0 %v856
      %879 = vmatprep.subr.bf16.mxu0 0
      %880 = vmatpush2.bf16.msra.mxu0 0
      %881 = vmatprep.subr.bf16.mxu0 0
      %882 = vmatpush2.bf16.msra.mxu0 0
      %883 = vmatprep.subr.bf16.mxu0 0
      %884 = vmatpush2.bf16.msra.mxu0 0
      %885 = vmatprep.subr.bf16.mxu0 0
      %886 = vmatpush2.bf16.msra.mxu0 0
      %887 = vmatprep.subr.bf16.mxu0 0
      %888 = vmatpush2.bf16.msra.mxu0 0
      %889 = vmatprep.subr.bf16.mxu0 0
      %890 = vmatpush2.bf16.msra.mxu0 0
      %891 = vmatprep.subr.bf16.mxu0 0
      %892 = vmatpush2.bf16.msra.mxu0 0
      %893 = vmatprep.subr.bf16.mxu0 0
      %894 = vmatpush2.bf16.msra.mxu0 0
      %895 = vmatprep.mubr.bf16.mxu0 0
      %896 = vmatmul.mubr.bf16.gmra.mxu0 %v861
      %v897 = vpop.f32.mrf.mxu0
      %v898 = vadd.f32 %v846, %v897
      %v899 = vpop.f32.mrf.mxu0
      %v900 = vpop.f32.mrf.mxu0
      %v901 = vpop.f32.mrf.mxu0
      %902 = vdwg.mxu0
      %v903 = vmul.f32 %v898, 0.01
      %v904 = vmax.f32 %v898, %v903
      %v905 = vpack.c.bf16 %v904, %v904
      %s906 = scalar_lea.vmem %s477, 48
      %v907 = vld [vmem:[%s906] sm:$0xf]
      %v908 = vld [vmem:[%s906 + $0x4] sm:$0xf]
      %v909 = vld [vmem:[%s906 + $0x8] sm:$0xf]
      %v910 = vld [vmem:[%s906 + $0xc] sm:$0xf]
      %s911 = scalar_lea.vmem %s481, 3
      %v912 = vld [vmem:[%s911] sm:$0x1]
      %v914 = vlaneseq
      %v915 = vshrl.u32 %v914, 7
      %v916 = vsub.s32 0, %v915
      %v917 = vrot.slane %v912, %v916
      %v923 = vunpack.c.l.b16 %v907
      %v924 = vunpack.c.l.b16 %v908
      %v925 = vunpack.c.l.b16 %v909
      %v926 = vunpack.c.l.b16 %v910
      %v927 = vpack.c.b16 %v924, %v923
      %v928 = vpack.c.b16 %v926, %v925
      %v932 = vsel %vm717, %v905, 0
      %934 = vmatprep.subr.bf16.mxu0 0
      %935 = vmatpush1.bf16.msra.mxu0 0
      %936 = vmatprep.subr.bf16.mxu0 0
      %937 = vmatpush1.bf16.msra.mxu0 0
      %938 = vmatprep.subr.bf16.mxu0 0
      %939 = vmatpush1.bf16.msra.mxu0 0
      %940 = vmatprep.subr.bf16.mxu0 0
      %941 = vmatpush1.bf16.msra.mxu0 0
      %942 = vmatprep.subr.bf16.mxu0 0
      %943 = vmatpush1.bf16.msra.mxu0 0
      %944 = vmatprep.subr.bf16.mxu0 0
      %945 = vmatpush1.bf16.msra.mxu0 0
      %946 = vmatprep.subr.bf16.mxu0 0
      %947 = vmatpush1.bf16.msra.mxu0 %v928
      %948 = vmatprep.subr.bf16.mxu0 0
      %949 = vmatpush1.bf16.msra.mxu0 %v927
      %950 = vmatprep.subr.bf16.mxu0 0
      %951 = vmatpush2.bf16.msra.mxu0 0
      %952 = vmatprep.subr.bf16.mxu0 0
      %953 = vmatpush2.bf16.msra.mxu0 0
      %954 = vmatprep.subr.bf16.mxu0 0
      %955 = vmatpush2.bf16.msra.mxu0 0
      %956 = vmatprep.subr.bf16.mxu0 0
      %957 = vmatpush2.bf16.msra.mxu0 0
      %958 = vmatprep.subr.bf16.mxu0 0
      %959 = vmatpush2.bf16.msra.mxu0 0
      %960 = vmatprep.subr.bf16.mxu0 0
      %961 = vmatpush2.bf16.msra.mxu0 0
      %962 = vmatprep.subr.bf16.mxu0 0
      %963 = vmatpush2.bf16.msra.mxu0 0
      %964 = vmatprep.subr.bf16.mxu0 0
      %965 = vmatpush2.bf16.msra.mxu0 0
      %966 = vmatprep.mubr.bf16.mxu0 0
      %967 = vmatmul.mubr.bf16.gmra.mxu0 %v932
      %v968 = vpop.f32.mrf.mxu0
      %v969 = vadd.f32 %v917, %v968
      %v970 = vpop.f32.mrf.mxu0
      %v971 = vpop.f32.mrf.mxu0
      %v972 = vpop.f32.mrf.mxu0
      %973 = vdwg.mxu0
      %v974 = vmul.f32 %v969, 0.01
      %v975 = vmax.f32 %v969, %v974
      %v976 = vpack.c.bf16 %v975, %v975
      %v977 = vld [vmem:[%s486] sm:$0xf]
      %v978 = vld [vmem:[%s486 + $0x4] sm:$0xf]
      %v979 = vld [vmem:[%s486 + $0x8] sm:$0xf]
      %v980 = vld [vmem:[%s486 + $0xc] sm:$0xf]
      %v981 = vld [vmem:[%s489] sm:$0x1]
      %v983 = vlaneseq
      %v984 = vshrl.u32 %v983, 7
      %v985 = vsub.s32 0, %v984
      %v986 = vrot.slane %v981, %v985
      %v992 = vunpack.c.l.b16 %v977
      %v993 = vunpack.c.l.b16 %v978
      %v994 = vunpack.c.l.b16 %v979
      %v995 = vunpack.c.l.b16 %v980
      %v996 = vpack.c.b16 %v993, %v992
      %v997 = vpack.c.b16 %v995, %v994
      %v1001 = vsel %vm717, %v976, 0
      %1003 = vmatprep.subr.bf16.mxu0 0
      %1004 = vmatpush1.bf16.msra.mxu0 0
      %1005 = vmatprep.subr.bf16.mxu0 0
      %1006 = vmatpush1.bf16.msra.mxu0 0
      %1007 = vmatprep.subr.bf16.mxu0 0
      %1008 = vmatpush1.bf16.msra.mxu0 0
      %1009 = vmatprep.subr.bf16.mxu0 0
      %1010 = vmatpush1.bf16.msra.mxu0 0
      %1011 = vmatprep.subr.bf16.mxu0 0
      %1012 = vmatpush1.bf16.msra.mxu0 0
      %1013 = vmatprep.subr.bf16.mxu0 0
      %1014 = vmatpush1.bf16.msra.mxu0 0
      %1015 = vmatprep.subr.bf16.mxu0 0
      %1016 = vmatpush1.bf16.msra.mxu0 %v997
      %1017 = vmatprep.subr.bf16.mxu0 0
      %1018 = vmatpush1.bf16.msra.mxu0 %v996
      %1019 = vmatprep.subr.bf16.mxu0 0
      %1020 = vmatpush2.bf16.msra.mxu0 0
      %1021 = vmatprep.subr.bf16.mxu0 0
      %1022 = vmatpush2.bf16.msra.mxu0 0
      %1023 = vmatprep.subr.bf16.mxu0 0
      %1024 = vmatpush2.bf16.msra.mxu0 0
      %1025 = vmatprep.subr.bf16.mxu0 0
      %1026 = vmatpush2.bf16.msra.mxu0 0
      %1027 = vmatprep.subr.bf16.mxu0 0
      %1028 = vmatpush2.bf16.msra.mxu0 0
      %1029 = vmatprep.subr.bf16.mxu0 0
      %1030 = vmatpush2.bf16.msra.mxu0 0
      %1031 = vmatprep.subr.bf16.mxu0 0
      %1032 = vmatpush2.bf16.msra.mxu0 0
      %1033 = vmatprep.subr.bf16.mxu0 0
      %1034 = vmatpush2.bf16.msra.mxu0 0
      %1035 = vmatprep.mubr.bf16.mxu0 0
      %1036 = vmatmul.mubr.bf16.gmra.mxu0 %v1001
      %v1037 = vpop.f32.mrf.mxu0
      %v1038 = vadd.f32 %v986, %v1037
      %v1039 = vpop.f32.mrf.mxu0
      %v1040 = vpop.f32.mrf.mxu0
      %v1041 = vpop.f32.mrf.mxu0
      %1042 = vdwg.mxu0
      %v1043 = vtanh.pop %v1038
      %v1044 = vmul.f32 %v1043, 2.0
      %1045 = vxpose.xlu0.b32.start [1/16] %v1044, 128
      %1046 = vxpose.xlu0.b32.cont [2/16] 0.0, 128
      %1047 = vxpose.xlu0.b32.cont [3/16] 0.0, 128
      %1048 = vxpose.xlu0.b32.cont [4/16] 0.0, 128
      %1049 = vxpose.xlu0.b32.cont [5/16] 0.0, 128
      %1050 = vxpose.xlu0.b32.cont [6/16] 0.0, 128
      %1051 = vxpose.xlu0.b32.cont [7/16] 0.0, 128
      %1052 = vxpose.xlu0.b32.cont [8/16] 0.0, 128
      %1053 = vxpose.xlu0.b32.cont [9/16] 0.0, 128
      %1054 = vxpose.xlu0.b32.cont [10/16] 0.0, 128
      %1055 = vxpose.xlu0.b32.cont [11/16] 0.0, 128
      %1056 = vxpose.xlu0.b32.cont [12/16] 0.0, 128
      %1057 = vxpose.xlu0.b32.cont [13/16] 0.0, 128
      %1058 = vxpose.xlu0.b32.cont [14/16] 0.0, 128
      %1059 = vxpose.xlu0.b32.cont [15/16] 0.0, 128
      %1060 = vxpose.xlu0.b32.end [16/16] 0.0, 128
      %v1061 = vpop.trf.xlu0
      %v1062 = vpop.trf.xlu0
      %v1063 = vpop.trf.xlu0
      %v1064 = vpop.trf.xlu0
      %v1065 = vpop.trf.xlu0
      %v1066 = vpop.trf.xlu0
      %v1067 = vpop.trf.xlu0
      %v1068 = vpop.trf.xlu0
      %v1069 = vpop.trf.xlu0
      %v1070 = vpop.trf.xlu0
      %v1071 = vpop.trf.xlu0
      %v1072 = vpop.trf.xlu0
      %v1073 = vpop.trf.xlu0
      %v1074 = vpop.trf.xlu0
      %v1075 = vpop.trf.xlu0
      %v1076 = vpop.trf.xlu0
      %vm1077 = vcmask 59392
      %1078 = vst.msk [vmem:[%s493] sm:$0x7] %vm1077, %v1061
      %p1079 = scmp.lt.s32.totalorder %s21, 1
      %s1080 = scalar_select %p1079, %s21, 1
      %s1081 = smul.addr %s1080, 4
      %s1082 = scalar_lea.vmem %s10, %s1081
      // Predicated region
      $region61: #{atlas_decoder_forward.2} parent=59 // pred_check
        %p1083 = pneg %p294
      $region62: #{atlas_decoder_forward.2} parent=59 // pred_check_branch
        %1085 = sbr.rel (%p1083) target = $region64
      $region63: #{atlas_decoder_forward.2} parent=59 // pred_region
        _
      $region64: #{atlas_decoder_forward.2} parent=59 // pred_fallthru
        _
    $region60: #{atlas_decoder_forward.2} parent=5 // pred_fallthru
      _
    %p1086 = scmp.le.s32.totalorder 2, %s16
    // Predicated region
    $region65: #{atlas_decoder_forward.2} parent=5 // pred_check
      %p1087 = pneg %p1086
    $region66: #{atlas_decoder_forward.2} parent=5 // pred_check_branch
      %1089 = sbr.rel (%p1087) target = $region68
    $region67: #{atlas_decoder_forward.2} parent=5 // pred_region
      %s1090 = ssub.s32 %s16, 2
      // Predicated region
      $region69: #{atlas_decoder_forward.2} parent=67 // pred_check
        %p1091 = pneg %p300
      $region70: #{atlas_decoder_forward.2} parent=67 // pred_check_branch
        %1093 = sbr.rel (%p1091) target = $region72
      $region71: #{atlas_decoder_forward.2} parent=67 // pred_region
        %p1094 = scmp.lt.s32.totalorder %s22, 1
        %s1095 = scalar_select %p1094, %s22, 1
        %s1096 = smul.addr %s1095, 4
        %s1097 = scalar_lea.vmem %s10, %s1096
      $region72: #{atlas_decoder_forward.2} parent=67 // pred_fallthru
        _
    $region68: #{atlas_decoder_forward.2} parent=5 // pred_fallthru
      _
  $region6: #{atlas_decoder_forward.2} parent=0 // loop_footer
    %s20 = sadd.s32 1, %s16
  $region7: #{atlas_decoder_forward.2} parent=0 // loop_footer_branch
    %15 = sbr.rel target = $region3
  $region8: #{atlas_decoder_forward.2} parent=0 // loop_exit
    _

// kernel: atlas_decoder_forward.3
$region0: #{atlas_decoder_forward.3}
  #allocation0 [shape = 'u32[]', space=smem, size = 0x4, offset = 0x4, fixed_abs, tag = 'smem constant byte address 0x4 - core index']
  #allocation1 [shape = 'u32[144,128]{1,0:T(1,128)}', space=vmem, size = 0x12000, scoped, tag = 'internal scratch']
  %s0 = inlined_call_operand.hbm [shape: f32[2,8,40], index: 0, kind: input, shape index: {}]
  %s1 = inlined_call_operand.vmem [shape: f32[16,40], index: 1, kind: input, shape index: {}]
  %s2 = inlined_call_operand.vmem [shape: bf16[2,40,40], index: 2, kind: input, shape index: {}]
  %s3 = inlined_call_operand.vmem [shape: f32[2,1,40], index: 3, kind: input, shape index: {}]
  %s4 = inlined_call_operand.vmem [shape: bf16[2,40,32], index: 4, kind: input, shape index: {}]
  %s5 = inlined_call_operand.vmem [shape: f32[2,1,32], index: 5, kind: input, shape index: {}]
  %s6 = inlined_call_operand.vmem [shape: bf16[2,4,32,32], index: 6, kind: input, shape index: {}]
  %s7 = inlined_call_operand.vmem [shape: f32[2,4,1,32], index: 7, kind: input, shape index: {}]
  %s8 = inlined_call_operand.vmem [shape: bf16[2,32,3], index: 8, kind: input, shape index: {}]
  %s9 = inlined_call_operand.hbm [shape: f32[2,1,3], index: 9, kind: input, shape index: {}]
  %s10 = inlined_call_operand.vmem [shape: f32[2,3,128], index: 10, kind: output, shape index: {}]
  %s11 = sld [smem:[#allocation0]]
  $region81: #{atlas_decoder_forward.3} parent=0
    _
  %s13 = ssub.s32 1, %s11
  %s14 = scalar_select 0, %s13, %s11
  $region1: #{atlas_decoder_forward.3} parent=0
    #allocation2 [shape = 'u8[8192]{0}', space=vmem, size = 0x2000, scoped, tag = 'input window, operand 0']
    #allocation3 [shape = 's32[2]{0}', space=sflag, size = 0x8, scoped, tag = 'scoped memory for atlas_decoder_forward.3']
    #allocation4 [shape = 'u8[1024]{0}', space=vmem, size = 0x400, scoped, tag = 'input window, operand 9']
    #allocation5 [shape = 's32[2]{0}', space=sflag, size = 0x8, scoped, tag = 'scoped memory for atlas_decoder_forward.3']
    %15 = vsyncpa [#allocation3], 0
    %s16 = scalar_lea.sflag [#allocation3], 1
    %17 = vsyncpa %s16, 0
    %18 = vsyncpa [#allocation5], 0
    %s19 = scalar_lea.sflag [#allocation5], 1
    %20 = vsyncpa %s19, 0
    loop: start=0, step=1, limit=4
    $region2: #{atlas_decoder_forward.3} parent=1 // loop_pre_header
      _
    $region3: #{atlas_decoder_forward.3} parent=1 // loop_header
      %s22 = sphi 0, %s26
      %p23 = scmp.ge.s32.totalorder %s22, 4
      %s32 = sphi 0, %s34
      %s35 = sphi 0, %s32
      %s36 = sphi 0, %s35
      %s52 = sphi 0, %s36
      %s56 = sphi 0, %s56
      %s58 = sphi 0, %s56
      %s59 = sphi 0, %s58
      %s73 = sphi 0, %s59
      %s79 = sphi 0, %s81
      %s82 = sphi 0, %s79
      %s83 = sphi 0, %s82
      %s99 = sphi 0, %s83
      %s105 = sphi 0, %s107
      %s108 = sphi 0, %s105
      %s109 = sphi 0, %s108
      %s125 = sphi 0, %s109
      %s131 = sphi 0, %s133
      %s134 = sphi 0, %s131
      %s135 = sphi 0, %s134
      %s151 = sphi 0, %s135
      %s157 = sphi 0, %s159
      %s160 = sphi 0, %s157
      %s161 = sphi 0, %s160
      %s177 = sphi 0, %s161
      %s183 = sphi 0, %s185
      %s186 = sphi 0, %s183
      %s187 = sphi 0, %s186
      %s203 = sphi 0, %s187
      %s209 = sphi 0, %s211
      %s212 = sphi 0, %s209
      %s213 = sphi 0, %s212
      %s229 = sphi 0, %s213
      %s235 = sphi 0, %s237
      %s238 = sphi 0, %s235
      %s239 = sphi 0, %s238
      %s255 = sphi 0, %s239
      %s261 = sphi 0, %s263
      %s264 = sphi 0, %s261
      %s265 = sphi 0, %s264
      %s281 = sphi 0, %s265
      %s287 = sphi 0, %s289
      %s290 = sphi 0, %s287
      %s291 = sphi 0, %s290
      %s307 = sphi 0, %s291
    $region4: #{atlas_decoder_forward.3} parent=1 // loop_header_branch
      %25 = sbr.rel (%p23) target = $region8
    $region5: #{atlas_decoder_forward.3} parent=1 // loop_body
      %s27 = ssub.s32 %s22, 1
      %s28 = ssub.s32 %s22, 2
      %s29 = sadd.s32 %s22, 1
      %s30 = ssub.s32 %s22, %s29
      %p31 = scmp.eq.s32.totalorder %s30, 0
      %s33 = sadd.s32 %s32, 1
      %s34 = scalar_select %p31, %s32, %s33
      %p37 = pneg %p31
      %p38 = scmp.eq.s32.totalorder %s22, 1
      %p39 = por %p37, %p38
      %p40 = scmp.ne.s32.totalorder %s32, %s35
      %p41 = scmp.eq.s32.totalorder %s22, 0
      %p42 = por %p40, %p41
      %p43 = scmp.ne.s32.totalorder %s32, %s35
      %p44 = scmp.eq.s32.totalorder %s27, 1
      %p45 = por %p43, %p44
      %p46 = scmp.ne.s32.totalorder %s35, %s36
      %p47 = scmp.eq.s32.totalorder %s27, 0
      %p48 = por %p46, %p47
      %p49 = scmp.ne.s32.totalorder %s35, %s36
      %p50 = scmp.eq.s32.totalorder %s28, 1
      %p51 = por %p49, %p50
      %p53 = scmp.ne.s32.totalorder %s36, %s52
      %p54 = scmp.eq.s32.totalorder %s28, 0
      %p55 = por %p53, %p54
      %s57 = sadd.s32 %s56, 1
      %p60 = scmp.eq.s32.totalorder %s22, 1
      %p61 = scmp.ne.s32.totalorder %s56, %s58
      %p62 = scmp.eq.s32.totalorder %s22, 0
      %p63 = por %p61, %p62
      %p64 = scmp.ne.s32.totalorder %s56, %s58
      %p65 = scmp.eq.s32.totalorder %s27, 1
      %p66 = por %p64, %p65
      %p67 = scmp.ne.s32.totalorder %s58, %s59
      %p68 = scmp.eq.s32.totalorder %s27, 0
      %p69 = por %p67, %p68
      %p70 = scmp.ne.s32.totalorder %s58, %s59
      %p71 = scmp.eq.s32.totalorder %s28, 1
      %p72 = por %p70, %p71
      %p74 = scmp.ne.s32.totalorder %s59, %s73
      %p75 = scmp.eq.s32.totalorder %s28, 0
      %p76 = por %p74, %p75
      %s77 = ssub.s32 %s22, %s29
      %p78 = scmp.eq.s32.totalorder %s77, 0
      %s80 = sadd.s32 %s79, 1
      %s81 = scalar_select %p78, %s79, %s80
      %p84 = pneg %p78
      %p85 = scmp.eq.s32.totalorder %s22, 1
      %p86 = por %p84, %p85
      %p87 = scmp.ne.s32.totalorder %s79, %s82
      %p88 = scmp.eq.s32.totalorder %s22, 0
      %p89 = por %p87, %p88
      %p90 = scmp.ne.s32.totalorder %s79, %s82
      %p91 = scmp.eq.s32.totalorder %s27, 1
      %p92 = por %p90, %p91
      %p93 = scmp.ne.s32.totalorder %s82, %s83
      %p94 = scmp.eq.s32.totalorder %s27, 0
      %p95 = por %p93, %p94
      %p96 = scmp.ne.s32.totalorder %s82, %s83
      %p97 = scmp.eq.s32.totalorder %s28, 1
      %p98 = por %p96, %p97
      %p100 = scmp.ne.s32.totalorder %s83, %s99
      %p101 = scmp.eq.s32.totalorder %s28, 0
      %p102 = por %p100, %p101
      %s103 = ssub.s32 %s22, %s29
      %p104 = scmp.eq.s32.totalorder %s103, 0
      %s106 = sadd.s32 %s105, 1
      %s107 = scalar_select %p104, %s105, %s106
      %p110 = pneg %p104
      %p111 = scmp.eq.s32.totalorder %s22, 1
      %p112 = por %p110, %p111
      %p113 = scmp.ne.s32.totalorder %s105, %s108
      %p114 = scmp.eq.s32.totalorder %s22, 0
      %p115 = por %p113, %p114
      %p116 = scmp.ne.s32.totalorder %s105, %s108
      %p117 = scmp.eq.s32.totalorder %s27, 1
      %p118 = por %p116, %p117
      %p119 = scmp.ne.s32.totalorder %s108, %s109
      %p120 = scmp.eq.s32.totalorder %s27, 0
      %p121 = por %p119, %p120
      %p122 = scmp.ne.s32.totalorder %s108, %s109
      %p123 = scmp.eq.s32.totalorder %s28, 1
      %p124 = por %p122, %p123
      %p126 = scmp.ne.s32.totalorder %s109, %s125
      %p127 = scmp.eq.s32.totalorder %s28, 0
      %p128 = por %p126, %p127
      %s129 = ssub.s32 %s22, %s29
      %p130 = scmp.eq.s32.totalorder %s129, 0
      %s132 = sadd.s32 %s131, 1
      %s133 = scalar_select %p130, %s131, %s132
      %p136 = pneg %p130
      %p137 = scmp.eq.s32.totalorder %s22, 1
      %p138 = por %p136, %p137
      %p139 = scmp.ne.s32.totalorder %s131, %s134
      %p140 = scmp.eq.s32.totalorder %s22, 0
      %p141 = por %p139, %p140
      %p142 = scmp.ne.s32.totalorder %s131, %s134
      %p143 = scmp.eq.s32.totalorder %s27, 1
      %p144 = por %p142, %p143
      %p145 = scmp.ne.s32.totalorder %s134, %s135
      %p146 = scmp.eq.s32.totalorder %s27, 0
      %p147 = por %p145, %p146
      %p148 = scmp.ne.s32.totalorder %s134, %s135
      %p149 = scmp.eq.s32.totalorder %s28, 1
      %p150 = por %p148, %p149
      %p152 = scmp.ne.s32.totalorder %s135, %s151
      %p153 = scmp.eq.s32.totalorder %s28, 0
      %p154 = por %p152, %p153
      %s155 = ssub.s32 %s22, %s29
      %p156 = scmp.eq.s32.totalorder %s155, 0
      %s158 = sadd.s32 %s157, 1
      %s159 = scalar_select %p156, %s157, %s158
      %p162 = pneg %p156
      %p163 = scmp.eq.s32.totalorder %s22, 1
      %p164 = por %p162, %p163
      %p165 = scmp.ne.s32.totalorder %s157, %s160
      %p166 = scmp.eq.s32.totalorder %s22, 0
      %p167 = por %p165, %p166
      %p168 = scmp.ne.s32.totalorder %s157, %s160
      %p169 = scmp.eq.s32.totalorder %s27, 1
      %p170 = por %p168, %p169
      %p171 = scmp.ne.s32.totalorder %s160, %s161
      %p172 = scmp.eq.s32.totalorder %s27, 0
      %p173 = por %p171, %p172
      %p174 = scmp.ne.s32.totalorder %s160, %s161
      %p175 = scmp.eq.s32.totalorder %s28, 1
      %p176 = por %p174, %p175
      %p178 = scmp.ne.s32.totalorder %s161, %s177
      %p179 = scmp.eq.s32.totalorder %s28, 0
      %p180 = por %p178, %p179
      %s181 = ssub.s32 %s22, %s29
      %p182 = scmp.eq.s32.totalorder %s181, 0
      %s184 = sadd.s32 %s183, 1
      %s185 = scalar_select %p182, %s183, %s184
      %p188 = pneg %p182
      %p189 = scmp.eq.s32.totalorder %s22, 1
      %p190 = por %p188, %p189
      %p191 = scmp.ne.s32.totalorder %s183, %s186
      %p192 = scmp.eq.s32.totalorder %s22, 0
      %p193 = por %p191, %p192
      %p194 = scmp.ne.s32.totalorder %s183, %s186
      %p195 = scmp.eq.s32.totalorder %s27, 1
      %p196 = por %p194, %p195
      %p197 = scmp.ne.s32.totalorder %s186, %s187
      %p198 = scmp.eq.s32.totalorder %s27, 0
      %p199 = por %p197, %p198
      %p200 = scmp.ne.s32.totalorder %s186, %s187
      %p201 = scmp.eq.s32.totalorder %s28, 1
      %p202 = por %p200, %p201
      %p204 = scmp.ne.s32.totalorder %s187, %s203
      %p205 = scmp.eq.s32.totalorder %s28, 0
      %p206 = por %p204, %p205
      %s207 = ssub.s32 %s22, %s29
      %p208 = scmp.eq.s32.totalorder %s207, 0
      %s210 = sadd.s32 %s209, 1
      %s211 = scalar_select %p208, %s209, %s210
      %p214 = pneg %p208
      %p215 = scmp.eq.s32.totalorder %s22, 1
      %p216 = por %p214, %p215
      %p217 = scmp.ne.s32.totalorder %s209, %s212
      %p218 = scmp.eq.s32.totalorder %s22, 0
      %p219 = por %p217, %p218
      %p220 = scmp.ne.s32.totalorder %s209, %s212
      %p221 = scmp.eq.s32.totalorder %s27, 1
      %p222 = por %p220, %p221
      %p223 = scmp.ne.s32.totalorder %s212, %s213
      %p224 = scmp.eq.s32.totalorder %s27, 0
      %p225 = por %p223, %p224
      %p226 = scmp.ne.s32.totalorder %s212, %s213
      %p227 = scmp.eq.s32.totalorder %s28, 1
      %p228 = por %p226, %p227
      %p230 = scmp.ne.s32.totalorder %s213, %s229
      %p231 = scmp.eq.s32.totalorder %s28, 0
      %p232 = por %p230, %p231
      %s233 = ssub.s32 %s22, %s29
      %p234 = scmp.eq.s32.totalorder %s233, 0
      %s236 = sadd.s32 %s235, 1
      %s237 = scalar_select %p234, %s235, %s236
      %p240 = pneg %p234
      %p241 = scmp.eq.s32.totalorder %s22, 1
      %p242 = por %p240, %p241
      %p243 = scmp.ne.s32.totalorder %s235, %s238
      %p244 = scmp.eq.s32.totalorder %s22, 0
      %p245 = por %p243, %p244
      %p246 = scmp.ne.s32.totalorder %s235, %s238
      %p247 = scmp.eq.s32.totalorder %s27, 1
      %p248 = por %p246, %p247
      %p249 = scmp.ne.s32.totalorder %s238, %s239
      %p250 = scmp.eq.s32.totalorder %s27, 0
      %p251 = por %p249, %p250
      %p252 = scmp.ne.s32.totalorder %s238, %s239
      %p253 = scmp.eq.s32.totalorder %s28, 1
      %p254 = por %p252, %p253
      %p256 = scmp.ne.s32.totalorder %s239, %s255
      %p257 = scmp.eq.s32.totalorder %s28, 0
      %p258 = por %p256, %p257
      %s259 = ssub.s32 %s22, %s29
      %p260 = scmp.eq.s32.totalorder %s259, 0
      %s262 = sadd.s32 %s261, 1
      %s263 = scalar_select %p260, %s261, %s262
      %p266 = pneg %p260
      %p267 = scmp.eq.s32.totalorder %s22, 1
      %p268 = por %p266, %p267
      %p269 = scmp.ne.s32.totalorder %s261, %s264
      %p270 = scmp.eq.s32.totalorder %s22, 0
      %p271 = por %p269, %p270
      %p272 = scmp.ne.s32.totalorder %s261, %s264
      %p273 = scmp.eq.s32.totalorder %s27, 1
      %p274 = por %p272, %p273
      %p275 = scmp.ne.s32.totalorder %s264, %s265
      %p276 = scmp.eq.s32.totalorder %s27, 0
      %p277 = por %p275, %p276
      %p278 = scmp.ne.s32.totalorder %s264, %s265
      %p279 = scmp.eq.s32.totalorder %s28, 1
      %p280 = por %p278, %p279
      %p282 = scmp.ne.s32.totalorder %s265, %s281
      %p283 = scmp.eq.s32.totalorder %s28, 0
      %p284 = por %p282, %p283
      %s285 = ssub.s32 %s22, %s29
      %p286 = scmp.eq.s32.totalorder %s285, 0
      %s288 = sadd.s32 %s287, 1
      %s289 = scalar_select %p286, %s287, %s288
      %p292 = pneg %p286
      %p293 = scmp.eq.s32.totalorder %s22, 1
      %p294 = por %p292, %p293
      %p295 = scmp.ne.s32.totalorder %s287, %s290
      %p296 = scmp.eq.s32.totalorder %s22, 0
      %p297 = por %p295, %p296
      %p298 = scmp.ne.s32.totalorder %s287, %s290
      %p299 = scmp.eq.s32.totalorder %s27, 1
      %p300 = por %p298, %p299
      %p301 = scmp.ne.s32.totalorder %s290, %s291
      %p302 = scmp.eq.s32.totalorder %s27, 0
      %p303 = por %p301, %p302
      %p304 = scmp.ne.s32.totalorder %s290, %s291
      %p305 = scmp.eq.s32.totalorder %s28, 1
      %p306 = por %p304, %p305
      %p308 = scmp.ne.s32.totalorder %s291, %s307
      %p309 = scmp.eq.s32.totalorder %s28, 0
      %p310 = por %p308, %p309
      %p311 = scmp.le.s32.totalorder 1, %s22
      %p312 = scmp.lt.s32.totalorder %s22, 3
      %p313 = pnand %p311, %p312
      %p314 = pneg %p313
      // Predicated region
      $region9: #{atlas_decoder_forward.3} parent=5 // pred_check
        _
      $region10: #{atlas_decoder_forward.3} parent=5 // pred_check_branch
        %316 = sbr.rel (%p313) target = $region12
      $region11: #{atlas_decoder_forward.3} parent=5 // pred_region
        %s317 = ssub.s32 %s22, 1
        // Predicated region
        $region13: #{atlas_decoder_forward.3} parent=11 // pred_check
          %p318 = pneg %p69
        $region14: #{atlas_decoder_forward.3} parent=11 // pred_check_branch
          %320 = sbr.rel (%p318) target = $region16
        $region15: #{atlas_decoder_forward.3} parent=11 // pred_region
          _
        $region16: #{atlas_decoder_forward.3} parent=11 // pred_fallthru
          _
      $region12: #{atlas_decoder_forward.3} parent=5 // pred_fallthru
        _
      %p321 = scmp.lt.s32.totalorder %s22, 2
      // Predicated region
      $region17: #{atlas_decoder_forward.3} parent=5 // pred_check
        %p322 = pneg %p321
      $region18: #{atlas_decoder_forward.3} parent=5 // pred_check_branch
        %324 = sbr.rel (%p322) target = $region20
      $region19: #{atlas_decoder_forward.3} parent=5 // pred_region
        // Predicated region
        $region21: #{atlas_decoder_forward.3} parent=19 // pred_check
          %p325 = pneg %p42
        $region22: #{atlas_decoder_forward.3} parent=19 // pred_check_branch
          %327 = sbr.rel (%p325) target = $region24
        $region23: #{atlas_decoder_forward.3} parent=19 // pred_region
          %s328 = sand.u32 %s32, 1
          %s329 = scalar_lea.sflag [#allocation3], %s328
          %s330 = sand.u32 %s32, 1
          %s331 = smul.addr %s330, 8
          %s332 = scalar_lea.vmem [#allocation2], %s331
          %s334 = ssub.s32 128, 128
          %335 = vsyncadd %s329, %s334
          %s336 = smul.addr %s22, 128
          %s337 = scalar_lea.hbm %s0, %s336
          %s339 = sshll.u32 %s332, 4
          %s340 = int_to_ptr.vmem [resolvable:$true] %s339
          %342 = dma.hbm_to_vmem [thread:$0]  %s337, 128, %s340, %s329
        $region24: #{atlas_decoder_forward.3} parent=19 // pred_fallthru
          _
        // Predicated region
        $region25: #{atlas_decoder_forward.3} parent=19 // pred_check
          %p343 = pneg %p89
        $region26: #{atlas_decoder_forward.3} parent=19 // pred_check_branch
          %345 = sbr.rel (%p343) target = $region28
        $region27: #{atlas_decoder_forward.3} parent=19 // pred_region
          %p346 = scmp.lt.s32.totalorder %s22, 1
          %s347 = scalar_select %p346, %s22, 1
          %s348 = smul.addr %s347, 5
          %s349 = smul.addr %s348, 4
          %s350 = scalar_lea.vmem %s2, %s349
        $region28: #{atlas_decoder_forward.3} parent=19 // pred_fallthru
          _
        // Predicated region
        $region29: #{atlas_decoder_forward.3} parent=19 // pred_check
          %p351 = pneg %p115
        $region30: #{atlas_decoder_forward.3} parent=19 // pred_check_branch
          %353 = sbr.rel (%p351) target = $region32
        $region31: #{atlas_decoder_forward.3} parent=19 // pred_region
          %p354 = scmp.lt.s32.totalorder %s22, 1
          %s355 = scalar_select %p354, %s22, 1
          %s356 = scalar_lea.vmem %s3, %s355
        $region32: #{atlas_decoder_forward.3} parent=19 // pred_fallthru
          _
        // Predicated region
        $region33: #{atlas_decoder_forward.3} parent=19 // pred_check
          %p357 = pneg %p141
        $region34: #{atlas_decoder_forward.3} parent=19 // pred_check_branch
          %359 = sbr.rel (%p357) target = $region36
        $region35: #{atlas_decoder_forward.3} parent=19 // pred_region
          %p360 = scmp.lt.s32.totalorder %s22, 1
          %s361 = scalar_select %p360, %s22, 1
          %s362 = smul.addr %s361, 5
          %s363 = smul.addr %s362, 4
          %s364 = scalar_lea.vmem %s4, %s363
        $region36: #{atlas_decoder_forward.3} parent=19 // pred_fallthru
          _
        // Predicated region
        $region37: #{atlas_decoder_forward.3} parent=19 // pred_check
          %p365 = pneg %p167
        $region38: #{atlas_decoder_forward.3} parent=19 // pred_check_branch
          %367 = sbr.rel (%p365) target = $region40
        $region39: #{atlas_decoder_forward.3} parent=19 // pred_region
          %p368 = scmp.lt.s32.totalorder %s22, 1
          %s369 = scalar_select %p368, %s22, 1
          %s370 = scalar_lea.vmem %s5, %s369
        $region40: #{atlas_decoder_forward.3} parent=19 // pred_fallthru
          _
        // Predicated region
        $region41: #{atlas_decoder_forward.3} parent=19 // pred_check
          %p371 = pneg %p193
        $region42: #{atlas_decoder_forward.3} parent=19 // pred_check_branch
          %373 = sbr.rel (%p371) target = $region44
        $region43: #{atlas_decoder_forward.3} parent=19 // pred_region
          %p374 = scmp.lt.s32.totalorder %s22, 1
          %s375 = scalar_select %p374, %s22, 1
          %s376 = smul.addr %s375, 16
          %s377 = smul.addr %s376, 4
          %s378 = scalar_lea.vmem %s6, %s377
        $region44: #{atlas_decoder_forward.3} parent=19 // pred_fallthru
          _
        // Predicated region
        $region45: #{atlas_decoder_forward.3} parent=19 // pred_check
          %p379 = pneg %p219
        $region46: #{atlas_decoder_forward.3} parent=19 // pred_check_branch
          %381 = sbr.rel (%p379) target = $region48
        $region47: #{atlas_decoder_forward.3} parent=19 // pred_region
          %p382 = scmp.lt.s32.totalorder %s22, 1
          %s383 = scalar_select %p382, %s22, 1
          %s384 = smul.addr %s383, 4
          %s385 = scalar_lea.vmem %s7, %s384
        $region48: #{atlas_decoder_forward.3} parent=19 // pred_fallthru
          _
        // Predicated region
        $region49: #{atlas_decoder_forward.3} parent=19 // pred_check
          %p386 = pneg %p245
        $region50: #{atlas_decoder_forward.3} parent=19 // pred_check_branch
          %388 = sbr.rel (%p386) target = $region52
        $region51: #{atlas_decoder_forward.3} parent=19 // pred_region
          %p389 = scmp.lt.s32.totalorder %s22, 1
          %s390 = scalar_select %p389, %s22, 1
          %s391 = smul.addr %s390, 4
          %s392 = smul.addr %s391, 4
          %s393 = scalar_lea.vmem %s8, %s392
        $region52: #{atlas_decoder_forward.3} parent=19 // pred_fallthru
          _
        // Predicated region
        $region53: #{atlas_decoder_forward.3} parent=19 // pred_check
          %p394 = pneg %p271
        $region54: #{atlas_decoder_forward.3} parent=19 // pred_check_branch
          %396 = sbr.rel (%p394) target = $region56
        $region55: #{atlas_decoder_forward.3} parent=19 // pred_region
          %s397 = sand.u32 %s261, 1
          %s398 = scalar_lea.sflag [#allocation5], %s397
          %s399 = sand.u32 %s261, 1
          %s400 = scalar_lea.vmem [#allocation4], %s399
          %s402 = ssub.s32 16, 16
          %403 = vsyncadd %s398, %s402
          %s404 = smul.addr %s22, 16
          %s405 = scalar_lea.hbm %s9, %s404
          %s407 = sshll.u32 %s400, 4
          %s408 = int_to_ptr.vmem [resolvable:$true] %s407
          %410 = dma.hbm_to_vmem [thread:$0]  %s405, 16, %s408, %s398
        $region56: #{atlas_decoder_forward.3} parent=19 // pred_fallthru
          _
      $region20: #{atlas_decoder_forward.3} parent=5 // pred_fallthru
        _
      %p411 = scmp.le.s32.totalorder 1, %s22
      %p412 = scmp.lt.s32.totalorder %s22, 3
      %p413 = pnand %p411, %p412
      %p414 = pneg %p413
      // Predicated region
      $region57: #{atlas_decoder_forward.3} parent=5 // pred_check
        _
      $region58: #{atlas_decoder_forward.3} parent=5 // pred_check_branch
        %416 = sbr.rel (%p413) target = $region60
      $region59: #{atlas_decoder_forward.3} parent=5 // pred_region
        %s417 = ssub.s32 %s22, 1
        %s418 = sand.u32 %s35, 1
        %s419 = scalar_lea.sflag [#allocation3], %s418
        %s420 = sand.u32 %s35, 1
        %s421 = smul.addr %s420, 8
        %s422 = scalar_lea.vmem [#allocation2], %s421
        // Predicated region
        $region61: #{atlas_decoder_forward.3} parent=59 // pred_check
          %p423 = pneg %p48
        $region62: #{atlas_decoder_forward.3} parent=59 // pred_check_branch
          %425 = sbr.rel (%p423) target = $region64
        $region63: #{atlas_decoder_forward.3} parent=59 // pred_region
          %426 = dma.done %s419, 128
        $region64: #{atlas_decoder_forward.3} parent=59 // pred_fallthru
          _
        %s427 = sand.u32 %s264, 1
        %s428 = scalar_lea.sflag [#allocation5], %s427
        %s429 = sand.u32 %s264, 1
        %s430 = scalar_lea.vmem [#allocation4], %s429
        // Predicated region
        $region65: #{atlas_decoder_forward.3} parent=59 // pred_check
          %p431 = pneg %p277
        $region66: #{atlas_decoder_forward.3} parent=59 // pred_check_branch
          %433 = sbr.rel (%p431) target = $region68
        $region67: #{atlas_decoder_forward.3} parent=59 // pred_region
          %434 = dma.done %s428, 16
        $region68: #{atlas_decoder_forward.3} parent=59 // pred_fallthru
          _
        %s435 = sand.u32 %s35, 1
        %s436 = scalar_lea.sflag [#allocation3], %s435
        %s437 = sand.u32 %s35, 1
        %s438 = smul.addr %s437, 8
        %s439 = scalar_lea.vmem [#allocation2], %s438
        %p440 = pneg %p48
        %p441 = pneg %p45
        %p442 = pneg %p69
        %p443 = pneg %p66
        %p444 = scmp.lt.s32.totalorder %s27, 1
        %s445 = scalar_select %p444, %s27, 1
        %s446 = smul.addr %s445, 5
        %s447 = smul.addr %s446, 4
        %s448 = scalar_lea.vmem %s2, %s447
        %p449 = pneg %p95
        %p450 = pneg %p92
        %p451 = scmp.lt.s32.totalorder %s27, 1
        %s452 = scalar_select %p451, %s27, 1
        %s453 = scalar_lea.vmem %s3, %s452
        %p454 = pneg %p121
        %p455 = pneg %p118
        %p456 = scmp.lt.s32.totalorder %s27, 1
        %s457 = scalar_select %p456, %s27, 1
        %s458 = smul.addr %s457, 5
        %s459 = smul.addr %s458, 4
        %s460 = scalar_lea.vmem %s4, %s459
        %p461 = pneg %p147
        %p462 = pneg %p144
        %p463 = scmp.lt.s32.totalorder %s27, 1
        %s464 = scalar_select %p463, %s27, 1
        %s465 = scalar_lea.vmem %s5, %s464
        %p466 = pneg %p173
        %p467 = pneg %p170
        %p468 = scmp.lt.s32.totalorder %s27, 1
        %s469 = scalar_select %p468, %s27, 1
        %s470 = smul.addr %s469, 16
        %s471 = smul.addr %s470, 4
        %s472 = scalar_lea.vmem %s6, %s471
        %p473 = pneg %p199
        %p474 = pneg %p196
        %p475 = scmp.lt.s32.totalorder %s27, 1
        %s476 = scalar_select %p475, %s27, 1
        %s477 = smul.addr %s476, 4
        %s478 = scalar_lea.vmem %s7, %s477
        %p479 = pneg %p225
        %p480 = pneg %p222
        %p481 = scmp.lt.s32.totalorder %s27, 1
        %s482 = scalar_select %p481, %s27, 1
        %s483 = smul.addr %s482, 4
        %s484 = smul.addr %s483, 4
        %s485 = scalar_lea.vmem %s8, %s484
        %p486 = pneg %p251
        %p487 = pneg %p248
        %s488 = sand.u32 %s264, 1
        %s489 = scalar_lea.sflag [#allocation5], %s488
        %s490 = sand.u32 %s264, 1
        %s491 = scalar_lea.vmem [#allocation4], %s490
        %p492 = pneg %p277
        %p493 = pneg %p274
        %p494 = pneg %p303
        %p495 = pneg %p300
        %p496 = scmp.lt.s32.totalorder %s27, 1
        %s497 = scalar_select %p496, %s27, 1
        %s498 = smul.addr %s497, 4
        %s499 = scalar_lea.vmem %s10, %s498
        %p500 = scmp.lt.s32.totalorder %s27, 1
        %s501 = scalar_select %p500, %s27, 1
        %s502 = smul.addr %s501, 5
        %s503 = smul.addr %s502, 4
        %s504 = scalar_lea.vmem %s2, %s503
        %p505 = scmp.lt.s32.totalorder %s27, 1
        %s506 = scalar_select %p505, %s27, 1
        %s507 = scalar_lea.vmem %s3, %s506
        %p508 = scmp.lt.s32.totalorder %s27, 1
        %s509 = scalar_select %p508, %s27, 1
        %s510 = smul.addr %s509, 5
        %s511 = smul.addr %s510, 4
        %s512 = scalar_lea.vmem %s4, %s511
        %p513 = scmp.lt.s32.totalorder %s27, 1
        %s514 = scalar_select %p513, %s27, 1
        %s515 = scalar_lea.vmem %s5, %s514
        %p516 = scmp.lt.s32.totalorder %s27, 1
        %s517 = scalar_select %p516, %s27, 1
        %s518 = smul.addr %s517, 16
        %s519 = smul.addr %s518, 4
        %s520 = scalar_lea.vmem %s6, %s519
        %p521 = scmp.lt.s32.totalorder %s27, 1
        %s522 = scalar_select %p521, %s27, 1
        %s523 = smul.addr %s522, 4
        %s524 = scalar_lea.vmem %s7, %s523
        %p525 = scmp.lt.s32.totalorder %s27, 1
        %s526 = scalar_select %p525, %s27, 1
        %s527 = smul.addr %s526, 4
        %s528 = smul.addr %s527, 4
        %s529 = scalar_lea.vmem %s8, %s528
        %p530 = scmp.lt.s32.totalorder %s27, 1
        %s531 = scalar_select %p530, %s27, 1
        %s532 = smul.addr %s531, 4
        %s533 = scalar_lea.vmem %s10, %s532
        %v535 = vld [vmem:[%s422] sm:$0xff]
        %v536 = vld [vmem:[%s1] sm:$0xff]
        %v537 = vld [vmem:[%s1 + $0x8] sm:$0xff]
        %v538 = vpack.c.bf16 %v537, %v536
        %v539 = vld [vmem:[%s504] sm:$0xf]
        %v540 = vld [vmem:[%s504 + $0x4] sm:$0xf]
        %v541 = vld [vmem:[%s504 + $0x8] sm:$0xf]
        %v542 = vld [vmem:[%s504 + $0xc] sm:$0xf]
        %v543 = vld [vmem:[%s504 + $0x10] sm:$0xf]
        %v544 = vld [vmem:[%s507] sm:$0x1]
        %v546 = vlaneseq
        %v547 = vshrl.u32 %v546, 7
        %v548 = vsub.s32 0, %v547
        %v549 = vrot.slane %v544, %v548
        %v556 = vunpack.c.l.b16 %v539
        %v557 = vunpack.c.l.b16 %v540
        %v558 = vunpack.c.l.b16 %v541
        %v559 = vunpack.c.l.b16 %v542
        %v560 = vunpack.c.l.b16 %v543
        %v561 = vpack.c.b16 %v557, %v556
        %v562 = vpack.c.b16 %v559, %v558
        %v563 = vpack.c.b16 %v560, %v560
        %vm566 = vcmask 326656
        %v568 = vsel %vm566, %v538, 0
        %vm570 = vcmask 1043456
        %v572 = vsel %vm570, %v563, 0
        %574 = vmatprep.subr.bf16.mxu0 0
        %575 = vmatpush1.bf16.msra.mxu0 0
        %576 = vmatprep.subr.bf16.mxu0 0
        %577 = vmatpush1.bf16.msra.mxu0 0
        %578 = vmatprep.subr.bf16.mxu0 0
        %579 = vmatpush1.bf16.msra.mxu0 0
        %580 = vmatprep.subr.bf16.mxu0 0
        %581 = vmatpush1.bf16.msra.mxu0 0
        %582 = vmatprep.subr.bf16.mxu0 0
        %583 = vmatpush1.bf16.msra.mxu0 0
        %584 = vmatprep.subr.bf16.mxu0 0
        %585 = vmatpush1.bf16.msra.mxu0 %v572
        %586 = vmatprep.subr.bf16.mxu0 0
        %587 = vmatpush1.bf16.msra.mxu0 %v562
        %588 = vmatprep.subr.bf16.mxu0 0
        %589 = vmatpush1.bf16.msra.mxu0 %v561
        %590 = vmatprep.subr.bf16.mxu0 0
        %591 = vmatpush2.bf16.msra.mxu0 0
        %592 = vmatprep.subr.bf16.mxu0 0
        %593 = vmatpush2.bf16.msra.mxu0 0
        %594 = vmatprep.subr.bf16.mxu0 0
        %595 = vmatpush2.bf16.msra.mxu0 0
        %596 = vmatprep.subr.bf16.mxu0 0
        %597 = vmatpush2.bf16.msra.mxu0 0
        %598 = vmatprep.subr.bf16.mxu0 0
        %599 = vmatpush2.bf16.msra.mxu0 0
        %600 = vmatprep.subr.bf16.mxu0 0
        %601 = vmatpush2.bf16.msra.mxu0 0
        %602 = vmatprep.subr.bf16.mxu0 0
        %603 = vmatpush2.bf16.msra.mxu0 0
        %604 = vmatprep.subr.bf16.mxu0 0
        %605 = vmatpush2.bf16.msra.mxu0 0
        %606 = vmatprep.mubr.bf16.mxu0 0
        %607 = vmatmul.mubr.bf16.gmra.mxu0 %v568
        %v608 = vpop.f32.mrf.mxu0
        %v609 = vadd.f32 %v549, %v608
        %v610 = vpop.f32.mrf.mxu0
        %v611 = vpop.f32.mrf.mxu0
        %v612 = vadd.f32 %v549, %v611
        %v613 = vpop.f32.mrf.mxu0
        %614 = vdwg.mxu0
        %v617 = vcombine.high %v609, %v609
        %v619 = vunpack.c.l.s4 1966171168
        %v620 = vunpack.c.0.s8 %v619
        %v621 = vlaneseq
        %v622 = vshrl.u32 %v621, 7
        %v623 = vsub.s32 %v620, %v622
        %v624 = vrot.slane %v609, %v623
        %v626 = vunpack.c.l.s4 1966171168
        %v627 = vunpack.c.0.s8 %v626
        %v628 = vlaneseq
        %v629 = vshrl.u32 %v628, 7
        %v630 = vsub.s32 %v627, %v629
        %v631 = vrot.slane %v617, %v630
        %v632 = vcombine.high %v624, %v624
        %v633 = vcombine.high %v631, %v631
        %v635 = vunpack.c.l.s4 1966171168
        %v636 = vunpack.c.0.s8 %v635
        %v637 = vlaneseq
        %v638 = vshrl.u32 %v637, 7
        %v639 = vsub.s32 %v636, %v638
        %v640 = vrot.slane %v624, %v639
        %v642 = vunpack.c.l.s4 1966171168
        %v643 = vunpack.c.0.s8 %v642
        %v644 = vlaneseq
        %v645 = vshrl.u32 %v644, 7
        %v646 = vsub.s32 %v643, %v645
        %v647 = vrot.slane %v631, %v646
        %v649 = vunpack.c.l.s4 1966171168
        %v650 = vunpack.c.0.s8 %v649
        %v651 = vlaneseq
        %v652 = vshrl.u32 %v651, 7
        %v653 = vsub.s32 %v650, %v652
        %v654 = vrot.slane %v632, %v653
        %v656 = vunpack.c.l.s4 1966171168
        %v657 = vunpack.c.0.s8 %v656
        %v658 = vlaneseq
        %v659 = vshrl.u32 %v658, 7
        %v660 = vsub.s32 %v657, %v659
        %v661 = vrot.slane %v633, %v660
        %v662 = vcombine.high %v640, %v640
        %v663 = vcombine.high %v647, %v647
        %v664 = vcombine.high %v654, %v654
        %v665 = vcombine.high %v661, %v661
        %v666 = vcombine.high %v612, %v612
        %v668 = vunpack.c.l.s4 1966171168
        %v669 = vunpack.c.0.s8 %v668
        %v670 = vlaneseq
        %v671 = vshrl.u32 %v670, 7
        %v672 = vsub.s32 %v669, %v671
        %v673 = vrot.slane %v612, %v672
        %v675 = vunpack.c.l.s4 1966171168
        %v676 = vunpack.c.0.s8 %v675
        %v677 = vlaneseq
        %v678 = vshrl.u32 %v677, 7
        %v679 = vsub.s32 %v676, %v678
        %v680 = vrot.slane %v666, %v679
        %v681 = vcombine.high %v673, %v673
        %v682 = vcombine.high %v680, %v680
        %v684 = vunpack.c.l.s4 1966171168
        %v685 = vunpack.c.0.s8 %v684
        %v686 = vlaneseq
        %v687 = vshrl.u32 %v686, 7
        %v688 = vsub.s32 %v685, %v687
        %v689 = vrot.slane %v673, %v688
        %v691 = vunpack.c.l.s4 1966171168
        %v692 = vunpack.c.0.s8 %v691
        %v693 = vlaneseq
        %v694 = vshrl.u32 %v693, 7
        %v695 = vsub.s32 %v692, %v694
        %v696 = vrot.slane %v680, %v695
        %v698 = vunpack.c.l.s4 1966171168
        %v699 = vunpack.c.0.s8 %v698
        %v700 = vlaneseq
        %v701 = vshrl.u32 %v700, 7
        %v702 = vsub.s32 %v699, %v701
        %v703 = vrot.slane %v681, %v702
        %v705 = vunpack.c.l.s4 1966171168
        %v706 = vunpack.c.0.s8 %v705
        %v707 = vlaneseq
        %v708 = vshrl.u32 %v707, 7
        %v709 = vsub.s32 %v706, %v708
        %v710 = vrot.slane %v682, %v709
        %v711 = vcombine.high %v689, %v689
        %v712 = vcombine.high %v696, %v696
        %v713 = vcombine.high %v703, %v703
        %v714 = vcombine.high %v710, %v710
        %v715 = vlaneseq
        %v716 = vshrl.u32 %v715, 7
        %v717 = vsub.s32 0, %v716
        %v718 = vrot.slane %v640, %v717
        %v719 = vlaneseq
        %v720 = vshrl.u32 %v719, 7
        %v721 = vsub.s32 0, %v720
        %v722 = vrot.slane %v654, %v721
        %v723 = vlaneseq
        %v724 = vshrl.u32 %v723, 7
        %v725 = vsub.s32 0, %v724
        %v726 = vrot.slane %v662, %v725
        %v727 = vlaneseq
        %v728 = vshrl.u32 %v727, 7
        %v729 = vsub.s32 0, %v728
        %v730 = vrot.slane %v664, %v729
        %v731 = vlaneseq
        %v732 = vshrl.u32 %v731, 7
        %v733 = vsub.s32 0, %v732
        %v734 = vrot.slane %v647, %v733
        %v735 = vlaneseq
        %v736 = vshrl.u32 %v735, 7
        %v737 = vsub.s32 0, %v736
        %v738 = vrot.slane %v661, %v737
        %v739 = vlaneseq
        %v740 = vshrl.u32 %v739, 7
        %v741 = vsub.s32 0, %v740
        %v742 = vrot.slane %v663, %v741
        %v743 = vlaneseq
        %v744 = vshrl.u32 %v743, 7
        %v745 = vsub.s32 0, %v744
        %v746 = vrot.slane %v665, %v745
        %v747 = vlaneseq
        %v748 = vshrl.u32 %v747, 7
        %v749 = vsub.s32 0, %v748
        %v750 = vrot.slane %v689, %v749
        %v751 = vlaneseq
        %v752 = vshrl.u32 %v751, 7
        %v753 = vsub.s32 0, %v752
        %v754 = vrot.slane %v703, %v753
        %v755 = vlaneseq
        %v756 = vshrl.u32 %v755, 7
        %v757 = vsub.s32 0, %v756
        %v758 = vrot.slane %v711, %v757
        %v759 = vlaneseq
        %v760 = vshrl.u32 %v759, 7
        %v761 = vsub.s32 0, %v760
        %v762 = vrot.slane %v713, %v761
        %v763 = vlaneseq
        %v764 = vshrl.u32 %v763, 7
        %v765 = vsub.s32 0, %v764
        %v766 = vrot.slane %v696, %v765
        %v767 = vlaneseq
        %v768 = vshrl.u32 %v767, 7
        %v769 = vsub.s32 0, %v768
        %v770 = vrot.slane %v710, %v769
        %v771 = vlaneseq
        %v772 = vshrl.u32 %v771, 7
        %v773 = vsub.s32 0, %v772
        %v774 = vrot.slane %v712, %v773
        %v775 = vlaneseq
        %v776 = vshrl.u32 %v775, 7
        %v777 = vsub.s32 0, %v776
        %v778 = vrot.slane %v714, %v777
        %v795 = vadd.f32 %v718, %v535
        %v796 = vadd.f32 %v722, %v535
        %v797 = vadd.f32 %v726, %v535
        %v798 = vadd.f32 %v730, %v535
        %v799 = vadd.f32 %v734, %v535
        %v800 = vadd.f32 %v738, %v535
        %v801 = vadd.f32 %v742, %v535
        %v802 = vadd.f32 %v746, %v535
        %v803 = vadd.f32 %v750, %v535
        %v804 = vadd.f32 %v754, %v535
        %v805 = vadd.f32 %v758, %v535
        %v806 = vadd.f32 %v762, %v535
        %v807 = vadd.f32 %v766, %v535
        %v808 = vadd.f32 %v770, %v535
        %v809 = vadd.f32 %v774, %v535
        %v810 = vadd.f32 %v778, %v535
        %v811 = vmul.f32 %v795, 0.01
        %v812 = vmul.f32 %v796, 0.01
        %v813 = vmul.f32 %v797, 0.01
        %v814 = vmul.f32 %v798, 0.01
        %v815 = vmul.f32 %v799, 0.01
        %v816 = vmul.f32 %v800, 0.01
        %v817 = vmul.f32 %v801, 0.01
        %v818 = vmul.f32 %v802, 0.01
        %v819 = vmul.f32 %v803, 0.01
        %v820 = vmul.f32 %v804, 0.01
        %v821 = vmul.f32 %v805, 0.01
        %v822 = vmul.f32 %v806, 0.01
        %v823 = vmul.f32 %v807, 0.01
        %v824 = vmul.f32 %v808, 0.01
        %v825 = vmul.f32 %v809, 0.01
        %v826 = vmul.f32 %v810, 0.01
        %v827 = vmax.f32 %v795, %v811
        %v828 = vmax.f32 %v796, %v812
        %v829 = vmax.f32 %v797, %v813
        %v830 = vmax.f32 %v798, %v814
        %v831 = vmax.f32 %v799, %v815
        %v832 = vmax.f32 %v800, %v816
        %v833 = vmax.f32 %v801, %v817
        %v834 = vmax.f32 %v802, %v818
        %v835 = vmax.f32 %v803, %v819
        %v836 = vmax.f32 %v804, %v820
        %v837 = vmax.f32 %v805, %v821
        %v838 = vmax.f32 %v806, %v822
        %v839 = vmax.f32 %v807, %v823
        %v840 = vmax.f32 %v808, %v824
        %v841 = vmax.f32 %v809, %v825
        %v842 = vmax.f32 %v810, %v826
        %v843 = vpack.c.bf16 %v828, %v827
        %v844 = vpack.c.bf16 %v830, %v829
        %v845 = vpack.c.bf16 %v832, %v831
        %v846 = vpack.c.bf16 %v834, %v833
        %v847 = vpack.c.bf16 %v836, %v835
        %v848 = vpack.c.bf16 %v838, %v837
        %v849 = vpack.c.bf16 %v840, %v839
        %v850 = vpack.c.bf16 %v842, %v841
        %v851 = vld [vmem:[%s512] sm:$0xf]
        %v852 = vld [vmem:[%s512 + $0x4] sm:$0xf]
        %v853 = vld [vmem:[%s512 + $0x8] sm:$0xf]
        %v854 = vld [vmem:[%s512 + $0xc] sm:$0xf]
        %v855 = vld [vmem:[%s512 + $0x10] sm:$0xf]
        %v856 = vld [vmem:[%s515] sm:$0x1]
        %v858 = vlaneseq
        %v859 = vshrl.u32 %v858, 7
        %v860 = vsub.s32 0, %v859
        %v861 = vrot.slane %v856, %v860
        %v868 = vunpack.c.l.b16 %v851
        %v869 = vunpack.c.l.b16 %v852
        %v870 = vunpack.c.l.b16 %v853
        %v871 = vunpack.c.l.b16 %v854
        %v872 = vunpack.c.l.b16 %v855
        %v873 = vpack.c.b16 %v869, %v868
        %v874 = vpack.c.b16 %v871, %v870
        %v875 = vpack.c.b16 %v872, %v872
        %v879 = vsel %vm566, %v843, 0
        %v882 = vsel %vm566, %v844, 0
        %v885 = vsel %vm566, %v845, 0
        %v888 = vsel %vm566, %v846, 0
        %v891 = vsel %vm566, %v847, 0
        %v894 = vsel %vm566, %v848, 0
        %v897 = vsel %vm566, %v849, 0
        %v900 = vsel %vm566, %v850, 0
        %v903 = vsel %vm570, %v875, 0
        %905 = vmatprep.subr.bf16.mxu0 0
        %906 = vmatpush1.bf16.msra.mxu0 0
        %907 = vmatprep.subr.bf16.mxu0 0
        %908 = vmatpush1.bf16.msra.mxu0 0
        %909 = vmatprep.subr.bf16.mxu0 0
        %910 = vmatpush1.bf16.msra.mxu0 0
        %911 = vmatprep.subr.bf16.mxu0 0
        %912 = vmatpush1.bf16.msra.mxu0 0
        %913 = vmatprep.subr.bf16.mxu0 0
        %914 = vmatpush1.bf16.msra.mxu0 0
        %915 = vmatprep.subr.bf16.mxu0 0
        %916 = vmatpush1.bf16.msra.mxu0 %v903
        %917 = vmatprep.subr.bf16.mxu0 0
        %918 = vmatpush1.bf16.msra.mxu0 %v874
        %919 = vmatprep.subr.bf16.mxu0 0
        %920 = vmatpush1.bf16.msra.mxu0 %v873
        %921 = vmatprep.subr.bf16.mxu0 0
        %922 = vmatpush2.bf16.msra.mxu0 0
        %923 = vmatprep.subr.bf16.mxu0 0
        %924 = vmatpush2.bf16.msra.mxu0 0
        %925 = vmatprep.subr.bf16.mxu0 0
        %926 = vmatpush2.bf16.msra.mxu0 0
        %927 = vmatprep.subr.bf16.mxu0 0
        %928 = vmatpush2.bf16.msra.mxu0 0
        %929 = vmatprep.subr.bf16.mxu0 0
        %930 = vmatpush2.bf16.msra.mxu0 0
        %931 = vmatprep.subr.bf16.mxu0 0
        %932 = vmatpush2.bf16.msra.mxu0 0
        %933 = vmatprep.subr.bf16.mxu0 0
        %934 = vmatpush2.bf16.msra.mxu0 0
        %935 = vmatprep.subr.bf16.mxu0 0
        %936 = vmatpush2.bf16.msra.mxu0 0
        %937 = vmatprep.mubr.bf16.mxu0 0
        %938 = vmatmul.mubr.bf16.gmra.mxu0 %v879
        %v939 = vpop.f32.mrf.mxu0
        %v940 = vadd.f32 %v861, %v939
        %v941 = vpop.f32.mrf.mxu0
        %v942 = vpop.f32.mrf.mxu0
        %v943 = vadd.f32 %v861, %v942
        %v944 = vpop.f32.mrf.mxu0
        %945 = vmatprep.mubr.bf16.mxu0 0
        %946 = vmatmul.mubr.bf16.gmra.mxu0 %v882
        %v947 = vpop.f32.mrf.mxu0
        %v948 = vadd.f32 %v861, %v947
        %v949 = vpop.f32.mrf.mxu0
        %v950 = vpop.f32.mrf.mxu0
        %v951 = vadd.f32 %v861, %v950
        %v952 = vpop.f32.mrf.mxu0
        %953 = vmatprep.mubr.bf16.mxu0 0
        %954 = vmatmul.mubr.bf16.gmra.mxu0 %v885
        %v955 = vpop.f32.mrf.mxu0
        %v956 = vadd.f32 %v861, %v955
        %v957 = vpop.f32.mrf.mxu0
        %v958 = vpop.f32.mrf.mxu0
        %v959 = vadd.f32 %v861, %v958
        %v960 = vpop.f32.mrf.mxu0
        %961 = vmatprep.mubr.bf16.mxu0 0
        %962 = vmatmul.mubr.bf16.gmra.mxu0 %v888
        %v963 = vpop.f32.mrf.mxu0
        %v964 = vadd.f32 %v861, %v963
        %v965 = vpop.f32.mrf.mxu0
        %v966 = vpop.f32.mrf.mxu0
        %v967 = vadd.f32 %v861, %v966
        %v968 = vpop.f32.mrf.mxu0
        %969 = vmatprep.mubr.bf16.mxu0 0
        %970 = vmatmul.mubr.bf16.gmra.mxu0 %v891
        %v971 = vpop.f32.mrf.mxu0
        %v972 = vadd.f32 %v861, %v971
        %v973 = vpop.f32.mrf.mxu0
        %v974 = vpop.f32.mrf.mxu0
        %v975 = vadd.f32 %v861, %v974
        %v976 = vpop.f32.mrf.mxu0
        %977 = vmatprep.mubr.bf16.mxu0 0
        %978 = vmatmul.mubr.bf16.gmra.mxu0 %v894
        %v979 = vpop.f32.mrf.mxu0
        %v980 = vadd.f32 %v861, %v979
        %v981 = vpop.f32.mrf.mxu0
        %v982 = vpop.f32.mrf.mxu0
        %v983 = vadd.f32 %v861, %v982
        %v984 = vpop.f32.mrf.mxu0
        %985 = vmatprep.mubr.bf16.mxu0 0
        %986 = vmatmul.mubr.bf16.gmra.mxu0 %v897
        %v987 = vpop.f32.mrf.mxu0
        %v988 = vadd.f32 %v861, %v987
        %v989 = vpop.f32.mrf.mxu0
        %v990 = vpop.f32.mrf.mxu0
        %v991 = vadd.f32 %v861, %v990
        %v992 = vpop.f32.mrf.mxu0
        %993 = vmatprep.mubr.bf16.mxu0 0
        %994 = vmatmul.mubr.bf16.gmra.mxu0 %v900
        %v995 = vpop.f32.mrf.mxu0
        %v996 = vadd.f32 %v861, %v995
        %v997 = vpop.f32.mrf.mxu0
        %v998 = vpop.f32.mrf.mxu0
        %v999 = vadd.f32 %v861, %v998
        %v1000 = vpop.f32.mrf.mxu0
        %1001 = vdwg.mxu0
        %v1002 = vmul.f32 %v940, 0.01
        %v1003 = vmul.f32 %v943, 0.01
        %v1004 = vmul.f32 %v948, 0.01
        %v1005 = vmul.f32 %v951, 0.01
        %v1006 = vmul.f32 %v956, 0.01
        %v1007 = vmul.f32 %v959, 0.01
        %v1008 = vmul.f32 %v964, 0.01
        %v1009 = vmul.f32 %v967, 0.01
        %v1010 = vmul.f32 %v972, 0.01
        %v1011 = vmul.f32 %v975, 0.01
        %v1012 = vmul.f32 %v980, 0.01
        %v1013 = vmul.f32 %v983, 0.01
        %v1014 = vmul.f32 %v988, 0.01
        %v1015 = vmul.f32 %v991, 0.01
        %v1016 = vmul.f32 %v996, 0.01
        %v1017 = vmul.f32 %v999, 0.01
        %v1018 = vmax.f32 %v940, %v1002
        %v1019 = vmax.f32 %v943, %v1003
        %v1020 = vmax.f32 %v948, %v1004
        %v1021 = vmax.f32 %v951, %v1005
        %v1022 = vmax.f32 %v956, %v1006
        %v1023 = vmax.f32 %v959, %v1007
        %v1024 = vmax.f32 %v964, %v1008
        %v1025 = vmax.f32 %v967, %v1009
        %v1026 = vmax.f32 %v972, %v1010
        %v1027 = vmax.f32 %v975, %v1011
        %v1028 = vmax.f32 %v980, %v1012
        %v1029 = vmax.f32 %v983, %v1013
        %v1030 = vmax.f32 %v988, %v1014
        %v1031 = vmax.f32 %v991, %v1015
        %v1032 = vmax.f32 %v996, %v1016
        %v1033 = vmax.f32 %v999, %v1017
        %v1034 = vpack.c.bf16 %v1019, %v1018
        %v1035 = vpack.c.bf16 %v1021, %v1020
        %v1036 = vpack.c.bf16 %v1023, %v1022
        %v1037 = vpack.c.bf16 %v1025, %v1024
        %v1038 = vpack.c.bf16 %v1027, %v1026
        %v1039 = vpack.c.bf16 %v1029, %v1028
        %v1040 = vpack.c.bf16 %v1031, %v1030
        %v1041 = vpack.c.bf16 %v1033, %v1032
        %v1042 = vld [vmem:[%s520] sm:$0xf]
        %v1043 = vld [vmem:[%s520 + $0x4] sm:$0xf]
        %v1044 = vld [vmem:[%s520 + $0x8] sm:$0xf]
        %v1045 = vld [vmem:[%s520 + $0xc] sm:$0xf]
        %v1046 = vld [vmem:[%s524] sm:$0x1]
        %v1048 = vlaneseq
        %v1049 = vshrl.u32 %v1048, 7
        %v1050 = vsub.s32 0, %v1049
        %v1051 = vrot.slane %v1046, %v1050
        %v1057 = vunpack.c.l.b16 %v1042
        %v1058 = vunpack.c.l.b16 %v1043
        %v1059 = vunpack.c.l.b16 %v1044
        %v1060 = vunpack.c.l.b16 %v1045
        %v1061 = vpack.c.b16 %v1058, %v1057
        %v1062 = vpack.c.b16 %v1060, %v1059
        %vm1065 = vcmask 261120
        %v1067 = vsel %vm1065, %v1034, 0
        %v1070 = vsel %vm1065, %v1035, 0
        %v1073 = vsel %vm1065, %v1036, 0
        %v1076 = vsel %vm1065, %v1037, 0
        %v1079 = vsel %vm1065, %v1038, 0
        %v1082 = vsel %vm1065, %v1039, 0
        %v1085 = vsel %vm1065, %v1040, 0
        %v1088 = vsel %vm1065, %v1041, 0
        %1090 = vmatprep.subr.bf16.mxu0 0
        %1091 = vmatpush1.bf16.msra.mxu0 0
        %1092 = vmatprep.subr.bf16.mxu0 0
        %1093 = vmatpush1.bf16.msra.mxu0 0
        %1094 = vmatprep.subr.bf16.mxu0 0
        %1095 = vmatpush1.bf16.msra.mxu0 0
        %1096 = vmatprep.subr.bf16.mxu0 0
        %1097 = vmatpush1.bf16.msra.mxu0 0
        %1098 = vmatprep.subr.bf16.mxu0 0
        %1099 = vmatpush1.bf16.msra.mxu0 0
        %1100 = vmatprep.subr.bf16.mxu0 0
        %1101 = vmatpush1.bf16.msra.mxu0 0
        %1102 = vmatprep.subr.bf16.mxu0 0
        %1103 = vmatpush1.bf16.msra.mxu0 %v1062
        %1104 = vmatprep.subr.bf16.mxu0 0
        %1105 = vmatpush1.bf16.msra.mxu0 %v1061
        %1106 = vmatprep.subr.bf16.mxu0 0
        %1107 = vmatpush2.bf16.msra.mxu0 0
        %1108 = vmatprep.subr.bf16.mxu0 0
        %1109 = vmatpush2.bf16.msra.mxu0 0
        %1110 = vmatprep.subr.bf16.mxu0 0
        %1111 = vmatpush2.bf16.msra.mxu0 0
        %1112 = vmatprep.subr.bf16.mxu0 0
        %1113 = vmatpush2.bf16.msra.mxu0 0
        %1114 = vmatprep.subr.bf16.mxu0 0
        %1115 = vmatpush2.bf16.msra.mxu0 0
        %1116 = vmatprep.subr.bf16.mxu0 0
        %1117 = vmatpush2.bf16.msra.mxu0 0
        %1118 = vmatprep.subr.bf16.mxu0 0
        %1119 = vmatpush2.bf16.msra.mxu0 0
        %1120 = vmatprep.subr.bf16.mxu0 0
        %1121 = vmatpush2.bf16.msra.mxu0 0
        %1122 = vmatprep.mubr.bf16.mxu0 0
        %1123 = vmatmul.mubr.bf16.gmra.mxu0 %v1067
        %v1124 = vpop.f32.mrf.mxu0
        %v1125 = vadd.f32 %v1051, %v1124
        %v1126 = vpop.f32.mrf.mxu0
        %v1127 = vpop.f32.mrf.mxu0
        %v1128 = vadd.f32 %v1051, %v1127
        %v1129 = vpop.f32.mrf.mxu0
        %1130 = vmatprep.mubr.bf16.mxu0 0
        %1131 = vmatmul.mubr.bf16.gmra.mxu0 %v1070
        %v1132 = vpop.f32.mrf.mxu0
        %v1133 = vadd.f32 %v1051, %v1132
        %v1134 = vpop.f32.mrf.mxu0
        %v1135 = vpop.f32.mrf.mxu0
        %v1136 = vadd.f32 %v1051, %v1135
        %v1137 = vpop.f32.mrf.mxu0
        %1138 = vmatprep.mubr.bf16.mxu0 0
        %1139 = vmatmul.mubr.bf16.gmra.mxu0 %v1073
        %v1140 = vpop.f32.mrf.mxu0
        %v1141 = vadd.f32 %v1051, %v1140
        %v1142 = vpop.f32.mrf.mxu0
        %v1143 = vpop.f32.mrf.mxu0
        %v1144 = vadd.f32 %v1051, %v1143
        %v1145 = vpop.f32.mrf.mxu0
        %1146 = vmatprep.mubr.bf16.mxu0 0
        %1147 = vmatmul.mubr.bf16.gmra.mxu0 %v1076
        %v1148 = vpop.f32.mrf.mxu0
        %v1149 = vadd.f32 %v1051, %v1148
        %v1150 = vpop.f32.mrf.mxu0
        %v1151 = vpop.f32.mrf.mxu0
        %v1152 = vadd.f32 %v1051, %v1151
        %v1153 = vpop.f32.mrf.mxu0
        %1154 = vmatprep.mubr.bf16.mxu0 0
        %1155 = vmatmul.mubr.bf16.gmra.mxu0 %v1079
        %v1156 = vpop.f32.mrf.mxu0
        %v1157 = vadd.f32 %v1051, %v1156
        %v1158 = vpop.f32.mrf.mxu0
        %v1159 = vpop.f32.mrf.mxu0
        %v1160 = vadd.f32 %v1051, %v1159
        %v1161 = vpop.f32.mrf.mxu0
        %1162 = vmatprep.mubr.bf16.mxu0 0
        %1163 = vmatmul.mubr.bf16.gmra.mxu0 %v1082
        %v1164 = vpop.f32.mrf.mxu0
        %v1165 = vadd.f32 %v1051, %v1164
        %v1166 = vpop.f32.mrf.mxu0
        %v1167 = vpop.f32.mrf.mxu0
        %v1168 = vadd.f32 %v1051, %v1167
        %v1169 = vpop.f32.mrf.mxu0
        %1170 = vmatprep.mubr.bf16.mxu0 0
        %1171 = vmatmul.mubr.bf16.gmra.mxu0 %v1085
        %v1172 = vpop.f32.mrf.mxu0
        %v1173 = vadd.f32 %v1051, %v1172
        %v1174 = vpop.f32.mrf.mxu0
        %v1175 = vpop.f32.mrf.mxu0
        %v1176 = vadd.f32 %v1051, %v1175
        %v1177 = vpop.f32.mrf.mxu0
        %1178 = vmatprep.mubr.bf16.mxu0 0
        %1179 = vmatmul.mubr.bf16.gmra.mxu0 %v1088
        %v1180 = vpop.f32.mrf.mxu0
        %v1181 = vadd.f32 %v1051, %v1180
        %v1182 = vpop.f32.mrf.mxu0
        %v1183 = vpop.f32.mrf.mxu0
        %v1184 = vadd.f32 %v1051, %v1183
        %v1185 = vpop.f32.mrf.mxu0
        %1186 = vdwg.mxu0
        %v1187 = vmul.f32 %v1125, 0.01
        %v1188 = vmul.f32 %v1128, 0.01
        %v1189 = vmul.f32 %v1133, 0.01
        %v1190 = vmul.f32 %v1136, 0.01
        %v1191 = vmul.f32 %v1141, 0.01
        %v1192 = vmul.f32 %v1144, 0.01
        %v1193 = vmul.f32 %v1149, 0.01
        %v1194 = vmul.f32 %v1152, 0.01
        %v1195 = vmul.f32 %v1157, 0.01
        %v1196 = vmul.f32 %v1160, 0.01
        %v1197 = vmul.f32 %v1165, 0.01
        %v1198 = vmul.f32 %v1168, 0.01
        %v1199 = vmul.f32 %v1173, 0.01
        %v1200 = vmul.f32 %v1176, 0.01
        %v1201 = vmul.f32 %v1181, 0.01
        %v1202 = vmul.f32 %v1184, 0.01
        %v1203 = vmax.f32 %v1125, %v1187
        %v1204 = vmax.f32 %v1128, %v1188
        %v1205 = vmax.f32 %v1133, %v1189
        %v1206 = vmax.f32 %v1136, %v1190
        %v1207 = vmax.f32 %v1141, %v1191
        %v1208 = vmax.f32 %v1144, %v1192
        %v1209 = vmax.f32 %v1149, %v1193
        %v1210 = vmax.f32 %v1152, %v1194
        %v1211 = vmax.f32 %v1157, %v1195
        %v1212 = vmax.f32 %v1160, %v1196
        %v1213 = vmax.f32 %v1165, %v1197
        %v1214 = vmax.f32 %v1168, %v1198
        %v1215 = vmax.f32 %v1173, %v1199
        %v1216 = vmax.f32 %v1176, %v1200
        %v1217 = vmax.f32 %v1181, %v1201
        %v1218 = vmax.f32 %v1184, %v1202
        %v1219 = vpack.c.bf16 %v1204, %v1203
        %v1220 = vpack.c.bf16 %v1206, %v1205
        %v1221 = vpack.c.bf16 %v1208, %v1207
        %v1222 = vpack.c.bf16 %v1210, %v1209
        %v1223 = vpack.c.bf16 %v1212, %v1211
        %v1224 = vpack.c.bf16 %v1214, %v1213
        %v1225 = vpack.c.bf16 %v1216, %v1215
        %v1226 = vpack.c.bf16 %v1218, %v1217
        %s1227 = scalar_lea.vmem %s520, 16
        %v1228 = vld [vmem:[%s1227] sm:$0xf]
        %v1229 = vld [vmem:[%s1227 + $0x4] sm:$0xf]
        %v1230 = vld [vmem:[%s1227 + $0x8] sm:$0xf]
        %v1231 = vld [vmem:[%s1227 + $0xc] sm:$0xf]
        %s1232 = scalar_lea.vmem %s524, 1
        %v1233 = vld [vmem:[%s1232] sm:$0x1]
        %v1235 = vlaneseq
        %v1236 = vshrl.u32 %v1235, 7
        %v1237 = vsub.s32 0, %v1236
        %v1238 = vrot.slane %v1233, %v1237
        %v1244 = vunpack.c.l.b16 %v1228
        %v1245 = vunpack.c.l.b16 %v1229
        %v1246 = vunpack.c.l.b16 %v1230
        %v1247 = vunpack.c.l.b16 %v1231
        %v1248 = vpack.c.b16 %v1245, %v1244
        %v1249 = vpack.c.b16 %v1247, %v1246
        %v1253 = vsel %vm1065, %v1219, 0
        %v1256 = vsel %vm1065, %v1220, 0
        %v1259 = vsel %vm1065, %v1221, 0
        %v1262 = vsel %vm1065, %v1222, 0
        %v1265 = vsel %vm1065, %v1223, 0
        %v1268 = vsel %vm1065, %v1224, 0
        %v1271 = vsel %vm1065, %v1225, 0
        %v1274 = vsel %vm1065, %v1226, 0
        %1276 = vmatprep.subr.bf16.mxu0 0
        %1277 = vmatpush1.bf16.msra.mxu0 0
        %1278 = vmatprep.subr.bf16.mxu0 0
        %1279 = vmatpush1.bf16.msra.mxu0 0
        %1280 = vmatprep.subr.bf16.mxu0 0
        %1281 = vmatpush1.bf16.msra.mxu0 0
        %1282 = vmatprep.subr.bf16.mxu0 0
        %1283 = vmatpush1.bf16.msra.mxu0 0
        %1284 = vmatprep.subr.bf16.mxu0 0
        %1285 = vmatpush1.bf16.msra.mxu0 0
        %1286 = vmatprep.subr.bf16.mxu0 0
        %1287 = vmatpush1.bf16.msra.mxu0 0
        %1288 = vmatprep.subr.bf16.mxu0 0
        %1289 = vmatpush1.bf16.msra.mxu0 %v1249
        %1290 = vmatprep.subr.bf16.mxu0 0
        %1291 = vmatpush1.bf16.msra.mxu0 %v1248
        %1292 = vmatprep.subr.bf16.mxu0 0
        %1293 = vmatpush2.bf16.msra.mxu0 0
        %1294 = vmatprep.subr.bf16.mxu0 0
        %1295 = vmatpush2.bf16.msra.mxu0 0
        %1296 = vmatprep.subr.bf16.mxu0 0
        %1297 = vmatpush2.bf16.msra.mxu0 0
        %1298 = vmatprep.subr.bf16.mxu0 0
        %1299 = vmatpush2.bf16.msra.mxu0 0
        %1300 = vmatprep.subr.bf16.mxu0 0
        %1301 = vmatpush2.bf16.msra.mxu0 0
        %1302 = vmatprep.subr.bf16.mxu0 0
        %1303 = vmatpush2.bf16.msra.mxu0 0
        %1304 = vmatprep.subr.bf16.mxu0 0
        %1305 = vmatpush2.bf16.msra.mxu0 0
        %1306 = vmatprep.subr.bf16.mxu0 0
        %1307 = vmatpush2.bf16.msra.mxu0 0
        %1308 = vmatprep.mubr.bf16.mxu0 0
        %1309 = vmatmul.mubr.bf16.gmra.mxu0 %v1253
        %v1310 = vpop.f32.mrf.mxu0
        %v1311 = vadd.f32 %v1238, %v1310
        %v1312 = vpop.f32.mrf.mxu0
        %v1313 = vpop.f32.mrf.mxu0
        %v1314 = vadd.f32 %v1238, %v1313
        %v1315 = vpop.f32.mrf.mxu0
        %1316 = vmatprep.mubr.bf16.mxu0 0
        %1317 = vmatmul.mubr.bf16.gmra.mxu0 %v1256
        %v1318 = vpop.f32.mrf.mxu0
        %v1319 = vadd.f32 %v1238, %v1318
        %v1320 = vpop.f32.mrf.mxu0
        %v1321 = vpop.f32.mrf.mxu0
        %v1322 = vadd.f32 %v1238, %v1321
        %v1323 = vpop.f32.mrf.mxu0
        %1324 = vmatprep.mubr.bf16.mxu0 0
        %1325 = vmatmul.mubr.bf16.gmra.mxu0 %v1259
        %v1326 = vpop.f32.mrf.mxu0
        %v1327 = vadd.f32 %v1238, %v1326
        %v1328 = vpop.f32.mrf.mxu0
        %v1329 = vpop.f32.mrf.mxu0
        %v1330 = vadd.f32 %v1238, %v1329
        %v1331 = vpop.f32.mrf.mxu0
        %1332 = vmatprep.mubr.bf16.mxu0 0
        %1333 = vmatmul.mubr.bf16.gmra.mxu0 %v1262
        %v1334 = vpop.f32.mrf.mxu0
        %v1335 = vadd.f32 %v1238, %v1334
        %v1336 = vpop.f32.mrf.mxu0
        %v1337 = vpop.f32.mrf.mxu0
        %v1338 = vadd.f32 %v1238, %v1337
        %v1339 = vpop.f32.mrf.mxu0
        %1340 = vmatprep.mubr.bf16.mxu0 0
        %1341 = vmatmul.mubr.bf16.gmra.mxu0 %v1265
        %v1342 = vpop.f32.mrf.mxu0
        %v1343 = vadd.f32 %v1238, %v1342
        %v1344 = vpop.f32.mrf.mxu0
        %v1345 = vpop.f32.mrf.mxu0
        %v1346 = vadd.f32 %v1238, %v1345
        %v1347 = vpop.f32.mrf.mxu0
        %1348 = vmatprep.mubr.bf16.mxu0 0
        %1349 = vmatmul.mubr.bf16.gmra.mxu0 %v1268
        %v1350 = vpop.f32.mrf.mxu0
        %v1351 = vadd.f32 %v1238, %v1350
        %v1352 = vpop.f32.mrf.mxu0
        %v1353 = vpop.f32.mrf.mxu0
        %v1354 = vadd.f32 %v1238, %v1353
        %v1355 = vpop.f32.mrf.mxu0
        %1356 = vmatprep.mubr.bf16.mxu0 0
        %1357 = vmatmul.mubr.bf16.gmra.mxu0 %v1271
        %v1358 = vpop.f32.mrf.mxu0
        %v1359 = vadd.f32 %v1238, %v1358
        %v1360 = vpop.f32.mrf.mxu0
        %v1361 = vpop.f32.mrf.mxu0
        %v1362 = vadd.f32 %v1238, %v1361
        %v1363 = vpop.f32.mrf.mxu0
        %1364 = vmatprep.mubr.bf16.mxu0 0
        %1365 = vmatmul.mubr.bf16.gmra.mxu0 %v1274
        %v1366 = vpop.f32.mrf.mxu0
        %v1367 = vadd.f32 %v1238, %v1366
        %v1368 = vpop.f32.mrf.mxu0
        %v1369 = vpop.f32.mrf.mxu0
        %v1370 = vadd.f32 %v1238, %v1369
        %v1371 = vpop.f32.mrf.mxu0
        %1372 = vdwg.mxu0
        %v1373 = vmul.f32 %v1311, 0.01
        %v1374 = vmul.f32 %v1314, 0.01
        %v1375 = vmul.f32 %v1319, 0.01
        %v1376 = vmul.f32 %v1322, 0.01
        %v1377 = vmul.f32 %v1327, 0.01
        %v1378 = vmul.f32 %v1330, 0.01
        %v1379 = vmul.f32 %v1335, 0.01
        %v1380 = vmul.f32 %v1338, 0.01
        %v1381 = vmul.f32 %v1343, 0.01
        %v1382 = vmul.f32 %v1346, 0.01
        %v1383 = vmul.f32 %v1351, 0.01
        %v1384 = vmul.f32 %v1354, 0.01
        %v1385 = vmul.f32 %v1359, 0.01
        %v1386 = vmul.f32 %v1362, 0.01
        %v1387 = vmul.f32 %v1367, 0.01
        %v1388 = vmul.f32 %v1370, 0.01
        %v1389 = vmax.f32 %v1311, %v1373
        %v1390 = vmax.f32 %v1314, %v1374
        %v1391 = vmax.f32 %v1319, %v1375
        %v1392 = vmax.f32 %v1322, %v1376
        %v1393 = vmax.f32 %v1327, %v1377
        %v1394 = vmax.f32 %v1330, %v1378
        %v1395 = vmax.f32 %v1335, %v1379
        %v1396 = vmax.f32 %v1338, %v1380
        %v1397 = vmax.f32 %v1343, %v1381
        %v1398 = vmax.f32 %v1346, %v1382
        %v1399 = vmax.f32 %v1351, %v1383
        %v1400 = vmax.f32 %v1354, %v1384
        %v1401 = vmax.f32 %v1359, %v1385
        %v1402 = vmax.f32 %v1362, %v1386
        %v1403 = vmax.f32 %v1367, %v1387
        %v1404 = vmax.f32 %v1370, %v1388
        %v1405 = vpack.c.bf16 %v1390, %v1389
        %v1406 = vpack.c.bf16 %v1392, %v1391
        %v1407 = vpack.c.bf16 %v1394, %v1393
        %v1408 = vpack.c.bf16 %v1396, %v1395
        %v1409 = vpack.c.bf16 %v1398, %v1397
        %v1410 = vpack.c.bf16 %v1400, %v1399
        %v1411 = vpack.c.bf16 %v1402, %v1401
        %v1412 = vpack.c.bf16 %v1404, %v1403
        %s1413 = scalar_lea.vmem %s520, 32
        %v1414 = vld [vmem:[%s1413] sm:$0xf]
        %v1415 = vld [vmem:[%s1413 + $0x4] sm:$0xf]
        %v1416 = vld [vmem:[%s1413 + $0x8] sm:$0xf]
        %v1417 = vld [vmem:[%s1413 + $0xc] sm:$0xf]
        %s1418 = scalar_lea.vmem %s524, 2
        %v1419 = vld [vmem:[%s1418] sm:$0x1]
        %v1421 = vlaneseq
        %v1422 = vshrl.u32 %v1421, 7
        %v1423 = vsub.s32 0, %v1422
        %v1424 = vrot.slane %v1419, %v1423
        %v1430 = vunpack.c.l.b16 %v1414
        %v1431 = vunpack.c.l.b16 %v1415
        %v1432 = vunpack.c.l.b16 %v1416
        %v1433 = vunpack.c.l.b16 %v1417
        %v1434 = vpack.c.b16 %v1431, %v1430
        %v1435 = vpack.c.b16 %v1433, %v1432
        %v1439 = vsel %vm1065, %v1405, 0
        %v1442 = vsel %vm1065, %v1406, 0
        %v1445 = vsel %vm1065, %v1407, 0
        %v1448 = vsel %vm1065, %v1408, 0
        %v1451 = vsel %vm1065, %v1409, 0
        %v1454 = vsel %vm1065, %v1410, 0
        %v1457 = vsel %vm1065, %v1411, 0
        %v1460 = vsel %vm1065, %v1412, 0
        %1462 = vmatprep.subr.bf16.mxu0 0
        %1463 = vmatpush1.bf16.msra.mxu0 0
        %1464 = vmatprep.subr.bf16.mxu0 0
        %1465 = vmatpush1.bf16.msra.mxu0 0
        %1466 = vmatprep.subr.bf16.mxu0 0
        %1467 = vmatpush1.bf16.msra.mxu0 0
        %1468 = vmatprep.subr.bf16.mxu0 0
        %1469 = vmatpush1.bf16.msra.mxu0 0
        %1470 = vmatprep.subr.bf16.mxu0 0
        %1471 = vmatpush1.bf16.msra.mxu0 0
        %1472 = vmatprep.subr.bf16.mxu0 0
        %1473 = vmatpush1.bf16.msra.mxu0 0
        %1474 = vmatprep.subr.bf16.mxu0 0
        %1475 = vmatpush1.bf16.msra.mxu0 %v1435
        %1476 = vmatprep.subr.bf16.mxu0 0
        %1477 = vmatpush1.bf16.msra.mxu0 %v1434
        %1478 = vmatprep.subr.bf16.mxu0 0
        %1479 = vmatpush2.bf16.msra.mxu0 0
        %1480 = vmatprep.subr.bf16.mxu0 0
        %1481 = vmatpush2.bf16.msra.mxu0 0
        %1482 = vmatprep.subr.bf16.mxu0 0
        %1483 = vmatpush2.bf16.msra.mxu0 0
        %1484 = vmatprep.subr.bf16.mxu0 0
        %1485 = vmatpush2.bf16.msra.mxu0 0
        %1486 = vmatprep.subr.bf16.mxu0 0
        %1487 = vmatpush2.bf16.msra.mxu0 0
        %1488 = vmatprep.subr.bf16.mxu0 0
        %1489 = vmatpush2.bf16.msra.mxu0 0
        %1490 = vmatprep.subr.bf16.mxu0 0
        %1491 = vmatpush2.bf16.msra.mxu0 0
        %1492 = vmatprep.subr.bf16.mxu0 0
        %1493 = vmatpush2.bf16.msra.mxu0 0
        %1494 = vmatprep.mubr.bf16.mxu0 0
        %1495 = vmatmul.mubr.bf16.gmra.mxu0 %v1439
        %v1496 = vpop.f32.mrf.mxu0
        %v1497 = vadd.f32 %v1424, %v1496
        %v1498 = vpop.f32.mrf.mxu0
        %v1499 = vpop.f32.mrf.mxu0
        %v1500 = vadd.f32 %v1424, %v1499
        %v1501 = vpop.f32.mrf.mxu0
        %1502 = vmatprep.mubr.bf16.mxu0 0
        %1503 = vmatmul.mubr.bf16.gmra.mxu0 %v1442
        %v1504 = vpop.f32.mrf.mxu0
        %v1505 = vadd.f32 %v1424, %v1504
        %v1506 = vpop.f32.mrf.mxu0
        %v1507 = vpop.f32.mrf.mxu0
        %v1508 = vadd.f32 %v1424, %v1507
        %v1509 = vpop.f32.mrf.mxu0
        %1510 = vmatprep.mubr.bf16.mxu0 0
        %1511 = vmatmul.mubr.bf16.gmra.mxu0 %v1445
        %v1512 = vpop.f32.mrf.mxu0
        %v1513 = vadd.f32 %v1424, %v1512
        %v1514 = vpop.f32.mrf.mxu0
        %v1515 = vpop.f32.mrf.mxu0
        %v1516 = vadd.f32 %v1424, %v1515
        %v1517 = vpop.f32.mrf.mxu0
        %1518 = vmatprep.mubr.bf16.mxu0 0
        %1519 = vmatmul.mubr.bf16.gmra.mxu0 %v1448
        %v1520 = vpop.f32.mrf.mxu0
        %v1521 = vadd.f32 %v1424, %v1520
        %v1522 = vpop.f32.mrf.mxu0
        %v1523 = vpop.f32.mrf.mxu0
        %v1524 = vadd.f32 %v1424, %v1523
        %v1525 = vpop.f32.mrf.mxu0
        %1526 = vmatprep.mubr.bf16.mxu0 0
        %1527 = vmatmul.mubr.bf16.gmra.mxu0 %v1451
        %v1528 = vpop.f32.mrf.mxu0
        %v1529 = vadd.f32 %v1424, %v1528
        %v1530 = vpop.f32.mrf.mxu0
        %v1531 = vpop.f32.mrf.mxu0
        %v1532 = vadd.f32 %v1424, %v1531
        %v1533 = vpop.f32.mrf.mxu0
        %1534 = vmatprep.mubr.bf16.mxu0 0
        %1535 = vmatmul.mubr.bf16.gmra.mxu0 %v1454
        %v1536 = vpop.f32.mrf.mxu0
        %v1537 = vadd.f32 %v1424, %v1536
        %v1538 = vpop.f32.mrf.mxu0
        %v1539 = vpop.f32.mrf.mxu0
        %v1540 = vadd.f32 %v1424, %v1539
        %v1541 = vpop.f32.mrf.mxu0
        %1542 = vmatprep.mubr.bf16.mxu0 0
        %1543 = vmatmul.mubr.bf16.gmra.mxu0 %v1457
        %v1544 = vpop.f32.mrf.mxu0
        %v1545 = vadd.f32 %v1424, %v1544
        %v1546 = vpop.f32.mrf.mxu0
        %v1547 = vpop.f32.mrf.mxu0
        %v1548 = vadd.f32 %v1424, %v1547
        %v1549 = vpop.f32.mrf.mxu0
        %1550 = vmatprep.mubr.bf16.mxu0 0
        %1551 = vmatmul.mubr.bf16.gmra.mxu0 %v1460
        %v1552 = vpop.f32.mrf.mxu0
        %v1553 = vadd.f32 %v1424, %v1552
        %v1554 = vpop.f32.mrf.mxu0
        %v1555 = vpop.f32.mrf.mxu0
        %v1556 = vadd.f32 %v1424, %v1555
        %v1557 = vpop.f32.mrf.mxu0
        %1558 = vdwg.mxu0
        %v1559 = vmul.f32 %v1497, 0.01
        %v1560 = vmul.f32 %v1500, 0.01
        %v1561 = vmul.f32 %v1505, 0.01
        %v1562 = vmul.f32 %v1508, 0.01
        %v1563 = vmul.f32 %v1513, 0.01
        %v1564 = vmul.f32 %v1516, 0.01
        %v1565 = vmul.f32 %v1521, 0.01
        %v1566 = vmul.f32 %v1524, 0.01
        %v1567 = vmul.f32 %v1529, 0.01
        %v1568 = vmul.f32 %v1532, 0.01
        %v1569 = vmul.f32 %v1537, 0.01
        %v1570 = vmul.f32 %v1540, 0.01
        %v1571 = vmul.f32 %v1545, 0.01
        %v1572 = vmul.f32 %v1548, 0.01
        %v1573 = vmul.f32 %v1553, 0.01
        %v1574 = vmul.f32 %v1556, 0.01
        %v1575 = vmax.f32 %v1497, %v1559
        %v1576 = vmax.f32 %v1500, %v1560
        %v1577 = vmax.f32 %v1505, %v1561
        %v1578 = vmax.f32 %v1508, %v1562
        %v1579 = vmax.f32 %v1513, %v1563
        %v1580 = vmax.f32 %v1516, %v1564
        %v1581 = vmax.f32 %v1521, %v1565
        %v1582 = vmax.f32 %v1524, %v1566
        %v1583 = vmax.f32 %v1529, %v1567
        %v1584 = vmax.f32 %v1532, %v1568
        %v1585 = vmax.f32 %v1537, %v1569
        %v1586 = vmax.f32 %v1540, %v1570
        %v1587 = vmax.f32 %v1545, %v1571
        %v1588 = vmax.f32 %v1548, %v1572
        %v1589 = vmax.f32 %v1553, %v1573
        %v1590 = vmax.f32 %v1556, %v1574
        %v1591 = vpack.c.bf16 %v1576, %v1575
        %v1592 = vpack.c.bf16 %v1578, %v1577
        %v1593 = vpack.c.bf16 %v1580, %v1579
        %v1594 = vpack.c.bf16 %v1582, %v1581
        %v1595 = vpack.c.bf16 %v1584, %v1583
        %v1596 = vpack.c.bf16 %v1586, %v1585
        %v1597 = vpack.c.bf16 %v1588, %v1587
        %v1598 = vpack.c.bf16 %v1590, %v1589
        %s1599 = scalar_lea.vmem %s520, 48
        %v1600 = vld [vmem:[%s1599] sm:$0xf]
        %v1601 = vld [vmem:[%s1599 + $0x4] sm:$0xf]
        %v1602 = vld [vmem:[%s1599 + $0x8] sm:$0xf]
        %v1603 = vld [vmem:[%s1599 + $0xc] sm:$0xf]
        %s1604 = scalar_lea.vmem %s524, 3
        %v1605 = vld [vmem:[%s1604] sm:$0x1]
        %v1607 = vlaneseq
        %v1608 = vshrl.u32 %v1607, 7
        %v1609 = vsub.s32 0, %v1608
        %v1610 = vrot.slane %v1605, %v1609
        %v1616 = vunpack.c.l.b16 %v1600
        %v1617 = vunpack.c.l.b16 %v1601
        %v1618 = vunpack.c.l.b16 %v1602
        %v1619 = vunpack.c.l.b16 %v1603
        %v1620 = vpack.c.b16 %v1617, %v1616
        %v1621 = vpack.c.b16 %v1619, %v1618
        %v1625 = vsel %vm1065, %v1591, 0
        %v1628 = vsel %vm1065, %v1592, 0
        %v1631 = vsel %vm1065, %v1593, 0
        %v1634 = vsel %vm1065, %v1594, 0
        %v1637 = vsel %vm1065, %v1595, 0
        %v1640 = vsel %vm1065, %v1596, 0
        %v1643 = vsel %vm1065, %v1597, 0
        %v1646 = vsel %vm1065, %v1598, 0
        %1648 = vmatprep.subr.bf16.mxu0 0
        %1649 = vmatpush1.bf16.msra.mxu0 0
        %1650 = vmatprep.subr.bf16.mxu0 0
        %1651 = vmatpush1.bf16.msra.mxu0 0
        %1652 = vmatprep.subr.bf16.mxu0 0
        %1653 = vmatpush1.bf16.msra.mxu0 0
        %1654 = vmatprep.subr.bf16.mxu0 0
        %1655 = vmatpush1.bf16.msra.mxu0 0
        %1656 = vmatprep.subr.bf16.mxu0 0
        %1657 = vmatpush1.bf16.msra.mxu0 0
        %1658 = vmatprep.subr.bf16.mxu0 0
        %1659 = vmatpush1.bf16.msra.mxu0 0
        %1660 = vmatprep.subr.bf16.mxu0 0
        %1661 = vmatpush1.bf16.msra.mxu0 %v1621
        %1662 = vmatprep.subr.bf16.mxu0 0
        %1663 = vmatpush1.bf16.msra.mxu0 %v1620
        %1664 = vmatprep.subr.bf16.mxu0 0
        %1665 = vmatpush2.bf16.msra.mxu0 0
        %1666 = vmatprep.subr.bf16.mxu0 0
        %1667 = vmatpush2.bf16.msra.mxu0 0
        %1668 = vmatprep.subr.bf16.mxu0 0
        %1669 = vmatpush2.bf16.msra.mxu0 0
        %1670 = vmatprep.subr.bf16.mxu0 0
        %1671 = vmatpush2.bf16.msra.mxu0 0
        %1672 = vmatprep.subr.bf16.mxu0 0
        %1673 = vmatpush2.bf16.msra.mxu0 0
        %1674 = vmatprep.subr.bf16.mxu0 0
        %1675 = vmatpush2.bf16.msra.mxu0 0
        %1676 = vmatprep.subr.bf16.mxu0 0
        %1677 = vmatpush2.bf16.msra.mxu0 0
        %1678 = vmatprep.subr.bf16.mxu0 0
        %1679 = vmatpush2.bf16.msra.mxu0 0
        %1680 = vmatprep.mubr.bf16.mxu0 0
        %1681 = vmatmul.mubr.bf16.gmra.mxu0 %v1625
        %v1682 = vpop.f32.mrf.mxu0
        %v1683 = vadd.f32 %v1610, %v1682
        %v1684 = vpop.f32.mrf.mxu0
        %v1685 = vpop.f32.mrf.mxu0
        %v1686 = vadd.f32 %v1610, %v1685
        %v1687 = vpop.f32.mrf.mxu0
        %1688 = vmatprep.mubr.bf16.mxu0 0
        %1689 = vmatmul.mubr.bf16.gmra.mxu0 %v1628
        %v1690 = vpop.f32.mrf.mxu0
        %v1691 = vadd.f32 %v1610, %v1690
        %v1692 = vpop.f32.mrf.mxu0
        %v1693 = vpop.f32.mrf.mxu0
        %v1694 = vadd.f32 %v1610, %v1693
        %v1695 = vpop.f32.mrf.mxu0
        %1696 = vmatprep.mubr.bf16.mxu0 0
        %1697 = vmatmul.mubr.bf16.gmra.mxu0 %v1631
        %v1698 = vpop.f32.mrf.mxu0
        %v1699 = vadd.f32 %v1610, %v1698
        %v1700 = vpop.f32.mrf.mxu0
        %v1701 = vpop.f32.mrf.mxu0
        %v1702 = vadd.f32 %v1610, %v1701
        %v1703 = vpop.f32.mrf.mxu0
        %1704 = vmatprep.mubr.bf16.mxu0 0
        %1705 = vmatmul.mubr.bf16.gmra.mxu0 %v1634
        %v1706 = vpop.f32.mrf.mxu0
        %v1707 = vadd.f32 %v1610, %v1706
        %v1708 = vpop.f32.mrf.mxu0
        %v1709 = vpop.f32.mrf.mxu0
        %v1710 = vadd.f32 %v1610, %v1709
        %v1711 = vpop.f32.mrf.mxu0
        %1712 = vmatprep.mubr.bf16.mxu0 0
        %1713 = vmatmul.mubr.bf16.gmra.mxu0 %v1637
        %v1714 = vpop.f32.mrf.mxu0
        %v1715 = vadd.f32 %v1610, %v1714
        %v1716 = vpop.f32.mrf.mxu0
        %v1717 = vpop.f32.mrf.mxu0
        %v1718 = vadd.f32 %v1610, %v1717
        %v1719 = vpop.f32.mrf.mxu0
        %1720 = vmatprep.mubr.bf16.mxu0 0
        %1721 = vmatmul.mubr.bf16.gmra.mxu0 %v1640
        %v1722 = vpop.f32.mrf.mxu0
        %v1723 = vadd.f32 %v1610, %v1722
        %v1724 = vpop.f32.mrf.mxu0
        %v1725 = vpop.f32.mrf.mxu0
        %v1726 = vadd.f32 %v1610, %v1725
        %v1727 = vpop.f32.mrf.mxu0
        %1728 = vmatprep.mubr.bf16.mxu0 0
        %1729 = vmatmul.mubr.bf16.gmra.mxu0 %v1643
        %v1730 = vpop.f32.mrf.mxu0
        %v1731 = vadd.f32 %v1610, %v1730
        %v1732 = vpop.f32.mrf.mxu0
        %v1733 = vpop.f32.mrf.mxu0
        %v1734 = vadd.f32 %v1610, %v1733
        %v1735 = vpop.f32.mrf.mxu0
        %1736 = vmatprep.mubr.bf16.mxu0 0
        %1737 = vmatmul.mubr.bf16.gmra.mxu0 %v1646
        %v1738 = vpop.f32.mrf.mxu0
        %v1739 = vadd.f32 %v1610, %v1738
        %v1740 = vpop.f32.mrf.mxu0
        %v1741 = vpop.f32.mrf.mxu0
        %v1742 = vadd.f32 %v1610, %v1741
        %v1743 = vpop.f32.mrf.mxu0
        %1744 = vdwg.mxu0
        %v1745 = vmul.f32 %v1683, 0.01
        %v1746 = vmul.f32 %v1686, 0.01
        %v1747 = vmul.f32 %v1691, 0.01
        %v1748 = vmul.f32 %v1694, 0.01
        %v1749 = vmul.f32 %v1699, 0.01
        %v1750 = vmul.f32 %v1702, 0.01
        %v1751 = vmul.f32 %v1707, 0.01
        %v1752 = vmul.f32 %v1710, 0.01
        %v1753 = vmul.f32 %v1715, 0.01
        %v1754 = vmul.f32 %v1718, 0.01
        %v1755 = vmul.f32 %v1723, 0.01
        %v1756 = vmul.f32 %v1726, 0.01
        %v1757 = vmul.f32 %v1731, 0.01
        %v1758 = vmul.f32 %v1734, 0.01
        %v1759 = vmul.f32 %v1739, 0.01
        %v1760 = vmul.f32 %v1742, 0.01
        %v1761 = vmax.f32 %v1683, %v1745
        %v1762 = vmax.f32 %v1686, %v1746
        %v1763 = vmax.f32 %v1691, %v1747
        %v1764 = vmax.f32 %v1694, %v1748
        %v1765 = vmax.f32 %v1699, %v1749
        %v1766 = vmax.f32 %v1702, %v1750
        %v1767 = vmax.f32 %v1707, %v1751
        %v1768 = vmax.f32 %v1710, %v1752
        %v1769 = vmax.f32 %v1715, %v1753
        %v1770 = vmax.f32 %v1718, %v1754
        %v1771 = vmax.f32 %v1723, %v1755
        %v1772 = vmax.f32 %v1726, %v1756
        %v1773 = vmax.f32 %v1731, %v1757
        %v1774 = vmax.f32 %v1734, %v1758
        %v1775 = vmax.f32 %v1739, %v1759
        %v1776 = vmax.f32 %v1742, %v1760
        %v1777 = vpack.c.bf16 %v1762, %v1761
        %v1778 = vpack.c.bf16 %v1764, %v1763
        %v1779 = vpack.c.bf16 %v1766, %v1765
        %v1780 = vpack.c.bf16 %v1768, %v1767
        %v1781 = vpack.c.bf16 %v1770, %v1769
        %v1782 = vpack.c.bf16 %v1772, %v1771
        %v1783 = vpack.c.bf16 %v1774, %v1773
        %v1784 = vpack.c.bf16 %v1776, %v1775
        %v1785 = vld [vmem:[%s529] sm:$0xf]
        %v1786 = vld [vmem:[%s529 + $0x4] sm:$0xf]
        %v1787 = vld [vmem:[%s529 + $0x8] sm:$0xf]
        %v1788 = vld [vmem:[%s529 + $0xc] sm:$0xf]
        %v1789 = vld [vmem:[%s430] sm:$0x1]
        %v1791 = vlaneseq
        %v1792 = vshrl.u32 %v1791, 7
        %v1793 = vsub.s32 0, %v1792
        %v1794 = vrot.slane %v1789, %v1793
        %v1800 = vunpack.c.l.b16 %v1785
        %v1801 = vunpack.c.l.b16 %v1786
        %v1802 = vunpack.c.l.b16 %v1787
        %v1803 = vunpack.c.l.b16 %v1788
        %v1804 = vpack.c.b16 %v1801, %v1800
        %v1805 = vpack.c.b16 %v1803, %v1802
        %v1809 = vsel %vm1065, %v1777, 0
        %v1812 = vsel %vm1065, %v1778, 0
        %v1815 = vsel %vm1065, %v1779, 0
        %v1818 = vsel %vm1065, %v1780, 0
        %v1821 = vsel %vm1065, %v1781, 0
        %v1824 = vsel %vm1065, %v1782, 0
        %v1827 = vsel %vm1065, %v1783, 0
        %v1830 = vsel %vm1065, %v1784, 0
        %1832 = vmatprep.subr.bf16.mxu0 0
        %1833 = vmatpush1.bf16.msra.mxu0 0
        %1834 = vmatprep.subr.bf16.mxu0 0
        %1835 = vmatpush1.bf16.msra.mxu0 0
        %1836 = vmatprep.subr.bf16.mxu0 0
        %1837 = vmatpush1.bf16.msra.mxu0 0
        %1838 = vmatprep.subr.bf16.mxu0 0
        %1839 = vmatpush1.bf16.msra.mxu0 0
        %1840 = vmatprep.subr.bf16.mxu0 0
        %1841 = vmatpush1.bf16.msra.mxu0 0
        %1842 = vmatprep.subr.bf16.mxu0 0
        %1843 = vmatpush1.bf16.msra.mxu0 0
        %1844 = vmatprep.subr.bf16.mxu0 0
        %1845 = vmatpush1.bf16.msra.mxu0 %v1805
        %1846 = vmatprep.subr.bf16.mxu0 0
        %1847 = vmatpush1.bf16.msra.mxu0 %v1804
        %1848 = vmatprep.subr.bf16.mxu0 0
        %1849 = vmatpush2.bf16.msra.mxu0 0
        %1850 = vmatprep.subr.bf16.mxu0 0
        %1851 = vmatpush2.bf16.msra.mxu0 0
        %1852 = vmatprep.subr.bf16.mxu0 0
        %1853 = vmatpush2.bf16.msra.mxu0 0
        %1854 = vmatprep.subr.bf16.mxu0 0
        %1855 = vmatpush2.bf16.msra.mxu0 0
        %1856 = vmatprep.subr.bf16.mxu0 0
        %1857 = vmatpush2.bf16.msra.mxu0 0
        %1858 = vmatprep.subr.bf16.mxu0 0
        %1859 = vmatpush2.bf16.msra.mxu0 0
        %1860 = vmatprep.subr.bf16.mxu0 0
        %1861 = vmatpush2.bf16.msra.mxu0 0
        %1862 = vmatprep.subr.bf16.mxu0 0
        %1863 = vmatpush2.bf16.msra.mxu0 0
        %1864 = vmatprep.mubr.bf16.mxu0 0
        %1865 = vmatmul.mubr.bf16.gmra.mxu0 %v1809
        %v1866 = vpop.f32.mrf.mxu0
        %v1867 = vadd.f32 %v1794, %v1866
        %v1868 = vpop.f32.mrf.mxu0
        %v1869 = vpop.f32.mrf.mxu0
        %v1870 = vadd.f32 %v1794, %v1869
        %v1871 = vpop.f32.mrf.mxu0
        %1872 = vmatprep.mubr.bf16.mxu0 0
        %1873 = vmatmul.mubr.bf16.gmra.mxu0 %v1812
        %v1874 = vpop.f32.mrf.mxu0
        %v1875 = vadd.f32 %v1794, %v1874
        %v1876 = vpop.f32.mrf.mxu0
        %v1877 = vpop.f32.mrf.mxu0
        %v1878 = vadd.f32 %v1794, %v1877
        %v1879 = vpop.f32.mrf.mxu0
        %1880 = vmatprep.mubr.bf16.mxu0 0
        %1881 = vmatmul.mubr.bf16.gmra.mxu0 %v1815
        %v1882 = vpop.f32.mrf.mxu0
        %v1883 = vadd.f32 %v1794, %v1882
        %v1884 = vpop.f32.mrf.mxu0
        %v1885 = vpop.f32.mrf.mxu0
        %v1886 = vadd.f32 %v1794, %v1885
        %v1887 = vpop.f32.mrf.mxu0
        %1888 = vmatprep.mubr.bf16.mxu0 0
        %1889 = vmatmul.mubr.bf16.gmra.mxu0 %v1818
        %v1890 = vpop.f32.mrf.mxu0
        %v1891 = vadd.f32 %v1794, %v1890
        %v1892 = vpop.f32.mrf.mxu0
        %v1893 = vpop.f32.mrf.mxu0
        %v1894 = vadd.f32 %v1794, %v1893
        %v1895 = vpop.f32.mrf.mxu0
        %1896 = vmatprep.mubr.bf16.mxu0 0
        %1897 = vmatmul.mubr.bf16.gmra.mxu0 %v1821
        %v1898 = vpop.f32.mrf.mxu0
        %v1899 = vadd.f32 %v1794, %v1898
        %v1900 = vpop.f32.mrf.mxu0
        %v1901 = vpop.f32.mrf.mxu0
        %v1902 = vadd.f32 %v1794, %v1901
        %v1903 = vpop.f32.mrf.mxu0
        %1904 = vmatprep.mubr.bf16.mxu0 0
        %1905 = vmatmul.mubr.bf16.gmra.mxu0 %v1824
        %v1906 = vpop.f32.mrf.mxu0
        %v1907 = vadd.f32 %v1794, %v1906
        %v1908 = vpop.f32.mrf.mxu0
        %v1909 = vpop.f32.mrf.mxu0
        %v1910 = vadd.f32 %v1794, %v1909
        %v1911 = vpop.f32.mrf.mxu0
        %1912 = vmatprep.mubr.bf16.mxu0 0
        %1913 = vmatmul.mubr.bf16.gmra.mxu0 %v1827
        %v1914 = vpop.f32.mrf.mxu0
        %v1915 = vadd.f32 %v1794, %v1914
        %v1916 = vpop.f32.mrf.mxu0
        %v1917 = vpop.f32.mrf.mxu0
        %v1918 = vadd.f32 %v1794, %v1917
        %v1919 = vpop.f32.mrf.mxu0
        %1920 = vmatprep.mubr.bf16.mxu0 0
        %1921 = vmatmul.mubr.bf16.gmra.mxu0 %v1830
        %v1922 = vpop.f32.mrf.mxu0
        %v1923 = vadd.f32 %v1794, %v1922
        %v1924 = vpop.f32.mrf.mxu0
        %v1925 = vpop.f32.mrf.mxu0
        %v1926 = vadd.f32 %v1794, %v1925
        %v1927 = vpop.f32.mrf.mxu0
        %1928 = vdwg.mxu0
        %v1929 = vtanh.pop %v1867
        %v1930 = vtanh.pop %v1870
        %v1931 = vtanh.pop %v1875
        %v1932 = vtanh.pop %v1878
        %v1933 = vtanh.pop %v1883
        %v1934 = vtanh.pop %v1886
        %v1935 = vtanh.pop %v1891
        %v1936 = vtanh.pop %v1894
        %v1937 = vtanh.pop %v1899
        %v1938 = vtanh.pop %v1902
        %v1939 = vtanh.pop %v1907
        %v1940 = vtanh.pop %v1910
        %v1941 = vtanh.pop %v1915
        %v1942 = vtanh.pop %v1918
        %v1943 = vtanh.pop %v1923
        %v1944 = vtanh.pop %v1926
        %v1945 = vmul.f32 %v1929, 2.0
        %v1946 = vmul.f32 %v1930, 2.0
        %v1947 = vmul.f32 %v1931, 2.0
        %v1948 = vmul.f32 %v1932, 2.0
        %v1949 = vmul.f32 %v1933, 2.0
        %v1950 = vmul.f32 %v1934, 2.0
        %v1951 = vmul.f32 %v1935, 2.0
        %v1952 = vmul.f32 %v1936, 2.0
        %v1953 = vmul.f32 %v1937, 2.0
        %v1954 = vmul.f32 %v1938, 2.0
        %v1955 = vmul.f32 %v1939, 2.0
        %v1956 = vmul.f32 %v1940, 2.0
        %v1957 = vmul.f32 %v1941, 2.0
        %v1958 = vmul.f32 %v1942, 2.0
        %v1959 = vmul.f32 %v1943, 2.0
        %v1960 = vmul.f32 %v1944, 2.0
        %1961 = vxpose.xlu0.b32.start [1/16] %v1945, 128
        %1962 = vxpose.xlu0.b32.cont [2/16] %v1946, 128
        %1963 = vxpose.xlu0.b32.cont [3/16] %v1947, 128
        %1964 = vxpose.xlu0.b32.cont [4/16] %v1948, 128
        %1965 = vxpose.xlu0.b32.cont [5/16] %v1949, 128
        %1966 = vxpose.xlu0.b32.cont [6/16] %v1950, 128
        %1967 = vxpose.xlu0.b32.cont [7/16] %v1951, 128
        %1968 = vxpose.xlu0.b32.cont [8/16] %v1952, 128
        %1969 = vxpose.xlu0.b32.cont [9/16] %v1953, 128
        %1970 = vxpose.xlu0.b32.cont [10/16] %v1954, 128
        %1971 = vxpose.xlu0.b32.cont [11/16] %v1955, 128
        %1972 = vxpose.xlu0.b32.cont [12/16] %v1956, 128
        %1973 = vxpose.xlu0.b32.cont [13/16] %v1957, 128
        %1974 = vxpose.xlu0.b32.cont [14/16] %v1958, 128
        %1975 = vxpose.xlu0.b32.cont [15/16] %v1959, 128
        %1976 = vxpose.xlu0.b32.end [16/16] %v1960, 128
        %v1977 = vpop.trf.xlu0
        %v1978 = vpop.trf.xlu0
        %v1979 = vpop.trf.xlu0
        %v1980 = vpop.trf.xlu0
        %v1981 = vpop.trf.xlu0
        %v1982 = vpop.trf.xlu0
        %v1983 = vpop.trf.xlu0
        %v1984 = vpop.trf.xlu0
        %v1985 = vpop.trf.xlu0
        %v1986 = vpop.trf.xlu0
        %v1987 = vpop.trf.xlu0
        %v1988 = vpop.trf.xlu0
        %v1989 = vpop.trf.xlu0
        %v1990 = vpop.trf.xlu0
        %v1991 = vpop.trf.xlu0
        %v1992 = vpop.trf.xlu0
        %1993 = vst [vmem:[%s533] sm:$0x7] %v1977
        %p1994 = scmp.lt.s32.totalorder %s27, 1
        %s1995 = scalar_select %p1994, %s27, 1
        %s1996 = smul.addr %s1995, 4
        %s1997 = scalar_lea.vmem %s10, %s1996
        // Predicated region
        $region69: #{atlas_decoder_forward.3} parent=59 // pred_check
          %p1998 = pneg %p300
        $region70: #{atlas_decoder_forward.3} parent=59 // pred_check_branch
          %2000 = sbr.rel (%p1998) target = $region72
        $region71: #{atlas_decoder_forward.3} parent=59 // pred_region
          _
        $region72: #{atlas_decoder_forward.3} parent=59 // pred_fallthru
          _
      $region60: #{atlas_decoder_forward.3} parent=5 // pred_fallthru
        _
      %p2001 = scmp.le.s32.totalorder 2, %s22
      // Predicated region
      $region73: #{atlas_decoder_forward.3} parent=5 // pred_check
        %p2002 = pneg %p2001
      $region74: #{atlas_decoder_forward.3} parent=5 // pred_check_branch
        %2004 = sbr.rel (%p2002) target = $region76
      $region75: #{atlas_decoder_forward.3} parent=5 // pred_region
        %s2005 = ssub.s32 %s22, 2
        // Predicated region
        $region77: #{atlas_decoder_forward.3} parent=75 // pred_check
          %p2006 = pneg %p306
        $region78: #{atlas_decoder_forward.3} parent=75 // pred_check_branch
          %2008 = sbr.rel (%p2006) target = $region80
        $region79: #{atlas_decoder_forward.3} parent=75 // pred_region
          %p2009 = scmp.lt.s32.totalorder %s28, 1
          %s2010 = scalar_select %p2009, %s28, 1
          %s2011 = smul.addr %s2010, 4
          %s2012 = scalar_lea.vmem %s10, %s2011
        $region80: #{atlas_decoder_forward.3} parent=75 // pred_fallthru
          _
      $region76: #{atlas_decoder_forward.3} parent=5 // pred_fallthru
        _
    $region6: #{atlas_decoder_forward.3} parent=1 // loop_footer
      %s26 = sadd.s32 1, %s22
    $region7: #{atlas_decoder_forward.3} parent=1 // loop_footer_branch
      %21 = sbr.rel target = $region3
    $region8: #{atlas_decoder_forward.3} parent=1 // loop_exit
      _
    %2013 = vsyncpa [#allocation3], 1
    %s2014 = scalar_lea.sflag [#allocation3], 1
    %2015 = vsyncpa %s2014, 1
    %2016 = vsyncpa [#allocation5], 1
    %s2017 = scalar_lea.sflag [#allocation5], 1
    %2018 = vsyncpa %s2017, 1

</llo_original>
